<compile_context>
chip_gen: v5e
topology: v5e:2x2
jax: 0.10.0
libtpu: 0.0.40
codegen_flags: <defaults>
</compile_context>

<pallas_src>
import numpy as np
import jax
import jax.numpy as jnp
from jax import lax
from jax.experimental import pallas as pl
from jax.experimental.pallas import tpu as pltpu

# Synthetic config (the original repo's `config` dict) at small shapes.
config = {
    "input_channels": 4,
    "conv1": (8, 3, 1),    # (out_channels, kernel, stride)
    "conv2": (16, 3, 2),
    "conv3": (32, 3, 1),
    "output_conv3": (32, 4, 4),   # C,H,W of conv3 output for 16x16 input
}

LEAKY_SLOPE = 0.01  # F.leaky_relu default

# Static geometry (16x16 input, consistent with output_conv3 = (32, 4, 4)).
HW = 16                 # input spatial side
NPIX = HW * HW          # 256 full-grid rows per batch element
K = 3                   # kernel size of every conv
IN_C = config["input_channels"]   # 4
C1 = config["conv1"][0]           # 8
C2 = config["conv2"][0]           # 16
C3 = config["conv3"][0]           # 32
H3, W3 = 4, 4                     # conv3 spatial output
OCP = 128               # lane-padded output channels (lane-dense stores)
HALO = 64               # zero halo rows (>= max tap row offset 2*HW + 2 = 34)
L3ROWS = 128            # conv3 full-grid rows computed (last valid row = 102)


def _fused_repr_kernel(x_ref, w1_ref, w2_ref, w3_ref, b1_ref, b2_ref, b3_ref,
                       o_ref, s0, s1, s2):
    """All three conv+leaky_relu stages for one batch element, VMEM-resident."""

    def lrelu(v):
        return jnp.where(v >= 0.0, v, LEAKY_SLOPE * v)

    # Stage this batch element's 16x16xC input into a zero-haloed VMEM buffer.
    s0[NPIX:NPIX + HALO, :] = jnp.zeros((HALO, IN_C), jnp.float32)
    s0[0:NPIX, :] = x_ref[...]

    # ---- conv1 (3x3, stride 1): 9 shifted matmuls on the full 16x16 grid ----
    acc = jnp.zeros((NPIX, OCP), jnp.float32)
    for kh in range(K):
        for kw in range(K):
            t = kh * K + kw
            d = kh * HW + kw
            acc = acc + jnp.dot(s0[d:d + NPIX, :],
                                w1_ref[t * IN_C:(t + 1) * IN_C, :],
                                preferred_element_type=jnp.float32)
    s1[0:NPIX, :] = lrelu(acc + b1_ref[...])
    s1[NPIX:NPIX + HALO, :] = jnp.zeros((HALO, OCP), jnp.float32)

    # ---- conv2 (3x3, stride 2): full-grid values; valid at even (h, w) ----
    acc = jnp.zeros((NPIX, OCP), jnp.float32)
    for kh in range(K):
        for kw in range(K):
            t = kh * K + kw
            d = kh * HW + kw
            acc = acc + jnp.dot(s1[d:d + NPIX, 0:C1],
                                w2_ref[t * C1:(t + 1) * C1, :],
                                preferred_element_type=jnp.float32)
    s2[0:NPIX, :] = lrelu(acc + b2_ref[...])

    # ---- conv3 (3x3, stride 1 on conv2's stride-2 subgrid => dilation 2) ----
    acc = jnp.zeros((L3ROWS, OCP), jnp.float32)
    for kh in range(K):
        for kw in range(K):
            t = kh * K + kw
            d = 2 * kh * HW + 2 * kw
            acc = acc + jnp.dot(s2[d:d + L3ROWS, 0:C2],
                                w3_ref[t * C2:(t + 1) * C2, :],
                                preferred_element_type=jnp.float32)
    a3 = lrelu(acc + b3_ref[...])                      # (128, 128)

    # ---- gather the 4x4 valid conv3 positions (full-grid rows 32*i + 2*j) ----
    for i in range(H3):
        for j in range(W3):
            r = 2 * i * HW + 2 * j
            o_ref[i * W3 + j:i * W3 + j + 1, :] = a3[r:r + 1, 0:C3]


def _weight_slab(w):
    """(OC, IC, KH, KW) -> (KH*KW*IC, 128) slab, rows ordered (kh, kw, ic)."""
    oc, ic, kh, kw = w.shape
    wt = jnp.transpose(w, (2, 3, 1, 0)).reshape(kh * kw * ic, oc)
    return jnp.pad(wt, ((0, 0), (0, OCP - oc)))


def _bias_row(b):
    return jnp.pad(b, (0, OCP - b.shape[0])).reshape(1, OCP)


def representation_forward(x_nchw, params):
    """Matches Representation.forward (PyTorch NCHW in, flat features out)."""
    n = x_nchw.shape[0]
    # NCHW -> flattened (n*h*w, c) rows for the shifted-matmul formulation.
    x2d = jnp.transpose(x_nchw, (0, 2, 3, 1)).reshape(n * NPIX, IN_C)

    w1s = _weight_slab(params["w1"])
    w2s = _weight_slab(params["w2"])
    w3s = _weight_slab(params["w3"])
    b1p = _bias_row(params["b1"])
    b2p = _bias_row(params["b2"])
    b3p = _bias_row(params["b3"])

    out = pl.pallas_call(
        _fused_repr_kernel,
        out_shape=jax.ShapeDtypeStruct((n * H3 * W3, C3), jnp.float32),
        grid=(n,),
        in_specs=[
            pl.BlockSpec((NPIX, IN_C), lambda b: (b, 0)),
            pl.BlockSpec((K * K * IN_C, OCP), lambda b: (0, 0)),
            pl.BlockSpec((K * K * C1, OCP), lambda b: (0, 0)),
            pl.BlockSpec((K * K * C2, OCP), lambda b: (0, 0)),
            pl.BlockSpec((1, OCP), lambda b: (0, 0)),
            pl.BlockSpec((1, OCP), lambda b: (0, 0)),
            pl.BlockSpec((1, OCP), lambda b: (0, 0)),
        ],
        out_specs=pl.BlockSpec((H3 * W3, C3), lambda b: (b, 0)),
        scratch_shapes=[
            pltpu.VMEM((NPIX + HALO, IN_C), jnp.float32),   # staged input
            pltpu.VMEM((NPIX + HALO, OCP), jnp.float32),    # conv1 activations
            pltpu.VMEM((NPIX, OCP), jnp.float32),           # conv2 activations
        ],
        compiler_params=pltpu.CompilerParams(
            dimension_semantics=("parallel",)),
    )(x2d, w1s, w2s, w3s, b1p, b2p, b3p)

    # Rows of `out` are (i, j) in NHWC-compact order; convert to PyTorch's
    # NCHW flatten: index = c*16 + i*4 + j.  (Tiny 4 KB transpose in XLA.)
    out = jnp.transpose(out.reshape(n, H3 * W3, C3), (0, 2, 1))
    return out.reshape(n, C3 * H3 * W3)


def init_params(key):
    """Deterministic PyTorch-style (uniform +/- 1/sqrt(fan_in)) init."""
    def conv_init(k, oc, ic, ksize):
        kw_, kb_ = jax.random.split(k)
        fan_in = ic * ksize * ksize
        bound = 1.0 / np.sqrt(fan_in)
        w = jax.random.uniform(kw_, (oc, ic, ksize, ksize), jnp.float32, -bound, bound)
        b = jax.random.uniform(kb_, (oc,), jnp.float32, -bound, bound)
        return w, b

    k1, k2, k3 = jax.random.split(key, 3)
    w1, b1 = conv_init(k1, config["conv1"][0], config["input_channels"], config["conv1"][1])
    w2, b2 = conv_init(k2, config["conv2"][0], config["conv1"][0], config["conv2"][1])
    w3, b3 = conv_init(k3, config["conv3"][0], config["conv2"][0], config["conv3"][1])
    return {"w1": w1, "b1": b1, "w2": w2, "b2": b2, "w3": w3, "b3": b3}


def reference_forward(x_nchw, params):
    """Pure-JAX reference (lax conv) for correctness validation."""
    def conv(x, w, b, s):
        y = lax.conv_general_dilated(
            x, w, (s, s), "VALID",
            dimension_numbers=("NCHW", "OIHW", "NCHW"))
        y = y + b[None, :, None, None]
        return jnp.where(y >= 0.0, y, LEAKY_SLOPE * y)

    out = conv(x_nchw, params["w1"], params["b1"], config["conv1"][2])
    out = conv(out, params["w2"], params["b2"], config["conv2"][2])
    out = conv(out, params["w3"], params["b3"], config["conv3"][2])
    return out.reshape(-1, int(np.prod(config["output_conv3"])))


if __name__ == "__main__":
    key = jax.random.PRNGKey(0)
    k_x, k_p = jax.random.split(key)

    x = jax.random.normal(k_x, (2, config["input_channels"], HW, HW), jnp.float32)
    params = init_params(k_p)

    fwd = jax.jit(representation_forward)
    out = jax.block_until_ready(fwd(x, params))

    ref = jax.block_until_ready(reference_forward(x, params))
    assert out.shape == (2, int(np.prod(config["output_conv3"]))), out.shape
    np.testing.assert_allclose(np.asarray(out), np.asarray(ref), atol=1e-4, rtol=1e-4)

    print("KERNEL_OK")
</pallas_src>

<mosaic_0001>
module attributes {stable_mosaic.version = 11 : i64} {
  func.func @_fused_repr_kernel(%arg0: i32, %arg1: memref<256x4xf32, #tpu.memory_space<vmem>>, %arg2: memref<36x128xf32, #tpu.memory_space<vmem>>, %arg3: memref<72x128xf32, #tpu.memory_space<vmem>>, %arg4: memref<144x128xf32, #tpu.memory_space<vmem>>, %arg5: memref<1x128xf32, #tpu.memory_space<vmem>>, %arg6: memref<1x128xf32, #tpu.memory_space<vmem>>, %arg7: memref<1x128xf32, #tpu.memory_space<vmem>>, %arg8: memref<16x32xf32, #tpu.memory_space<vmem>>, %arg9: memref<320x4xf32, #tpu.memory_space<vmem>>, %arg10: memref<320x128xf32, #tpu.memory_space<vmem>>, %arg11: memref<256x128xf32, #tpu.memory_space<vmem>>) attributes {dimension_semantics = [#tpu.dimension_semantics<parallel>], iteration_bounds = array<i64: 2>, scalar_prefetch = 0 : i64, scratch_operands = 3 : i64, tpu.core_type = #tpu.core_type<tc>, window_params = [{transform_indices = @transform_0, window_bounds = array<i64: 256, 4>}, {pipeline_mode = #tpu.pipeline_mode<synchronous>, transform_indices = @transform_1, window_bounds = array<i64: 36, 128>}, {pipeline_mode = #tpu.pipeline_mode<synchronous>, transform_indices = @transform_2, window_bounds = array<i64: 72, 128>}, {pipeline_mode = #tpu.pipeline_mode<synchronous>, transform_indices = @transform_3, window_bounds = array<i64: 144, 128>}, {pipeline_mode = #tpu.pipeline_mode<synchronous>, transform_indices = @transform_4, window_bounds = array<i64: 1, 128>}, {pipeline_mode = #tpu.pipeline_mode<synchronous>, transform_indices = @transform_5, window_bounds = array<i64: 1, 128>}, {pipeline_mode = #tpu.pipeline_mode<synchronous>, transform_indices = @transform_6, window_bounds = array<i64: 1, 128>}, {transform_indices = @transform_7, window_bounds = array<i64: 16, 32>}]} {
    %cst = arith.constant 0.000000e+00 : f32
    %0 = vector.broadcast %cst : f32 to vector<64x4xf32>
    %c256 = arith.constant 256 : index
    %c0 = arith.constant 0 : index
    %1 = vector.load %arg9[%c256, %c0] : memref<320x4xf32, #tpu.memory_space<vmem>>, vector<64x4xf32>
    tpu.vector_store %arg9[%c256, %c0], %0 {strides = array<i32>} : memref<320x4xf32, #tpu.memory_space<vmem>>, vector<64x4xf32>,
    %c0_0 = arith.constant 0 : index
    %c0_1 = arith.constant 0 : index
    %2 = vector.load %arg1[%c0_0, %c0_1] : memref<256x4xf32, #tpu.memory_space<vmem>>, vector<256x4xf32>
    %c0_2 = arith.constant 0 : index
    %c0_3 = arith.constant 0 : index
    %3 = vector.load %arg9[%c0_2, %c0_3] : memref<320x4xf32, #tpu.memory_space<vmem>>, vector<256x4xf32>
    tpu.vector_store %arg9[%c0_2, %c0_3], %2 {strides = array<i32>} : memref<320x4xf32, #tpu.memory_space<vmem>>, vector<256x4xf32>,
    %cst_4 = arith.constant 0.000000e+00 : f32
    %4 = vector.broadcast %cst_4 : f32 to vector<256x128xf32>
    %c0_5 = arith.constant 0 : index
    %c0_6 = arith.constant 0 : index
    %5 = vector.load %arg9[%c0_5, %c0_6] : memref<320x4xf32, #tpu.memory_space<vmem>>, vector<256x4xf32>
    %c0_7 = arith.constant 0 : index
    %c0_8 = arith.constant 0 : index
    %6 = vector.load %arg2[%c0_7, %c0_8] : memref<36x128xf32, #tpu.memory_space<vmem>>, vector<4x128xf32>
    %cst_9 = arith.constant dense<0.000000e+00> : vector<256x128xf32>
    %7 = tpu.matmul %5, %6, %cst_9 {dimension_numbers = #tpu.dot_dimension_numbers<[1], [0], [0], [1], [0, 0, 1, 1], [], []>} : vector<256x4xf32>, vector<4x128xf32>, vector<256x128xf32> -> vector<256x128xf32>
    %8 = arith.addf %4, %7 : vector<256x128xf32>
    %c1 = arith.constant 1 : index
    %c0_10 = arith.constant 0 : index
    %9 = vector.load %arg9[%c1, %c0_10] : memref<320x4xf32, #tpu.memory_space<vmem>>, vector<256x4xf32>
    %c4 = arith.constant 4 : index
    %c0_11 = arith.constant 0 : index
    %10 = vector.load %arg2[%c4, %c0_11] : memref<36x128xf32, #tpu.memory_space<vmem>>, vector<4x128xf32>
    %cst_12 = arith.constant dense<0.000000e+00> : vector<256x128xf32>
    %11 = tpu.matmul %9, %10, %cst_12 {dimension_numbers = #tpu.dot_dimension_numbers<[1], [0], [0], [1], [0, 0, 1, 1], [], []>} : vector<256x4xf32>, vector<4x128xf32>, vector<256x128xf32> -> vector<256x128xf32>
    %12 = arith.addf %8, %11 : vector<256x128xf32>
    %c2 = arith.constant 2 : index
    %c0_13 = arith.constant 0 : index
    %13 = vector.load %arg9[%c2, %c0_13] : memref<320x4xf32, #tpu.memory_space<vmem>>, vector<256x4xf32>
    %c8 = arith.constant 8 : index
    %c0_14 = arith.constant 0 : index
    %14 = vector.load %arg2[%c8, %c0_14] : memref<36x128xf32, #tpu.memory_space<vmem>>, vector<4x128xf32>
    %cst_15 = arith.constant dense<0.000000e+00> : vector<256x128xf32>
    %15 = tpu.matmul %13, %14, %cst_15 {dimension_numbers = #tpu.dot_dimension_numbers<[1], [0], [0], [1], [0, 0, 1, 1], [], []>} : vector<256x4xf32>, vector<4x128xf32>, vector<256x128xf32> -> vector<256x128xf32>
    %16 = arith.addf %12, %15 : vector<256x128xf32>
    %c16 = arith.constant 16 : index
    %c0_16 = arith.constant 0 : index
    %17 = vector.load %arg9[%c16, %c0_16] : memref<320x4xf32, #tpu.memory_space<vmem>>, vector<256x4xf32>
    %c12 = arith.constant 12 : index
    %c0_17 = arith.constant 0 : index
    %18 = vector.load %arg2[%c12, %c0_17] : memref<36x128xf32, #tpu.memory_space<vmem>>, vector<4x128xf32>
    %cst_18 = arith.constant dense<0.000000e+00> : vector<256x128xf32>
    %19 = tpu.matmul %17, %18, %cst_18 {dimension_numbers = #tpu.dot_dimension_numbers<[1], [0], [0], [1], [0, 0, 1, 1], [], []>} : vector<256x4xf32>, vector<4x128xf32>, vector<256x128xf32> -> vector<256x128xf32>
    %20 = arith.addf %16, %19 : vector<256x128xf32>
    %c17 = arith.constant 17 : index
    %c0_19 = arith.constant 0 : index
    %21 = vector.load %arg9[%c17, %c0_19] : memref<320x4xf32, #tpu.memory_space<vmem>>, vector<256x4xf32>
    %c16_20 = arith.constant 16 : index
    %c0_21 = arith.constant 0 : index
    %22 = vector.load %arg2[%c16_20, %c0_21] : memref<36x128xf32, #tpu.memory_space<vmem>>, vector<4x128xf32>
    %cst_22 = arith.constant dense<0.000000e+00> : vector<256x128xf32>
    %23 = tpu.matmul %21, %22, %cst_22 {dimension_numbers = #tpu.dot_dimension_numbers<[1], [0], [0], [1], [0, 0, 1, 1], [], []>} : vector<256x4xf32>, vector<4x128xf32>, vector<256x128xf32> -> vector<256x128xf32>
    %24 = arith.addf %20, %23 : vector<256x128xf32>
    %c18 = arith.constant 18 : index
    %c0_23 = arith.constant 0 : index
    %25 = vector.load %arg9[%c18, %c0_23] : memref<320x4xf32, #tpu.memory_space<vmem>>, vector<256x4xf32>
    %c20 = arith.constant 20 : index
    %c0_24 = arith.constant 0 : index
    %26 = vector.load %arg2[%c20, %c0_24] : memref<36x128xf32, #tpu.memory_space<vmem>>, vector<4x128xf32>
    %cst_25 = arith.constant dense<0.000000e+00> : vector<256x128xf32>
    %27 = tpu.matmul %25, %26, %cst_25 {dimension_numbers = #tpu.dot_dimension_numbers<[1], [0], [0], [1], [0, 0, 1, 1], [], []>} : vector<256x4xf32>, vector<4x128xf32>, vector<256x128xf32> -> vector<256x128xf32>
    %28 = arith.addf %24, %27 : vector<256x128xf32>
    %c32 = arith.constant 32 : index
    %c0_26 = arith.constant 0 : index
    %29 = vector.load %arg9[%c32, %c0_26] : memref<320x4xf32, #tpu.memory_space<vmem>>, vector<256x4xf32>
    %c24 = arith.constant 24 : index
    %c0_27 = arith.constant 0 : index
    %30 = vector.load %arg2[%c24, %c0_27] : memref<36x128xf32, #tpu.memory_space<vmem>>, vector<4x128xf32>
    %cst_28 = arith.constant dense<0.000000e+00> : vector<256x128xf32>
    %31 = tpu.matmul %29, %30, %cst_28 {dimension_numbers = #tpu.dot_dimension_numbers<[1], [0], [0], [1], [0, 0, 1, 1], [], []>} : vector<256x4xf32>, vector<4x128xf32>, vector<256x128xf32> -> vector<256x128xf32>
    %32 = arith.addf %28, %31 : vector<256x128xf32>
    %c33 = arith.constant 33 : index
    %c0_29 = arith.constant 0 : index
    %33 = vector.load %arg9[%c33, %c0_29] : memref<320x4xf32, #tpu.memory_space<vmem>>, vector<256x4xf32>
    %c28 = arith.constant 28 : index
    %c0_30 = arith.constant 0 : index
    %34 = vector.load %arg2[%c28, %c0_30] : memref<36x128xf32, #tpu.memory_space<vmem>>, vector<4x128xf32>
    %cst_31 = arith.constant dense<0.000000e+00> : vector<256x128xf32>
    %35 = tpu.matmul %33, %34, %cst_31 {dimension_numbers = #tpu.dot_dimension_numbers<[1], [0], [0], [1], [0, 0, 1, 1], [], []>} : vector<256x4xf32>, vector<4x128xf32>, vector<256x128xf32> -> vector<256x128xf32>
    %36 = arith.addf %32, %35 : vector<256x128xf32>
    %c34 = arith.constant 34 : index
    %c0_32 = arith.constant 0 : index
    %37 = vector.load %arg9[%c34, %c0_32] : memref<320x4xf32, #tpu.memory_space<vmem>>, vector<256x4xf32>
    %c32_33 = arith.constant 32 : index
    %c0_34 = arith.constant 0 : index
    %38 = vector.load %arg2[%c32_33, %c0_34] : memref<36x128xf32, #tpu.memory_space<vmem>>, vector<4x128xf32>
    %cst_35 = arith.constant dense<0.000000e+00> : vector<256x128xf32>
    %39 = tpu.matmul %37, %38, %cst_35 {dimension_numbers = #tpu.dot_dimension_numbers<[1], [0], [0], [1], [0, 0, 1, 1], [], []>} : vector<256x4xf32>, vector<4x128xf32>, vector<256x128xf32> -> vector<256x128xf32>
    %40 = arith.addf %36, %39 : vector<256x128xf32>
    %c0_36 = arith.constant 0 : index
    %c0_37 = arith.constant 0 : index
    %41 = vector.load %arg5[%c0_36, %c0_37] : memref<1x128xf32, #tpu.memory_space<vmem>>, vector<1x128xf32>
    %42 = vector.broadcast %41 : vector<1x128xf32> to vector<256x128xf32>
    %43 = arith.addf %40, %42 : vector<256x128xf32>
    %cst_38 = arith.constant 0.000000e+00 : f32
    %44 = vector.broadcast %cst_38 : f32 to vector<256x128xf32>
    %45 = arith.cmpf oge, %43, %44 : vector<256x128xf32>
    %cst_39 = arith.constant 0.00999999977 : f32
    %46 = vector.broadcast %cst_39 : f32 to vector<256x128xf32>
    %47 = arith.mulf %46, %43 : vector<256x128xf32>
    %48 = arith.select %45, %43, %47 : vector<256x128xi1>, vector<256x128xf32>
    %c0_40 = arith.constant 0 : index
    %c0_41 = arith.constant 0 : index
    %49 = vector.load %arg10[%c0_40, %c0_41] : memref<320x128xf32, #tpu.memory_space<vmem>>, vector<256x128xf32>
    tpu.vector_store %arg10[%c0_40, %c0_41], %48 {strides = array<i32>} : memref<320x128xf32, #tpu.memory_space<vmem>>, vector<256x128xf32>,
    %cst_42 = arith.constant 0.000000e+00 : f32
    %50 = vector.broadcast %cst_42 : f32 to vector<64x128xf32>
    %c256_43 = arith.constant 256 : index
    %c0_44 = arith.constant 0 : index
    %51 = vector.load %arg10[%c256_43, %c0_44] : memref<320x128xf32, #tpu.memory_space<vmem>>, vector<64x128xf32>
    tpu.vector_store %arg10[%c256_43, %c0_44], %50 {strides = array<i32>} : memref<320x128xf32, #tpu.memory_space<vmem>>, vector<64x128xf32>,
    %cst_45 = arith.constant 0.000000e+00 : f32
    %52 = vector.broadcast %cst_45 : f32 to vector<256x128xf32>
    %c0_46 = arith.constant 0 : index
    %c0_47 = arith.constant 0 : index
    %53 = vector.load %arg10[%c0_46, %c0_47] : memref<320x128xf32, #tpu.memory_space<vmem>>, vector<256x8xf32>
    %c0_48 = arith.constant 0 : index
    %c0_49 = arith.constant 0 : index
    %54 = vector.load %arg3[%c0_48, %c0_49] : memref<72x128xf32, #tpu.memory_space<vmem>>, vector<8x128xf32>
    %cst_50 = arith.constant dense<0.000000e+00> : vector<256x128xf32>
    %55 = tpu.matmul %53, %54, %cst_50 {dimension_numbers = #tpu.dot_dimension_numbers<[1], [0], [0], [1], [0, 0, 1, 1], [], []>} : vector<256x8xf32>, vector<8x128xf32>, vector<256x128xf32> -> vector<256x128xf32>
    %56 = arith.addf %52, %55 : vector<256x128xf32>
    %c1_51 = arith.constant 1 : index
    %c0_52 = arith.constant 0 : index
    %57 = vector.load %arg10[%c1_51, %c0_52] : memref<320x128xf32, #tpu.memory_space<vmem>>, vector<256x8xf32>
    %c8_53 = arith.constant 8 : index
    %c0_54 = arith.constant 0 : index
    %58 = vector.load %arg3[%c8_53, %c0_54] : memref<72x128xf32, #tpu.memory_space<vmem>>, vector<8x128xf32>
    %cst_55 = arith.constant dense<0.000000e+00> : vector<256x128xf32>
    %59 = tpu.matmul %57, %58, %cst_55 {dimension_numbers = #tpu.dot_dimension_numbers<[1], [0], [0], [1], [0, 0, 1, 1], [], []>} : vector<256x8xf32>, vector<8x128xf32>, vector<256x128xf32> -> vector<256x128xf32>
    %60 = arith.addf %56, %59 : vector<256x128xf32>
    %c2_56 = arith.constant 2 : index
    %c0_57 = arith.constant 0 : index
    %61 = vector.load %arg10[%c2_56, %c0_57] : memref<320x128xf32, #tpu.memory_space<vmem>>, vector<256x8xf32>
    %c16_58 = arith.constant 16 : index
    %c0_59 = arith.constant 0 : index
    %62 = vector.load %arg3[%c16_58, %c0_59] : memref<72x128xf32, #tpu.memory_space<vmem>>, vector<8x128xf32>
    %cst_60 = arith.constant dense<0.000000e+00> : vector<256x128xf32>
    %63 = tpu.matmul %61, %62, %cst_60 {dimension_numbers = #tpu.dot_dimension_numbers<[1], [0], [0], [1], [0, 0, 1, 1], [], []>} : vector<256x8xf32>, vector<8x128xf32>, vector<256x128xf32> -> vector<256x128xf32>
    %64 = arith.addf %60, %63 : vector<256x128xf32>
    %c16_61 = arith.constant 16 : index
    %c0_62 = arith.constant 0 : index
    %65 = vector.load %arg10[%c16_61, %c0_62] : memref<320x128xf32, #tpu.memory_space<vmem>>, vector<256x8xf32>
    %c24_63 = arith.constant 24 : index
    %c0_64 = arith.constant 0 : index
    %66 = vector.load %arg3[%c24_63, %c0_64] : memref<72x128xf32, #tpu.memory_space<vmem>>, vector<8x128xf32>
    %cst_65 = arith.constant dense<0.000000e+00> : vector<256x128xf32>
    %67 = tpu.matmul %65, %66, %cst_65 {dimension_numbers = #tpu.dot_dimension_numbers<[1], [0], [0], [1], [0, 0, 1, 1], [], []>} : vector<256x8xf32>, vector<8x128xf32>, vector<256x128xf32> -> vector<256x128xf32>
    %68 = arith.addf %64, %67 : vector<256x128xf32>
    %c17_66 = arith.constant 17 : index
    %c0_67 = arith.constant 0 : index
    %69 = vector.load %arg10[%c17_66, %c0_67] : memref<320x128xf32, #tpu.memory_space<vmem>>, vector<256x8xf32>
    %c32_68 = arith.constant 32 : index
    %c0_69 = arith.constant 0 : index
    %70 = vector.load %arg3[%c32_68, %c0_69] : memref<72x128xf32, #tpu.memory_space<vmem>>, vector<8x128xf32>
    %cst_70 = arith.constant dense<0.000000e+00> : vector<256x128xf32>
    %71 = tpu.matmul %69, %70, %cst_70 {dimension_numbers = #tpu.dot_dimension_numbers<[1], [0], [0], [1], [0, 0, 1, 1], [], []>} : vector<256x8xf32>, vector<8x128xf32>, vector<256x128xf32> -> vector<256x128xf32>
    %72 = arith.addf %68, %71 : vector<256x128xf32>
    %c18_71 = arith.constant 18 : index
    %c0_72 = arith.constant 0 : index
    %73 = vector.load %arg10[%c18_71, %c0_72] : memref<320x128xf32, #tpu.memory_space<vmem>>, vector<256x8xf32>
    %c40 = arith.constant 40 : index
    %c0_73 = arith.constant 0 : index
    %74 = vector.load %arg3[%c40, %c0_73] : memref<72x128xf32, #tpu.memory_space<vmem>>, vector<8x128xf32>
    %cst_74 = arith.constant dense<0.000000e+00> : vector<256x128xf32>
    %75 = tpu.matmul %73, %74, %cst_74 {dimension_numbers = #tpu.dot_dimension_numbers<[1], [0], [0], [1], [0, 0, 1, 1], [], []>} : vector<256x8xf32>, vector<8x128xf32>, vector<256x128xf32> -> vector<256x128xf32>
    %76 = arith.addf %72, %75 : vector<256x128xf32>
    %c32_75 = arith.constant 32 : index
    %c0_76 = arith.constant 0 : index
    %77 = vector.load %arg10[%c32_75, %c0_76] : memref<320x128xf32, #tpu.memory_space<vmem>>, vector<256x8xf32>
    %c48 = arith.constant 48 : index
    %c0_77 = arith.constant 0 : index
    %78 = vector.load %arg3[%c48, %c0_77] : memref<72x128xf32, #tpu.memory_space<vmem>>, vector<8x128xf32>
    %cst_78 = arith.constant dense<0.000000e+00> : vector<256x128xf32>
    %79 = tpu.matmul %77, %78, %cst_78 {dimension_numbers = #tpu.dot_dimension_numbers<[1], [0], [0], [1], [0, 0, 1, 1], [], []>} : vector<256x8xf32>, vector<8x128xf32>, vector<256x128xf32> -> vector<256x128xf32>
    %80 = arith.addf %76, %79 : vector<256x128xf32>
    %c33_79 = arith.constant 33 : index
    %c0_80 = arith.constant 0 : index
    %81 = vector.load %arg10[%c33_79, %c0_80] : memref<320x128xf32, #tpu.memory_space<vmem>>, vector<256x8xf32>
    %c56 = arith.constant 56 : index
    %c0_81 = arith.constant 0 : index
    %82 = vector.load %arg3[%c56, %c0_81] : memref<72x128xf32, #tpu.memory_space<vmem>>, vector<8x128xf32>
    %cst_82 = arith.constant dense<0.000000e+00> : vector<256x128xf32>
    %83 = tpu.matmul %81, %82, %cst_82 {dimension_numbers = #tpu.dot_dimension_numbers<[1], [0], [0], [1], [0, 0, 1, 1], [], []>} : vector<256x8xf32>, vector<8x128xf32>, vector<256x128xf32> -> vector<256x128xf32>
    %84 = arith.addf %80, %83 : vector<256x128xf32>
    %c34_83 = arith.constant 34 : index
    %c0_84 = arith.constant 0 : index
    %85 = vector.load %arg10[%c34_83, %c0_84] : memref<320x128xf32, #tpu.memory_space<vmem>>, vector<256x8xf32>
    %c64 = arith.constant 64 : index
    %c0_85 = arith.constant 0 : index
    %86 = vector.load %arg3[%c64, %c0_85] : memref<72x128xf32, #tpu.memory_space<vmem>>, vector<8x128xf32>
    %cst_86 = arith.constant dense<0.000000e+00> : vector<256x128xf32>
    %87 = tpu.matmul %85, %86, %cst_86 {dimension_numbers = #tpu.dot_dimension_numbers<[1], [0], [0], [1], [0, 0, 1, 1], [], []>} : vector<256x8xf32>, vector<8x128xf32>, vector<256x128xf32> -> vector<256x128xf32>
    %88 = arith.addf %84, %87 : vector<256x128xf32>
    %c0_87 = arith.constant 0 : index
    %c0_88 = arith.constant 0 : index
    %89 = vector.load %arg6[%c0_87, %c0_88] : memref<1x128xf32, #tpu.memory_space<vmem>>, vector<1x128xf32>
    %90 = vector.broadcast %89 : vector<1x128xf32> to vector<256x128xf32>
    %91 = arith.addf %88, %90 : vector<256x128xf32>
    %cst_89 = arith.constant 0.000000e+00 : f32
    %92 = vector.broadcast %cst_89 : f32 to vector<256x128xf32>
    %93 = arith.cmpf oge, %91, %92 : vector<256x128xf32>
    %cst_90 = arith.constant 0.00999999977 : f32
    %94 = vector.broadcast %cst_90 : f32 to vector<256x128xf32>
    %95 = arith.mulf %94, %91 : vector<256x128xf32>
    %96 = arith.select %93, %91, %95 : vector<256x128xi1>, vector<256x128xf32>
    %c0_91 = arith.constant 0 : index
    %c0_92 = arith.constant 0 : index
    %97 = vector.load %arg11[%c0_91, %c0_92] : memref<256x128xf32, #tpu.memory_space<vmem>>, vector<256x128xf32>
    tpu.vector_store %arg11[%c0_91, %c0_92], %96 {strides = array<i32>} : memref<256x128xf32, #tpu.memory_space<vmem>>, vector<256x128xf32>,
    %cst_93 = arith.constant 0.000000e+00 : f32
    %98 = vector.broadcast %cst_93 : f32 to vector<128x128xf32>
    %c0_94 = arith.constant 0 : index
    %c0_95 = arith.constant 0 : index
    %99 = vector.load %arg11[%c0_94, %c0_95] : memref<256x128xf32, #tpu.memory_space<vmem>>, vector<128x16xf32>
    %c0_96 = arith.constant 0 : index
    %c0_97 = arith.constant 0 : index
    %100 = vector.load %arg4[%c0_96, %c0_97] : memref<144x128xf32, #tpu.memory_space<vmem>>, vector<16x128xf32>
    %cst_98 = arith.constant dense<0.000000e+00> : vector<128x128xf32>
    %101 = tpu.matmul %99, %100, %cst_98 {dimension_numbers = #tpu.dot_dimension_numbers<[1], [0], [0], [1], [0, 0, 1, 1], [], []>} : vector<128x16xf32>, vector<16x128xf32>, vector<128x128xf32> -> vector<128x128xf32>
    %102 = arith.addf %98, %101 : vector<128x128xf32>
    %c2_99 = arith.constant 2 : index
    %c0_100 = arith.constant 0 : index
    %103 = vector.load %arg11[%c2_99, %c0_100] : memref<256x128xf32, #tpu.memory_space<vmem>>, vector<128x16xf32>
    %c16_101 = arith.constant 16 : index
    %c0_102 = arith.constant 0 : index
    %104 = vector.load %arg4[%c16_101, %c0_102] : memref<144x128xf32, #tpu.memory_space<vmem>>, vector<16x128xf32>
    %cst_103 = arith.constant dense<0.000000e+00> : vector<128x128xf32>
    %105 = tpu.matmul %103, %104, %cst_103 {dimension_numbers = #tpu.dot_dimension_numbers<[1], [0], [0], [1], [0, 0, 1, 1], [], []>} : vector<128x16xf32>, vector<16x128xf32>, vector<128x128xf32> -> vector<128x128xf32>
    %106 = arith.addf %102, %105 : vector<128x128xf32>
    %c4_104 = arith.constant 4 : index
    %c0_105 = arith.constant 0 : index
    %107 = vector.load %arg11[%c4_104, %c0_105] : memref<256x128xf32, #tpu.memory_space<vmem>>, vector<128x16xf32>
    %c32_106 = arith.constant 32 : index
    %c0_107 = arith.constant 0 : index
    %108 = vector.load %arg4[%c32_106, %c0_107] : memref<144x128xf32, #tpu.memory_space<vmem>>, vector<16x128xf32>
    %cst_108 = arith.constant dense<0.000000e+00> : vector<128x128xf32>
    %109 = tpu.matmul %107, %108, %cst_108 {dimension_numbers = #tpu.dot_dimension_numbers<[1], [0], [0], [1], [0, 0, 1, 1], [], []>} : vector<128x16xf32>, vector<16x128xf32>, vector<128x128xf32> -> vector<128x128xf32>
    %110 = arith.addf %106, %109 : vector<128x128xf32>
    %c32_109 = arith.constant 32 : index
    %c0_110 = arith.constant 0 : index
    %111 = vector.load %arg11[%c32_109, %c0_110] : memref<256x128xf32, #tpu.memory_space<vmem>>, vector<128x16xf32>
    %c48_111 = arith.constant 48 : index
    %c0_112 = arith.constant 0 : index
    %112 = vector.load %arg4[%c48_111, %c0_112] : memref<144x128xf32, #tpu.memory_space<vmem>>, vector<16x128xf32>
    %cst_113 = arith.constant dense<0.000000e+00> : vector<128x128xf32>
    %113 = tpu.matmul %111, %112, %cst_113 {dimension_numbers = #tpu.dot_dimension_numbers<[1], [0], [0], [1], [0, 0, 1, 1], [], []>} : vector<128x16xf32>, vector<16x128xf32>, vector<128x128xf32> -> vector<128x128xf32>
    %114 = arith.addf %110, %113 : vector<128x128xf32>
    %c34_114 = arith.constant 34 : index
    %c0_115 = arith.constant 0 : index
    %115 = vector.load %arg11[%c34_114, %c0_115] : memref<256x128xf32, #tpu.memory_space<vmem>>, vector<128x16xf32>
    %c64_116 = arith.constant 64 : index
    %c0_117 = arith.constant 0 : index
    %116 = vector.load %arg4[%c64_116, %c0_117] : memref<144x128xf32, #tpu.memory_space<vmem>>, vector<16x128xf32>
    %cst_118 = arith.constant dense<0.000000e+00> : vector<128x128xf32>
    %117 = tpu.matmul %115, %116, %cst_118 {dimension_numbers = #tpu.dot_dimension_numbers<[1], [0], [0], [1], [0, 0, 1, 1], [], []>} : vector<128x16xf32>, vector<16x128xf32>, vector<128x128xf32> -> vector<128x128xf32>
    %118 = arith.addf %114, %117 : vector<128x128xf32>
    %c36 = arith.constant 36 : index
    %c0_119 = arith.constant 0 : index
    %119 = vector.load %arg11[%c36, %c0_119] : memref<256x128xf32, #tpu.memory_space<vmem>>, vector<128x16xf32>
    %c80 = arith.constant 80 : index
    %c0_120 = arith.constant 0 : index
    %120 = vector.load %arg4[%c80, %c0_120] : memref<144x128xf32, #tpu.memory_space<vmem>>, vector<16x128xf32>
    %cst_121 = arith.constant dense<0.000000e+00> : vector<128x128xf32>
    %121 = tpu.matmul %119, %120, %cst_121 {dimension_numbers = #tpu.dot_dimension_numbers<[1], [0], [0], [1], [0, 0, 1, 1], [], []>} : vector<128x16xf32>, vector<16x128xf32>, vector<128x128xf32> -> vector<128x128xf32>
    %122 = arith.addf %118, %121 : vector<128x128xf32>
    %c64_122 = arith.constant 64 : index
    %c0_123 = arith.constant 0 : index
    %123 = vector.load %arg11[%c64_122, %c0_123] : memref<256x128xf32, #tpu.memory_space<vmem>>, vector<128x16xf32>
    %c96 = arith.constant 96 : index
    %c0_124 = arith.constant 0 : index
    %124 = vector.load %arg4[%c96, %c0_124] : memref<144x128xf32, #tpu.memory_space<vmem>>, vector<16x128xf32>
    %cst_125 = arith.constant dense<0.000000e+00> : vector<128x128xf32>
    %125 = tpu.matmul %123, %124, %cst_125 {dimension_numbers = #tpu.dot_dimension_numbers<[1], [0], [0], [1], [0, 0, 1, 1], [], []>} : vector<128x16xf32>, vector<16x128xf32>, vector<128x128xf32> -> vector<128x128xf32>
    %126 = arith.addf %122, %125 : vector<128x128xf32>
    %c66 = arith.constant 66 : index
    %c0_126 = arith.constant 0 : index
    %127 = vector.load %arg11[%c66, %c0_126] : memref<256x128xf32, #tpu.memory_space<vmem>>, vector<128x16xf32>
    %c112 = arith.constant 112 : index
    %c0_127 = arith.constant 0 : index
    %128 = vector.load %arg4[%c112, %c0_127] : memref<144x128xf32, #tpu.memory_space<vmem>>, vector<16x128xf32>
    %cst_128 = arith.constant dense<0.000000e+00> : vector<128x128xf32>
    %129 = tpu.matmul %127, %128, %cst_128 {dimension_numbers = #tpu.dot_dimension_numbers<[1], [0], [0], [1], [0, 0, 1, 1], [], []>} : vector<128x16xf32>, vector<16x128xf32>, vector<128x128xf32> -> vector<128x128xf32>
    %130 = arith.addf %126, %129 : vector<128x128xf32>
    %c68 = arith.constant 68 : index
    %c0_129 = arith.constant 0 : index
    %131 = vector.load %arg11[%c68, %c0_129] : memref<256x128xf32, #tpu.memory_space<vmem>>, vector<128x16xf32>
    %c128 = arith.constant 128 : index
    %c0_130 = arith.constant 0 : index
    %132 = vector.load %arg4[%c128, %c0_130] : memref<144x128xf32, #tpu.memory_space<vmem>>, vector<16x128xf32>
    %cst_131 = arith.constant dense<0.000000e+00> : vector<128x128xf32>
    %133 = tpu.matmul %131, %132, %cst_131 {dimension_numbers = #tpu.dot_dimension_numbers<[1], [0], [0], [1], [0, 0, 1, 1], [], []>} : vector<128x16xf32>, vector<16x128xf32>, vector<128x128xf32> -> vector<128x128xf32>
    %134 = arith.addf %130, %133 : vector<128x128xf32>
    %c0_132 = arith.constant 0 : index
    %c0_133 = arith.constant 0 : index
    %135 = vector.load %arg7[%c0_132, %c0_133] : memref<1x128xf32, #tpu.memory_space<vmem>>, vector<1x128xf32>
    %136 = vector.broadcast %135 : vector<1x128xf32> to vector<128x128xf32>
    %137 = arith.addf %134, %136 : vector<128x128xf32>
    %cst_134 = arith.constant 0.000000e+00 : f32
    %138 = vector.broadcast %cst_134 : f32 to vector<128x128xf32>
    %139 = arith.cmpf oge, %137, %138 : vector<128x128xf32>
    %cst_135 = arith.constant 0.00999999977 : f32
    %140 = vector.broadcast %cst_135 : f32 to vector<128x128xf32>
    %141 = arith.mulf %140, %137 : vector<128x128xf32>
    %142 = arith.select %139, %137, %141 : vector<128x128xi1>, vector<128x128xf32>
    %143 = vector.extract_strided_slice %142 {offsets = [0, 0], sizes = [1, 32], strides = [1, 1]} : vector<128x128xf32> to vector<1x32xf32>
    %c0_136 = arith.constant 0 : index
    %c0_137 = arith.constant 0 : index
    %144 = vector.load %arg8[%c0_136, %c0_137] : memref<16x32xf32, #tpu.memory_space<vmem>>, vector<1x32xf32>
    tpu.vector_store %arg8[%c0_136, %c0_137], %143 {strides = array<i32>} : memref<16x32xf32, #tpu.memory_space<vmem>>, vector<1x32xf32>,
    %145 = vector.extract_strided_slice %142 {offsets = [2, 0], sizes = [1, 32], strides = [1, 1]} : vector<128x128xf32> to vector<1x32xf32>
    %c1_138 = arith.constant 1 : index
    %c0_139 = arith.constant 0 : index
    %146 = vector.load %arg8[%c1_138, %c0_139] : memref<16x32xf32, #tpu.memory_space<vmem>>, vector<1x32xf32>
    tpu.vector_store %arg8[%c1_138, %c0_139], %145 {strides = array<i32>} : memref<16x32xf32, #tpu.memory_space<vmem>>, vector<1x32xf32>,
    %147 = vector.extract_strided_slice %142 {offsets = [4, 0], sizes = [1, 32], strides = [1, 1]} : vector<128x128xf32> to vector<1x32xf32>
    %c2_140 = arith.constant 2 : index
    %c0_141 = arith.constant 0 : index
    %148 = vector.load %arg8[%c2_140, %c0_141] : memref<16x32xf32, #tpu.memory_space<vmem>>, vector<1x32xf32>
    tpu.vector_store %arg8[%c2_140, %c0_141], %147 {strides = array<i32>} : memref<16x32xf32, #tpu.memory_space<vmem>>, vector<1x32xf32>,
    %149 = vector.extract_strided_slice %142 {offsets = [6, 0], sizes = [1, 32], strides = [1, 1]} : vector<128x128xf32> to vector<1x32xf32>
    %c3 = arith.constant 3 : index
    %c0_142 = arith.constant 0 : index
    %150 = vector.load %arg8[%c3, %c0_142] : memref<16x32xf32, #tpu.memory_space<vmem>>, vector<1x32xf32>
    tpu.vector_store %arg8[%c3, %c0_142], %149 {strides = array<i32>} : memref<16x32xf32, #tpu.memory_space<vmem>>, vector<1x32xf32>,
    %151 = vector.extract_strided_slice %142 {offsets = [32, 0], sizes = [1, 32], strides = [1, 1]} : vector<128x128xf32> to vector<1x32xf32>
    %c4_143 = arith.constant 4 : index
    %c0_144 = arith.constant 0 : index
    %152 = vector.load %arg8[%c4_143, %c0_144] : memref<16x32xf32, #tpu.memory_space<vmem>>, vector<1x32xf32>
    tpu.vector_store %arg8[%c4_143, %c0_144], %151 {strides = array<i32>} : memref<16x32xf32, #tpu.memory_space<vmem>>, vector<1x32xf32>,
    %153 = vector.extract_strided_slice %142 {offsets = [34, 0], sizes = [1, 32], strides = [1, 1]} : vector<128x128xf32> to vector<1x32xf32>
    %c5 = arith.constant 5 : index
    %c0_145 = arith.constant 0 : index
    %154 = vector.load %arg8[%c5, %c0_145] : memref<16x32xf32, #tpu.memory_space<vmem>>, vector<1x32xf32>
    tpu.vector_store %arg8[%c5, %c0_145], %153 {strides = array<i32>} : memref<16x32xf32, #tpu.memory_space<vmem>>, vector<1x32xf32>,
    %155 = vector.extract_strided_slice %142 {offsets = [36, 0], sizes = [1, 32], strides = [1, 1]} : vector<128x128xf32> to vector<1x32xf32>
    %c6 = arith.constant 6 : index
    %c0_146 = arith.constant 0 : index
    %156 = vector.load %arg8[%c6, %c0_146] : memref<16x32xf32, #tpu.memory_space<vmem>>, vector<1x32xf32>
    tpu.vector_store %arg8[%c6, %c0_146], %155 {strides = array<i32>} : memref<16x32xf32, #tpu.memory_space<vmem>>, vector<1x32xf32>,
    %157 = vector.extract_strided_slice %142 {offsets = [38, 0], sizes = [1, 32], strides = [1, 1]} : vector<128x128xf32> to vector<1x32xf32>
    %c7 = arith.constant 7 : index
    %c0_147 = arith.constant 0 : index
    %158 = vector.load %arg8[%c7, %c0_147] : memref<16x32xf32, #tpu.memory_space<vmem>>, vector<1x32xf32>
    tpu.vector_store %arg8[%c7, %c0_147], %157 {strides = array<i32>} : memref<16x32xf32, #tpu.memory_space<vmem>>, vector<1x32xf32>,
    %159 = vector.extract_strided_slice %142 {offsets = [64, 0], sizes = [1, 32], strides = [1, 1]} : vector<128x128xf32> to vector<1x32xf32>
    %c8_148 = arith.constant 8 : index
    %c0_149 = arith.constant 0 : index
    %160 = vector.load %arg8[%c8_148, %c0_149] : memref<16x32xf32, #tpu.memory_space<vmem>>, vector<1x32xf32>
    tpu.vector_store %arg8[%c8_148, %c0_149], %159 {strides = array<i32>} : memref<16x32xf32, #tpu.memory_space<vmem>>, vector<1x32xf32>,
    %161 = vector.extract_strided_slice %142 {offsets = [66, 0], sizes = [1, 32], strides = [1, 1]} : vector<128x128xf32> to vector<1x32xf32>
    %c9 = arith.constant 9 : index
    %c0_150 = arith.constant 0 : index
    %162 = vector.load %arg8[%c9, %c0_150] : memref<16x32xf32, #tpu.memory_space<vmem>>, vector<1x32xf32>
    tpu.vector_store %arg8[%c9, %c0_150], %161 {strides = array<i32>} : memref<16x32xf32, #tpu.memory_space<vmem>>, vector<1x32xf32>,
    %163 = vector.extract_strided_slice %142 {offsets = [68, 0], sizes = [1, 32], strides = [1, 1]} : vector<128x128xf32> to vector<1x32xf32>
    %c10 = arith.constant 10 : index
    %c0_151 = arith.constant 0 : index
    %164 = vector.load %arg8[%c10, %c0_151] : memref<16x32xf32, #tpu.memory_space<vmem>>, vector<1x32xf32>
    tpu.vector_store %arg8[%c10, %c0_151], %163 {strides = array<i32>} : memref<16x32xf32, #tpu.memory_space<vmem>>, vector<1x32xf32>,
    %165 = vector.extract_strided_slice %142 {offsets = [70, 0], sizes = [1, 32], strides = [1, 1]} : vector<128x128xf32> to vector<1x32xf32>
    %c11 = arith.constant 11 : index
    %c0_152 = arith.constant 0 : index
    %166 = vector.load %arg8[%c11, %c0_152] : memref<16x32xf32, #tpu.memory_space<vmem>>, vector<1x32xf32>
    tpu.vector_store %arg8[%c11, %c0_152], %165 {strides = array<i32>} : memref<16x32xf32, #tpu.memory_space<vmem>>, vector<1x32xf32>,
    %167 = vector.extract_strided_slice %142 {offsets = [96, 0], sizes = [1, 32], strides = [1, 1]} : vector<128x128xf32> to vector<1x32xf32>
    %c12_153 = arith.constant 12 : index
    %c0_154 = arith.constant 0 : index
    %168 = vector.load %arg8[%c12_153, %c0_154] : memref<16x32xf32, #tpu.memory_space<vmem>>, vector<1x32xf32>
    tpu.vector_store %arg8[%c12_153, %c0_154], %167 {strides = array<i32>} : memref<16x32xf32, #tpu.memory_space<vmem>>, vector<1x32xf32>,
    %169 = vector.extract_strided_slice %142 {offsets = [98, 0], sizes = [1, 32], strides = [1, 1]} : vector<128x128xf32> to vector<1x32xf32>
    %c13 = arith.constant 13 : index
    %c0_155 = arith.constant 0 : index
    %170 = vector.load %arg8[%c13, %c0_155] : memref<16x32xf32, #tpu.memory_space<vmem>>, vector<1x32xf32>
    tpu.vector_store %arg8[%c13, %c0_155], %169 {strides = array<i32>} : memref<16x32xf32, #tpu.memory_space<vmem>>, vector<1x32xf32>,
    %171 = vector.extract_strided_slice %142 {offsets = [100, 0], sizes = [1, 32], strides = [1, 1]} : vector<128x128xf32> to vector<1x32xf32>
    %c14 = arith.constant 14 : index
    %c0_156 = arith.constant 0 : index
    %172 = vector.load %arg8[%c14, %c0_156] : memref<16x32xf32, #tpu.memory_space<vmem>>, vector<1x32xf32>
    tpu.vector_store %arg8[%c14, %c0_156], %171 {strides = array<i32>} : memref<16x32xf32, #tpu.memory_space<vmem>>, vector<1x32xf32>,
    %173 = vector.extract_strided_slice %142 {offsets = [102, 0], sizes = [1, 32], strides = [1, 1]} : vector<128x128xf32> to vector<1x32xf32>
    %c15 = arith.constant 15 : index
    %c0_157 = arith.constant 0 : index
    %174 = vector.load %arg8[%c15, %c0_157] : memref<16x32xf32, #tpu.memory_space<vmem>>, vector<1x32xf32>
    tpu.vector_store %arg8[%c15, %c0_157], %173 {strides = array<i32>} : memref<16x32xf32, #tpu.memory_space<vmem>>, vector<1x32xf32>,
    return
  }
  func.func @transform_0(%arg0: i32) -> (i32, i32) {
    %c0_i32 = arith.constant 0 : i32
    %c0_i32_0 = arith.constant 0 : i32
    return %arg0, %c0_i32 : i32, i32
  }
  func.func @transform_1(%arg0: i32) -> (i32, i32) {
    %c0_i32 = arith.constant 0 : i32
    %c0_i32_0 = arith.constant 0 : i32
    %c0_i32_1 = arith.constant 0 : i32
    return %c0_i32, %c0_i32_0 : i32, i32
  }
  func.func @transform_2(%arg0: i32) -> (i32, i32) {
    %c0_i32 = arith.constant 0 : i32
    %c0_i32_0 = arith.constant 0 : i32
    %c0_i32_1 = arith.constant 0 : i32
    return %c0_i32, %c0_i32_0 : i32, i32
  }
  func.func @transform_3(%arg0: i32) -> (i32, i32) {
    %c0_i32 = arith.constant 0 : i32
    %c0_i32_0 = arith.constant 0 : i32
    %c0_i32_1 = arith.constant 0 : i32
    return %c0_i32, %c0_i32_0 : i32, i32
  }
  func.func @transform_4(%arg0: i32) -> (i32, i32) {
    %c0_i32 = arith.constant 0 : i32
    %c0_i32_0 = arith.constant 0 : i32
    %c0_i32_1 = arith.constant 0 : i32
    return %c0_i32, %c0_i32_0 : i32, i32
  }
  func.func @transform_5(%arg0: i32) -> (i32, i32) {
    %c0_i32 = arith.constant 0 : i32
    %c0_i32_0 = arith.constant 0 : i32
    %c0_i32_1 = arith.constant 0 : i32
    return %c0_i32, %c0_i32_0 : i32, i32
  }
  func.func @transform_6(%arg0: i32) -> (i32, i32) {
    %c0_i32 = arith.constant 0 : i32
    %c0_i32_0 = arith.constant 0 : i32
    %c0_i32_1 = arith.constant 0 : i32
    return %c0_i32, %c0_i32_0 : i32, i32
  }
  func.func @transform_7(%arg0: i32) -> (i32, i32) {
    %c0_i32 = arith.constant 0 : i32
    %c0_i32_0 = arith.constant 0 : i32
    return %arg0, %c0_i32 : i32, i32
  }
}

</mosaic_0001>

<llo_original>
// kernel: representation_forward.1
$region0: #{representation_forward.1}
  #allocation0 [shape = 'u32[]', space=smem, size = 0x4, offset = 0x4, fixed_abs, tag = 'smem constant byte address 0x4 - core index']
  #allocation1 [shape = 'u32[72,128]{1,0:T(1,128)}', space=vmem, size = 0x9000, scoped, tag = 'internal scratch']
  #allocation2 [shape = 'f32[320,4]{1,0:T(8,128)}', space=vmem, size = 0x28000, scoped, tag = 'scratch operand']
  #allocation3 [shape = 'f32[320,128]{1,0:T(8,128)}', space=vmem, size = 0x28000, scoped, tag = 'scratch operand']
  #allocation4 [shape = 'f32[256,128]{1,0:T(8,128)}', space=vmem, size = 0x20000, scoped, tag = 'scratch operand']
  %s0 = inlined_call_operand.vmem [shape: f32[512,4], index: 0, kind: input, shape index: {}]
  %s1 = inlined_call_operand.vmem [shape: f32[36,128], index: 1, kind: input, shape index: {}]
  %s2 = inlined_call_operand.vmem [shape: f32[72,128], index: 2, kind: input, shape index: {}]
  %s3 = inlined_call_operand.vmem [shape: f32[144,128], index: 3, kind: input, shape index: {}]
  %s4 = inlined_call_operand.vmem [shape: f32[1,128], index: 4, kind: input, shape index: {}]
  %s5 = inlined_call_operand.vmem [shape: f32[1,128], index: 5, kind: input, shape index: {}]
  %s6 = inlined_call_operand.vmem [shape: f32[1,128], index: 6, kind: input, shape index: {}]
  %s7 = inlined_call_operand.vmem [shape: f32[32,32], index: 7, kind: output, shape index: {}]
  %s8 = sld [smem:[#allocation0]]
  $region61: #{representation_forward.1} parent=0
    _
  %s10 = ssub.s32 1, %s8
  %s11 = scalar_select 0, %s10, %s8
  loop: start=0, step=1, limit=4
  $region2: #{representation_forward.1} parent=0 // loop_pre_header
    _
  $region3: #{representation_forward.1} parent=0 // loop_header
    %s13 = sphi 0, %s17
    %p14 = scmp.ge.s32.totalorder %s13, 4
    %s23 = sphi 0, %s25
    %s26 = sphi 0, %s23
    %s27 = sphi 0, %s26
    %s43 = sphi 0, %s27
    %s47 = sphi 0, %s47
    %s49 = sphi 0, %s47
    %s50 = sphi 0, %s49
    %s64 = sphi 0, %s50
    %s68 = sphi 0, %s68
    %s70 = sphi 0, %s68
    %s71 = sphi 0, %s70
    %s85 = sphi 0, %s71
    %s89 = sphi 0, %s89
    %s91 = sphi 0, %s89
    %s92 = sphi 0, %s91
    %s106 = sphi 0, %s92
    %s110 = sphi 0, %s110
    %s112 = sphi 0, %s110
    %s113 = sphi 0, %s112
    %s127 = sphi 0, %s113
    %s131 = sphi 0, %s131
    %s133 = sphi 0, %s131
    %s134 = sphi 0, %s133
    %s148 = sphi 0, %s134
    %s152 = sphi 0, %s152
    %s154 = sphi 0, %s152
    %s155 = sphi 0, %s154
    %s169 = sphi 0, %s155
    %s175 = sphi 0, %s177
    %s178 = sphi 0, %s175
    %s179 = sphi 0, %s178
    %s195 = sphi 0, %s179
  $region4: #{representation_forward.1} parent=0 // loop_header_branch
    %16 = sbr.rel (%p14) target = $region8
  $region5: #{representation_forward.1} parent=0 // loop_body
    %s18 = ssub.s32 %s13, 1
    %s19 = ssub.s32 %s13, 2
    %s20 = sadd.s32 %s13, 1
    %s21 = ssub.s32 %s13, %s20
    %p22 = scmp.eq.s32.totalorder %s21, 0
    %s24 = sadd.s32 %s23, 1
    %s25 = scalar_select %p22, %s23, %s24
    %p28 = pneg %p22
    %p29 = scmp.eq.s32.totalorder %s13, 1
    %p30 = por %p28, %p29
    %p31 = scmp.ne.s32.totalorder %s23, %s26
    %p32 = scmp.eq.s32.totalorder %s13, 0
    %p33 = por %p31, %p32
    %p34 = scmp.ne.s32.totalorder %s23, %s26
    %p35 = scmp.eq.s32.totalorder %s18, 1
    %p36 = por %p34, %p35
    %p37 = scmp.ne.s32.totalorder %s26, %s27
    %p38 = scmp.eq.s32.totalorder %s18, 0
    %p39 = por %p37, %p38
    %p40 = scmp.ne.s32.totalorder %s26, %s27
    %p41 = scmp.eq.s32.totalorder %s19, 1
    %p42 = por %p40, %p41
    %p44 = scmp.ne.s32.totalorder %s27, %s43
    %p45 = scmp.eq.s32.totalorder %s19, 0
    %p46 = por %p44, %p45
    %s48 = sadd.s32 %s47, 1
    %p51 = scmp.eq.s32.totalorder %s13, 1
    %p52 = scmp.ne.s32.totalorder %s47, %s49
    %p53 = scmp.eq.s32.totalorder %s13, 0
    %p54 = por %p52, %p53
    %p55 = scmp.ne.s32.totalorder %s47, %s49
    %p56 = scmp.eq.s32.totalorder %s18, 1
    %p57 = por %p55, %p56
    %p58 = scmp.ne.s32.totalorder %s49, %s50
    %p59 = scmp.eq.s32.totalorder %s18, 0
    %p60 = por %p58, %p59
    %p61 = scmp.ne.s32.totalorder %s49, %s50
    %p62 = scmp.eq.s32.totalorder %s19, 1
    %p63 = por %p61, %p62
    %p65 = scmp.ne.s32.totalorder %s50, %s64
    %p66 = scmp.eq.s32.totalorder %s19, 0
    %p67 = por %p65, %p66
    %s69 = sadd.s32 %s68, 1
    %p72 = scmp.eq.s32.totalorder %s13, 1
    %p73 = scmp.ne.s32.totalorder %s68, %s70
    %p74 = scmp.eq.s32.totalorder %s13, 0
    %p75 = por %p73, %p74
    %p76 = scmp.ne.s32.totalorder %s68, %s70
    %p77 = scmp.eq.s32.totalorder %s18, 1
    %p78 = por %p76, %p77
    %p79 = scmp.ne.s32.totalorder %s70, %s71
    %p80 = scmp.eq.s32.totalorder %s18, 0
    %p81 = por %p79, %p80
    %p82 = scmp.ne.s32.totalorder %s70, %s71
    %p83 = scmp.eq.s32.totalorder %s19, 1
    %p84 = por %p82, %p83
    %p86 = scmp.ne.s32.totalorder %s71, %s85
    %p87 = scmp.eq.s32.totalorder %s19, 0
    %p88 = por %p86, %p87
    %s90 = sadd.s32 %s89, 1
    %p93 = scmp.eq.s32.totalorder %s13, 1
    %p94 = scmp.ne.s32.totalorder %s89, %s91
    %p95 = scmp.eq.s32.totalorder %s13, 0
    %p96 = por %p94, %p95
    %p97 = scmp.ne.s32.totalorder %s89, %s91
    %p98 = scmp.eq.s32.totalorder %s18, 1
    %p99 = por %p97, %p98
    %p100 = scmp.ne.s32.totalorder %s91, %s92
    %p101 = scmp.eq.s32.totalorder %s18, 0
    %p102 = por %p100, %p101
    %p103 = scmp.ne.s32.totalorder %s91, %s92
    %p104 = scmp.eq.s32.totalorder %s19, 1
    %p105 = por %p103, %p104
    %p107 = scmp.ne.s32.totalorder %s92, %s106
    %p108 = scmp.eq.s32.totalorder %s19, 0
    %p109 = por %p107, %p108
    %s111 = sadd.s32 %s110, 1
    %p114 = scmp.eq.s32.totalorder %s13, 1
    %p115 = scmp.ne.s32.totalorder %s110, %s112
    %p116 = scmp.eq.s32.totalorder %s13, 0
    %p117 = por %p115, %p116
    %p118 = scmp.ne.s32.totalorder %s110, %s112
    %p119 = scmp.eq.s32.totalorder %s18, 1
    %p120 = por %p118, %p119
    %p121 = scmp.ne.s32.totalorder %s112, %s113
    %p122 = scmp.eq.s32.totalorder %s18, 0
    %p123 = por %p121, %p122
    %p124 = scmp.ne.s32.totalorder %s112, %s113
    %p125 = scmp.eq.s32.totalorder %s19, 1
    %p126 = por %p124, %p125
    %p128 = scmp.ne.s32.totalorder %s113, %s127
    %p129 = scmp.eq.s32.totalorder %s19, 0
    %p130 = por %p128, %p129
    %s132 = sadd.s32 %s131, 1
    %p135 = scmp.eq.s32.totalorder %s13, 1
    %p136 = scmp.ne.s32.totalorder %s131, %s133
    %p137 = scmp.eq.s32.totalorder %s13, 0
    %p138 = por %p136, %p137
    %p139 = scmp.ne.s32.totalorder %s131, %s133
    %p140 = scmp.eq.s32.totalorder %s18, 1
    %p141 = por %p139, %p140
    %p142 = scmp.ne.s32.totalorder %s133, %s134
    %p143 = scmp.eq.s32.totalorder %s18, 0
    %p144 = por %p142, %p143
    %p145 = scmp.ne.s32.totalorder %s133, %s134
    %p146 = scmp.eq.s32.totalorder %s19, 1
    %p147 = por %p145, %p146
    %p149 = scmp.ne.s32.totalorder %s134, %s148
    %p150 = scmp.eq.s32.totalorder %s19, 0
    %p151 = por %p149, %p150
    %s153 = sadd.s32 %s152, 1
    %p156 = scmp.eq.s32.totalorder %s13, 1
    %p157 = scmp.ne.s32.totalorder %s152, %s154
    %p158 = scmp.eq.s32.totalorder %s13, 0
    %p159 = por %p157, %p158
    %p160 = scmp.ne.s32.totalorder %s152, %s154
    %p161 = scmp.eq.s32.totalorder %s18, 1
    %p162 = por %p160, %p161
    %p163 = scmp.ne.s32.totalorder %s154, %s155
    %p164 = scmp.eq.s32.totalorder %s18, 0
    %p165 = por %p163, %p164
    %p166 = scmp.ne.s32.totalorder %s154, %s155
    %p167 = scmp.eq.s32.totalorder %s19, 1
    %p168 = por %p166, %p167
    %p170 = scmp.ne.s32.totalorder %s155, %s169
    %p171 = scmp.eq.s32.totalorder %s19, 0
    %p172 = por %p170, %p171
    %s173 = ssub.s32 %s13, %s20
    %p174 = scmp.eq.s32.totalorder %s173, 0
    %s176 = sadd.s32 %s175, 1
    %s177 = scalar_select %p174, %s175, %s176
    %p180 = pneg %p174
    %p181 = scmp.eq.s32.totalorder %s13, 1
    %p182 = por %p180, %p181
    %p183 = scmp.ne.s32.totalorder %s175, %s178
    %p184 = scmp.eq.s32.totalorder %s13, 0
    %p185 = por %p183, %p184
    %p186 = scmp.ne.s32.totalorder %s175, %s178
    %p187 = scmp.eq.s32.totalorder %s18, 1
    %p188 = por %p186, %p187
    %p189 = scmp.ne.s32.totalorder %s178, %s179
    %p190 = scmp.eq.s32.totalorder %s18, 0
    %p191 = por %p189, %p190
    %p192 = scmp.ne.s32.totalorder %s178, %s179
    %p193 = scmp.eq.s32.totalorder %s19, 1
    %p194 = por %p192, %p193
    %p196 = scmp.ne.s32.totalorder %s179, %s195
    %p197 = scmp.eq.s32.totalorder %s19, 0
    %p198 = por %p196, %p197
    %p199 = scmp.le.s32.totalorder 1, %s13
    %p200 = scmp.lt.s32.totalorder %s13, 3
    %p201 = pnand %p199, %p200
    %p202 = pneg %p201
    // Predicated region
    $region9: #{representation_forward.1} parent=5 // pred_check
      _
    $region10: #{representation_forward.1} parent=5 // pred_check_branch
      %204 = sbr.rel (%p201) target = $region12
    $region11: #{representation_forward.1} parent=5 // pred_region
      %s205 = ssub.s32 %s13, 1
      // Predicated region
      $region13: #{representation_forward.1} parent=11 // pred_check
        %p206 = pneg %p60
      $region14: #{representation_forward.1} parent=11 // pred_check_branch
        %208 = sbr.rel (%p206) target = $region16
      $region15: #{representation_forward.1} parent=11 // pred_region
        _
      $region16: #{representation_forward.1} parent=11 // pred_fallthru
        _
      // Predicated region
      $region17: #{representation_forward.1} parent=11 // pred_check
        %p209 = pneg %p81
      $region18: #{representation_forward.1} parent=11 // pred_check_branch
        %211 = sbr.rel (%p209) target = $region20
      $region19: #{representation_forward.1} parent=11 // pred_region
        _
      $region20: #{representation_forward.1} parent=11 // pred_fallthru
        _
      // Predicated region
      $region21: #{representation_forward.1} parent=11 // pred_check
        %p212 = pneg %p102
      $region22: #{representation_forward.1} parent=11 // pred_check_branch
        %214 = sbr.rel (%p212) target = $region24
      $region23: #{representation_forward.1} parent=11 // pred_region
        _
      $region24: #{representation_forward.1} parent=11 // pred_fallthru
        _
      // Predicated region
      $region25: #{representation_forward.1} parent=11 // pred_check
        %p215 = pneg %p123
      $region26: #{representation_forward.1} parent=11 // pred_check_branch
        %217 = sbr.rel (%p215) target = $region28
      $region27: #{representation_forward.1} parent=11 // pred_region
        _
      $region28: #{representation_forward.1} parent=11 // pred_fallthru
        _
      // Predicated region
      $region29: #{representation_forward.1} parent=11 // pred_check
        %p218 = pneg %p144
      $region30: #{representation_forward.1} parent=11 // pred_check_branch
        %220 = sbr.rel (%p218) target = $region32
      $region31: #{representation_forward.1} parent=11 // pred_region
        _
      $region32: #{representation_forward.1} parent=11 // pred_fallthru
        _
      // Predicated region
      $region33: #{representation_forward.1} parent=11 // pred_check
        %p221 = pneg %p165
      $region34: #{representation_forward.1} parent=11 // pred_check_branch
        %223 = sbr.rel (%p221) target = $region36
      $region35: #{representation_forward.1} parent=11 // pred_region
        _
      $region36: #{representation_forward.1} parent=11 // pred_fallthru
        _
    $region12: #{representation_forward.1} parent=5 // pred_fallthru
      _
    %p224 = scmp.lt.s32.totalorder %s13, 2
    // Predicated region
    $region37: #{representation_forward.1} parent=5 // pred_check
      %p225 = pneg %p224
    $region38: #{representation_forward.1} parent=5 // pred_check_branch
      %227 = sbr.rel (%p225) target = $region40
    $region39: #{representation_forward.1} parent=5 // pred_region
      // Predicated region
      $region41: #{representation_forward.1} parent=39 // pred_check
        %p228 = pneg %p33
      $region42: #{representation_forward.1} parent=39 // pred_check_branch
        %230 = sbr.rel (%p228) target = $region44
      $region43: #{representation_forward.1} parent=39 // pred_region
        %s231 = smul.u32 32, %s13
        %p232 = scmp.lt.s32.totalorder %s231, 63
        %s233 = scalar_select %p232, %s231, 63
        %s234 = smul.addr %s233, 8
        %s235 = scalar_lea.vmem %s0, %s234
        %s236 = smul.u32 32, %s13
      $region44: #{representation_forward.1} parent=39 // pred_fallthru
        _
    $region40: #{representation_forward.1} parent=5 // pred_fallthru
      _
    %p237 = scmp.le.s32.totalorder 1, %s13
    %p238 = scmp.lt.s32.totalorder %s13, 3
    %p239 = pnand %p237, %p238
    %p240 = pneg %p239
    // Predicated region
    $region45: #{representation_forward.1} parent=5 // pred_check
      _
    $region46: #{representation_forward.1} parent=5 // pred_check_branch
      %242 = sbr.rel (%p239) target = $region48
    $region47: #{representation_forward.1} parent=5 // pred_region
      %s243 = ssub.s32 %s13, 1
      %s244 = smul.u32 32, %s18
      %p245 = scmp.lt.s32.totalorder %s244, 63
      %s246 = scalar_select %p245, %s244, 63
      %s247 = smul.addr %s246, 8
      %s248 = scalar_lea.vmem %s0, %s247
      %p249 = pneg %p39
      %p250 = pneg %p36
      %p251 = pneg %p60
      %p252 = pneg %p57
      %p253 = pneg %p81
      %p254 = pneg %p78
      %p255 = pneg %p102
      %p256 = pneg %p99
      %p257 = pneg %p123
      %p258 = pneg %p120
      %p259 = pneg %p144
      %p260 = pneg %p141
      %p261 = pneg %p165
      %p262 = pneg %p162
      %p263 = pneg %p191
      %p264 = pneg %p188
      %s265 = smul.u32 2, %s18
      %p266 = scmp.lt.s32.totalorder %s265, 3
      %s267 = scalar_select %p266, %s265, 3
      %s268 = smul.addr %s267, 8
      %s269 = scalar_lea.vmem %s7, %s268
      %s270 = smul.u32 32, %s18
      %p271 = scmp.lt.s32.totalorder %s270, 63
      %s272 = scalar_select %p271, %s270, 63
      %s273 = smul.addr %s272, 8
      %s274 = scalar_lea.vmem %s0, %s273
      %s275 = smul.u32 32, %s18
      %s276 = smul.u32 2, %s18
      %p277 = scmp.lt.s32.totalorder %s276, 3
      %s278 = scalar_select %p277, %s276, 3
      %s279 = smul.addr %s278, 8
      %s280 = scalar_lea.vmem %s7, %s279
      %s281 = smul.u32 2, %s18
      %vm282 = vcmask 31744
      %283 = vst.msk [vmem:[#allocation2 + $0x100] sm:$0xff] %vm282, 0.0
      %284 = vst.msk [vmem:[#allocation2 + $0x108] sm:$0xff] %vm282, 0.0
      %285 = vst.msk [vmem:[#allocation2 + $0x110] sm:$0xff] %vm282, 0.0
      %286 = vst.msk [vmem:[#allocation2 + $0x118] sm:$0xff] %vm282, 0.0
      %287 = vst.msk [vmem:[#allocation2 + $0x120] sm:$0xff] %vm282, 0.0
      %288 = vst.msk [vmem:[#allocation2 + $0x128] sm:$0xff] %vm282, 0.0
      %289 = vst.msk [vmem:[#allocation2 + $0x130] sm:$0xff] %vm282, 0.0
      %290 = vst.msk [vmem:[#allocation2 + $0x138] sm:$0xff] %vm282, 0.0
      %v291 = vld [vmem:[%s274] sm:$0xff]
      %v292 = vld [vmem:[%s274 + $0x8] sm:$0xff]
      %v293 = vld [vmem:[%s274 + $0x10] sm:$0xff]
      %v294 = vld [vmem:[%s274 + $0x18] sm:$0xff]
      %v295 = vld [vmem:[%s274 + $0x20] sm:$0xff]
      %v296 = vld [vmem:[%s274 + $0x28] sm:$0xff]
      %v297 = vld [vmem:[%s274 + $0x30] sm:$0xff]
      %v298 = vld [vmem:[%s274 + $0x38] sm:$0xff]
      %v299 = vld [vmem:[%s274 + $0x40] sm:$0xff]
      %v300 = vld [vmem:[%s274 + $0x48] sm:$0xff]
      %v301 = vld [vmem:[%s274 + $0x50] sm:$0xff]
      %v302 = vld [vmem:[%s274 + $0x58] sm:$0xff]
      %v303 = vld [vmem:[%s274 + $0x60] sm:$0xff]
      %v304 = vld [vmem:[%s274 + $0x68] sm:$0xff]
      %v305 = vld [vmem:[%s274 + $0x70] sm:$0xff]
      %v306 = vld [vmem:[%s274 + $0x78] sm:$0xff]
      %v307 = vld [vmem:[%s274 + $0x80] sm:$0xff]
      %v308 = vld [vmem:[%s274 + $0x88] sm:$0xff]
      %v309 = vld [vmem:[%s274 + $0x90] sm:$0xff]
      %v310 = vld [vmem:[%s274 + $0x98] sm:$0xff]
      %v311 = vld [vmem:[%s274 + $0xa0] sm:$0xff]
      %v312 = vld [vmem:[%s274 + $0xa8] sm:$0xff]
      %v313 = vld [vmem:[%s274 + $0xb0] sm:$0xff]
      %v314 = vld [vmem:[%s274 + $0xb8] sm:$0xff]
      %v315 = vld [vmem:[%s274 + $0xc0] sm:$0xff]
      %v316 = vld [vmem:[%s274 + $0xc8] sm:$0xff]
      %v317 = vld [vmem:[%s274 + $0xd0] sm:$0xff]
      %v318 = vld [vmem:[%s274 + $0xd8] sm:$0xff]
      %v319 = vld [vmem:[%s274 + $0xe0] sm:$0xff]
      %v320 = vld [vmem:[%s274 + $0xe8] sm:$0xff]
      %v321 = vld [vmem:[%s274 + $0xf0] sm:$0xff]
      %v322 = vld [vmem:[%s274 + $0xf8] sm:$0xff]
      %323 = vst.msk [vmem:[#allocation2] sm:$0xff] %vm282, %v291
      %324 = vst.msk [vmem:[#allocation2 + $0x8] sm:$0xff] %vm282, %v292
      %325 = vst.msk [vmem:[#allocation2 + $0x10] sm:$0xff] %vm282, %v293
      %326 = vst.msk [vmem:[#allocation2 + $0x18] sm:$0xff] %vm282, %v294
      %327 = vst.msk [vmem:[#allocation2 + $0x20] sm:$0xff] %vm282, %v295
      %328 = vst.msk [vmem:[#allocation2 + $0x28] sm:$0xff] %vm282, %v296
      %329 = vst.msk [vmem:[#allocation2 + $0x30] sm:$0xff] %vm282, %v297
      %330 = vst.msk [vmem:[#allocation2 + $0x38] sm:$0xff] %vm282, %v298
      %331 = vst.msk [vmem:[#allocation2 + $0x40] sm:$0xff] %vm282, %v299
      %332 = vst.msk [vmem:[#allocation2 + $0x48] sm:$0xff] %vm282, %v300
      %333 = vst.msk [vmem:[#allocation2 + $0x50] sm:$0xff] %vm282, %v301
      %334 = vst.msk [vmem:[#allocation2 + $0x58] sm:$0xff] %vm282, %v302
      %335 = vst.msk [vmem:[#allocation2 + $0x60] sm:$0xff] %vm282, %v303
      %336 = vst.msk [vmem:[#allocation2 + $0x68] sm:$0xff] %vm282, %v304
      %337 = vst.msk [vmem:[#allocation2 + $0x70] sm:$0xff] %vm282, %v305
      %338 = vst.msk [vmem:[#allocation2 + $0x78] sm:$0xff] %vm282, %v306
      %339 = vst.msk [vmem:[#allocation2 + $0x80] sm:$0xff] %vm282, %v307
      %340 = vst.msk [vmem:[#allocation2 + $0x88] sm:$0xff] %vm282, %v308
      %341 = vst.msk [vmem:[#allocation2 + $0x90] sm:$0xff] %vm282, %v309
      %342 = vst.msk [vmem:[#allocation2 + $0x98] sm:$0xff] %vm282, %v310
      %343 = vst.msk [vmem:[#allocation2 + $0xa0] sm:$0xff] %vm282, %v311
      %344 = vst.msk [vmem:[#allocation2 + $0xa8] sm:$0xff] %vm282, %v312
      %345 = vst.msk [vmem:[#allocation2 + $0xb0] sm:$0xff] %vm282, %v313
      %346 = vst.msk [vmem:[#allocation2 + $0xb8] sm:$0xff] %vm282, %v314
      %347 = vst.msk [vmem:[#allocation2 + $0xc0] sm:$0xff] %vm282, %v315
      %348 = vst.msk [vmem:[#allocation2 + $0xc8] sm:$0xff] %vm282, %v316
      %349 = vst.msk [vmem:[#allocation2 + $0xd0] sm:$0xff] %vm282, %v317
      %350 = vst.msk [vmem:[#allocation2 + $0xd8] sm:$0xff] %vm282, %v318
      %351 = vst.msk [vmem:[#allocation2 + $0xe0] sm:$0xff] %vm282, %v319
      %352 = vst.msk [vmem:[#allocation2 + $0xe8] sm:$0xff] %vm282, %v320
      %353 = vst.msk [vmem:[#allocation2 + $0xf0] sm:$0xff] %vm282, %v321
      %354 = vst.msk [vmem:[#allocation2 + $0xf8] sm:$0xff] %vm282, %v322
      %v355 = vld [vmem:[#allocation2] sm:$0xff]
      %v356 = vld [vmem:[#allocation2 + $0x8] sm:$0xff]
      %v357 = vld [vmem:[#allocation2 + $0x10] sm:$0xff]
      %v358 = vld [vmem:[#allocation2 + $0x18] sm:$0xff]
      %v359 = vld [vmem:[#allocation2 + $0x20] sm:$0xff]
      %v360 = vld [vmem:[#allocation2 + $0x28] sm:$0xff]
      %v361 = vld [vmem:[#allocation2 + $0x30] sm:$0xff]
      %v362 = vld [vmem:[#allocation2 + $0x38] sm:$0xff]
      %v363 = vld [vmem:[#allocation2 + $0x40] sm:$0xff]
      %v364 = vld [vmem:[#allocation2 + $0x48] sm:$0xff]
      %v365 = vld [vmem:[#allocation2 + $0x50] sm:$0xff]
      %v366 = vld [vmem:[#allocation2 + $0x58] sm:$0xff]
      %v367 = vld [vmem:[#allocation2 + $0x60] sm:$0xff]
      %v368 = vld [vmem:[#allocation2 + $0x68] sm:$0xff]
      %v369 = vld [vmem:[#allocation2 + $0x70] sm:$0xff]
      %v370 = vld [vmem:[#allocation2 + $0x78] sm:$0xff]
      %v371 = vld [vmem:[#allocation2 + $0x80] sm:$0xff]
      %v372 = vld [vmem:[#allocation2 + $0x88] sm:$0xff]
      %v373 = vld [vmem:[#allocation2 + $0x90] sm:$0xff]
      %v374 = vld [vmem:[#allocation2 + $0x98] sm:$0xff]
      %v375 = vld [vmem:[#allocation2 + $0xa0] sm:$0xff]
      %v376 = vld [vmem:[#allocation2 + $0xa8] sm:$0xff]
      %v377 = vld [vmem:[#allocation2 + $0xb0] sm:$0xff]
      %v378 = vld [vmem:[#allocation2 + $0xb8] sm:$0xff]
      %v379 = vld [vmem:[#allocation2 + $0xc0] sm:$0xff]
      %v380 = vld [vmem:[#allocation2 + $0xc8] sm:$0xff]
      %v381 = vld [vmem:[#allocation2 + $0xd0] sm:$0xff]
      %v382 = vld [vmem:[#allocation2 + $0xd8] sm:$0xff]
      %v383 = vld [vmem:[#allocation2 + $0xe0] sm:$0xff]
      %v384 = vld [vmem:[#allocation2 + $0xe8] sm:$0xff]
      %v385 = vld [vmem:[#allocation2 + $0xf0] sm:$0xff]
      %v386 = vld [vmem:[#allocation2 + $0xf8] sm:$0xff]
      %v387 = vld [vmem:[%s1] sm:$0xf]
      %v388 = vld [vmem:[#allocation2 + $0x1] sm:$0xff]
      %v389 = vld [vmem:[#allocation2 + $0x9] sm:$0xff]
      %v390 = vld [vmem:[#allocation2 + $0x11] sm:$0xff]
      %v391 = vld [vmem:[#allocation2 + $0x19] sm:$0xff]
      %v392 = vld [vmem:[#allocation2 + $0x21] sm:$0xff]
      %v393 = vld [vmem:[#allocation2 + $0x29] sm:$0xff]
      %v394 = vld [vmem:[#allocation2 + $0x31] sm:$0xff]
      %v395 = vld [vmem:[#allocation2 + $0x39] sm:$0xff]
      %v396 = vld [vmem:[#allocation2 + $0x41] sm:$0xff]
      %v397 = vld [vmem:[#allocation2 + $0x49] sm:$0xff]
      %v398 = vld [vmem:[#allocation2 + $0x51] sm:$0xff]
      %v399 = vld [vmem:[#allocation2 + $0x59] sm:$0xff]
      %v400 = vld [vmem:[#allocation2 + $0x61] sm:$0xff]
      %v401 = vld [vmem:[#allocation2 + $0x69] sm:$0xff]
      %v402 = vld [vmem:[#allocation2 + $0x71] sm:$0xff]
      %v403 = vld [vmem:[#allocation2 + $0x79] sm:$0xff]
      %v404 = vld [vmem:[#allocation2 + $0x81] sm:$0xff]
      %v405 = vld [vmem:[#allocation2 + $0x89] sm:$0xff]
      %v406 = vld [vmem:[#allocation2 + $0x91] sm:$0xff]
      %v407 = vld [vmem:[#allocation2 + $0x99] sm:$0xff]
      %v408 = vld [vmem:[#allocation2 + $0xa1] sm:$0xff]
      %v409 = vld [vmem:[#allocation2 + $0xa9] sm:$0xff]
      %v410 = vld [vmem:[#allocation2 + $0xb1] sm:$0xff]
      %v411 = vld [vmem:[#allocation2 + $0xb9] sm:$0xff]
      %v412 = vld [vmem:[#allocation2 + $0xc1] sm:$0xff]
      %v413 = vld [vmem:[#allocation2 + $0xc9] sm:$0xff]
      %v414 = vld [vmem:[#allocation2 + $0xd1] sm:$0xff]
      %v415 = vld [vmem:[#allocation2 + $0xd9] sm:$0xff]
      %v416 = vld [vmem:[#allocation2 + $0xe1] sm:$0xff]
      %v417 = vld [vmem:[#allocation2 + $0xe9] sm:$0xff]
      %v418 = vld [vmem:[#allocation2 + $0xf1] sm:$0xff]
      %v419 = vld [vmem:[#allocation2 + $0xf9] sm:$0xff]
      %v420 = vld [vmem:[%s1 + $0x4] sm:$0xf]
      %v422 = vsel %vm282, %v388, 0
      %v425 = vsel %vm282, %v389, 0
      %v428 = vsel %vm282, %v390, 0
      %v431 = vsel %vm282, %v391, 0
      %v434 = vsel %vm282, %v392, 0
      %v437 = vsel %vm282, %v393, 0
      %v440 = vsel %vm282, %v394, 0
      %v443 = vsel %vm282, %v395, 0
      %v446 = vsel %vm282, %v396, 0
      %v449 = vsel %vm282, %v397, 0
      %v452 = vsel %vm282, %v398, 0
      %v455 = vsel %vm282, %v399, 0
      %v458 = vsel %vm282, %v400, 0
      %v461 = vsel %vm282, %v401, 0
      %v464 = vsel %vm282, %v402, 0
      %v467 = vsel %vm282, %v403, 0
      %v470 = vsel %vm282, %v404, 0
      %v473 = vsel %vm282, %v405, 0
      %v476 = vsel %vm282, %v406, 0
      %v479 = vsel %vm282, %v407, 0
      %v482 = vsel %vm282, %v408, 0
      %v485 = vsel %vm282, %v409, 0
      %v488 = vsel %vm282, %v410, 0
      %v491 = vsel %vm282, %v411, 0
      %v494 = vsel %vm282, %v412, 0
      %v497 = vsel %vm282, %v413, 0
      %v500 = vsel %vm282, %v414, 0
      %v503 = vsel %vm282, %v415, 0
      %v506 = vsel %vm282, %v416, 0
      %v509 = vsel %vm282, %v417, 0
      %v512 = vsel %vm282, %v418, 0
      %v515 = vsel %vm282, %v419, 0
      %vm517 = vcmask 1043456
      %v519 = vsel %vm517, %v420, 0
      %521 = vmatpush.msra.mxu0 0.0
      %522 = vmatpush.msra.mxu0 0.0
      %523 = vmatpush.msra.mxu0 0.0
      %524 = vmatpush.msra.mxu0 0.0
      %525 = vmatpush.msra.mxu0 0.0
      %526 = vmatpush.msra.mxu0 0.0
      %527 = vmatpush.msra.mxu0 0.0
      %528 = vmatpush.msra.mxu0 0.0
      %529 = vmatpush.msra.mxu0 0.0
      %530 = vmatpush.msra.mxu0 0.0
      %531 = vmatpush.msra.mxu0 0.0
      %532 = vmatpush.msra.mxu0 0.0
      %533 = vmatpush.msra.mxu0 0.0
      %534 = vmatpush.msra.mxu0 0.0
      %535 = vmatpush.msra.mxu0 0.0
      %536 = vmatpush.msra.mxu0 %v519
      %537 = vmatmul.f32.gmra.mxu0 %v422
      %v538 = vpop.f32.mrf.mxu0
      %v539 = vadd.f32 0.0, %v538
      %540 = vmatmul.f32.gmra.mxu0 %v425
      %v541 = vpop.f32.mrf.mxu0
      %v542 = vadd.f32 0.0, %v541
      %543 = vmatmul.f32.gmra.mxu0 %v428
      %v544 = vpop.f32.mrf.mxu0
      %v545 = vadd.f32 0.0, %v544
      %546 = vmatmul.f32.gmra.mxu0 %v431
      %v547 = vpop.f32.mrf.mxu0
      %v548 = vadd.f32 0.0, %v547
      %549 = vmatmul.f32.gmra.mxu0 %v434
      %v550 = vpop.f32.mrf.mxu0
      %v551 = vadd.f32 0.0, %v550
      %552 = vmatmul.f32.gmra.mxu0 %v437
      %v553 = vpop.f32.mrf.mxu0
      %v554 = vadd.f32 0.0, %v553
      %555 = vmatmul.f32.gmra.mxu0 %v440
      %v556 = vpop.f32.mrf.mxu0
      %v557 = vadd.f32 0.0, %v556
      %558 = vmatmul.f32.gmra.mxu0 %v443
      %v559 = vpop.f32.mrf.mxu0
      %v560 = vadd.f32 0.0, %v559
      %561 = vmatmul.f32.gmra.mxu0 %v446
      %v562 = vpop.f32.mrf.mxu0
      %v563 = vadd.f32 0.0, %v562
      %564 = vmatmul.f32.gmra.mxu0 %v449
      %v565 = vpop.f32.mrf.mxu0
      %v566 = vadd.f32 0.0, %v565
      %567 = vmatmul.f32.gmra.mxu0 %v452
      %v568 = vpop.f32.mrf.mxu0
      %v569 = vadd.f32 0.0, %v568
      %570 = vmatmul.f32.gmra.mxu0 %v455
      %v571 = vpop.f32.mrf.mxu0
      %v572 = vadd.f32 0.0, %v571
      %573 = vmatmul.f32.gmra.mxu0 %v458
      %v574 = vpop.f32.mrf.mxu0
      %v575 = vadd.f32 0.0, %v574
      %576 = vmatmul.f32.gmra.mxu0 %v461
      %v577 = vpop.f32.mrf.mxu0
      %v578 = vadd.f32 0.0, %v577
      %579 = vmatmul.f32.gmra.mxu0 %v464
      %v580 = vpop.f32.mrf.mxu0
      %v581 = vadd.f32 0.0, %v580
      %582 = vmatmul.f32.gmra.mxu0 %v467
      %v583 = vpop.f32.mrf.mxu0
      %v584 = vadd.f32 0.0, %v583
      %585 = vmatmul.f32.gmra.mxu0 %v470
      %v586 = vpop.f32.mrf.mxu0
      %v587 = vadd.f32 0.0, %v586
      %588 = vmatmul.f32.gmra.mxu0 %v473
      %v589 = vpop.f32.mrf.mxu0
      %v590 = vadd.f32 0.0, %v589
      %591 = vmatmul.f32.gmra.mxu0 %v476
      %v592 = vpop.f32.mrf.mxu0
      %v593 = vadd.f32 0.0, %v592
      %594 = vmatmul.f32.gmra.mxu0 %v479
      %v595 = vpop.f32.mrf.mxu0
      %v596 = vadd.f32 0.0, %v595
      %597 = vmatmul.f32.gmra.mxu0 %v482
      %v598 = vpop.f32.mrf.mxu0
      %v599 = vadd.f32 0.0, %v598
      %600 = vmatmul.f32.gmra.mxu0 %v485
      %v601 = vpop.f32.mrf.mxu0
      %v602 = vadd.f32 0.0, %v601
      %603 = vmatmul.f32.gmra.mxu0 %v488
      %v604 = vpop.f32.mrf.mxu0
      %v605 = vadd.f32 0.0, %v604
      %606 = vmatmul.f32.gmra.mxu0 %v491
      %v607 = vpop.f32.mrf.mxu0
      %v608 = vadd.f32 0.0, %v607
      %609 = vmatmul.f32.gmra.mxu0 %v494
      %v610 = vpop.f32.mrf.mxu0
      %v611 = vadd.f32 0.0, %v610
      %612 = vmatmul.f32.gmra.mxu0 %v497
      %v613 = vpop.f32.mrf.mxu0
      %v614 = vadd.f32 0.0, %v613
      %615 = vmatmul.f32.gmra.mxu0 %v500
      %v616 = vpop.f32.mrf.mxu0
      %v617 = vadd.f32 0.0, %v616
      %618 = vmatmul.f32.gmra.mxu0 %v503
      %v619 = vpop.f32.mrf.mxu0
      %v620 = vadd.f32 0.0, %v619
      %621 = vmatmul.f32.gmra.mxu0 %v506
      %v622 = vpop.f32.mrf.mxu0
      %v623 = vadd.f32 0.0, %v622
      %624 = vmatmul.f32.gmra.mxu0 %v509
      %v625 = vpop.f32.mrf.mxu0
      %v626 = vadd.f32 0.0, %v625
      %627 = vmatmul.f32.gmra.mxu0 %v512
      %v628 = vpop.f32.mrf.mxu0
      %v629 = vadd.f32 0.0, %v628
      %630 = vmatmul.f32.gmra.mxu0 %v515
      %v631 = vpop.f32.mrf.mxu0
      %v632 = vadd.f32 0.0, %v631
      %633 = vdwg.mxu0
      %v635 = vsel %vm282, %v355, 0
      %v638 = vsel %vm282, %v356, 0
      %v641 = vsel %vm282, %v357, 0
      %v644 = vsel %vm282, %v358, 0
      %v647 = vsel %vm282, %v359, 0
      %v650 = vsel %vm282, %v360, 0
      %v653 = vsel %vm282, %v361, 0
      %v656 = vsel %vm282, %v362, 0
      %v659 = vsel %vm282, %v363, 0
      %v662 = vsel %vm282, %v364, 0
      %v665 = vsel %vm282, %v365, 0
      %v668 = vsel %vm282, %v366, 0
      %v671 = vsel %vm282, %v367, 0
      %v674 = vsel %vm282, %v368, 0
      %v677 = vsel %vm282, %v369, 0
      %v680 = vsel %vm282, %v370, 0
      %v683 = vsel %vm282, %v371, 0
      %v686 = vsel %vm282, %v372, 0
      %v689 = vsel %vm282, %v373, 0
      %v692 = vsel %vm282, %v374, 0
      %v695 = vsel %vm282, %v375, 0
      %v698 = vsel %vm282, %v376, 0
      %v701 = vsel %vm282, %v377, 0
      %v704 = vsel %vm282, %v378, 0
      %v707 = vsel %vm282, %v379, 0
      %v710 = vsel %vm282, %v380, 0
      %v713 = vsel %vm282, %v381, 0
      %v716 = vsel %vm282, %v382, 0
      %v719 = vsel %vm282, %v383, 0
      %v722 = vsel %vm282, %v384, 0
      %v725 = vsel %vm282, %v385, 0
      %v728 = vsel %vm282, %v386, 0
      %v731 = vsel %vm517, %v387, 0
      %733 = vmatpush.msra.mxu0 0.0
      %734 = vmatpush.msra.mxu0 0.0
      %735 = vmatpush.msra.mxu0 0.0
      %736 = vmatpush.msra.mxu0 0.0
      %737 = vmatpush.msra.mxu0 0.0
      %738 = vmatpush.msra.mxu0 0.0
      %739 = vmatpush.msra.mxu0 0.0
      %740 = vmatpush.msra.mxu0 0.0
      %741 = vmatpush.msra.mxu0 0.0
      %742 = vmatpush.msra.mxu0 0.0
      %743 = vmatpush.msra.mxu0 0.0
      %744 = vmatpush.msra.mxu0 0.0
      %745 = vmatpush.msra.mxu0 0.0
      %746 = vmatpush.msra.mxu0 0.0
      %747 = vmatpush.msra.mxu0 0.0
      %748 = vmatpush.msra.mxu0 %v731
      %749 = vmatmul.f32.gmra.mxu0 %v635
      %v750 = vpop.f32.mrf.mxu0
      %v751 = vadd.f32 %v539, %v750
      %752 = vmatmul.f32.gmra.mxu0 %v638
      %v753 = vpop.f32.mrf.mxu0
      %v754 = vadd.f32 %v542, %v753
      %755 = vmatmul.f32.gmra.mxu0 %v641
      %v756 = vpop.f32.mrf.mxu0
      %v757 = vadd.f32 %v545, %v756
      %758 = vmatmul.f32.gmra.mxu0 %v644
      %v759 = vpop.f32.mrf.mxu0
      %v760 = vadd.f32 %v548, %v759
      %761 = vmatmul.f32.gmra.mxu0 %v647
      %v762 = vpop.f32.mrf.mxu0
      %v763 = vadd.f32 %v551, %v762
      %764 = vmatmul.f32.gmra.mxu0 %v650
      %v765 = vpop.f32.mrf.mxu0
      %v766 = vadd.f32 %v554, %v765
      %767 = vmatmul.f32.gmra.mxu0 %v653
      %v768 = vpop.f32.mrf.mxu0
      %v769 = vadd.f32 %v557, %v768
      %770 = vmatmul.f32.gmra.mxu0 %v656
      %v771 = vpop.f32.mrf.mxu0
      %v772 = vadd.f32 %v560, %v771
      %773 = vmatmul.f32.gmra.mxu0 %v659
      %v774 = vpop.f32.mrf.mxu0
      %v775 = vadd.f32 %v563, %v774
      %776 = vmatmul.f32.gmra.mxu0 %v662
      %v777 = vpop.f32.mrf.mxu0
      %v778 = vadd.f32 %v566, %v777
      %779 = vmatmul.f32.gmra.mxu0 %v665
      %v780 = vpop.f32.mrf.mxu0
      %v781 = vadd.f32 %v569, %v780
      %782 = vmatmul.f32.gmra.mxu0 %v668
      %v783 = vpop.f32.mrf.mxu0
      %v784 = vadd.f32 %v572, %v783
      %785 = vmatmul.f32.gmra.mxu0 %v671
      %v786 = vpop.f32.mrf.mxu0
      %v787 = vadd.f32 %v575, %v786
      %788 = vmatmul.f32.gmra.mxu0 %v674
      %v789 = vpop.f32.mrf.mxu0
      %v790 = vadd.f32 %v578, %v789
      %791 = vmatmul.f32.gmra.mxu0 %v677
      %v792 = vpop.f32.mrf.mxu0
      %v793 = vadd.f32 %v581, %v792
      %794 = vmatmul.f32.gmra.mxu0 %v680
      %v795 = vpop.f32.mrf.mxu0
      %v796 = vadd.f32 %v584, %v795
      %797 = vmatmul.f32.gmra.mxu0 %v683
      %v798 = vpop.f32.mrf.mxu0
      %v799 = vadd.f32 %v587, %v798
      %800 = vmatmul.f32.gmra.mxu0 %v686
      %v801 = vpop.f32.mrf.mxu0
      %v802 = vadd.f32 %v590, %v801
      %803 = vmatmul.f32.gmra.mxu0 %v689
      %v804 = vpop.f32.mrf.mxu0
      %v805 = vadd.f32 %v593, %v804
      %806 = vmatmul.f32.gmra.mxu0 %v692
      %v807 = vpop.f32.mrf.mxu0
      %v808 = vadd.f32 %v596, %v807
      %809 = vmatmul.f32.gmra.mxu0 %v695
      %v810 = vpop.f32.mrf.mxu0
      %v811 = vadd.f32 %v599, %v810
      %812 = vmatmul.f32.gmra.mxu0 %v698
      %v813 = vpop.f32.mrf.mxu0
      %v814 = vadd.f32 %v602, %v813
      %815 = vmatmul.f32.gmra.mxu0 %v701
      %v816 = vpop.f32.mrf.mxu0
      %v817 = vadd.f32 %v605, %v816
      %818 = vmatmul.f32.gmra.mxu0 %v704
      %v819 = vpop.f32.mrf.mxu0
      %v820 = vadd.f32 %v608, %v819
      %821 = vmatmul.f32.gmra.mxu0 %v707
      %v822 = vpop.f32.mrf.mxu0
      %v823 = vadd.f32 %v611, %v822
      %824 = vmatmul.f32.gmra.mxu0 %v710
      %v825 = vpop.f32.mrf.mxu0
      %v826 = vadd.f32 %v614, %v825
      %827 = vmatmul.f32.gmra.mxu0 %v713
      %v828 = vpop.f32.mrf.mxu0
      %v829 = vadd.f32 %v617, %v828
      %830 = vmatmul.f32.gmra.mxu0 %v716
      %v831 = vpop.f32.mrf.mxu0
      %v832 = vadd.f32 %v620, %v831
      %833 = vmatmul.f32.gmra.mxu0 %v719
      %v834 = vpop.f32.mrf.mxu0
      %v835 = vadd.f32 %v623, %v834
      %836 = vmatmul.f32.gmra.mxu0 %v722
      %v837 = vpop.f32.mrf.mxu0
      %v838 = vadd.f32 %v626, %v837
      %839 = vmatmul.f32.gmra.mxu0 %v725
      %v840 = vpop.f32.mrf.mxu0
      %v841 = vadd.f32 %v629, %v840
      %842 = vmatmul.f32.gmra.mxu0 %v728
      %v843 = vpop.f32.mrf.mxu0
      %v844 = vadd.f32 %v632, %v843
      %845 = vdwg.mxu0
      %v846 = vld [vmem:[#allocation2 + $0x2] sm:$0xff]
      %v847 = vld [vmem:[#allocation2 + $0xa] sm:$0xff]
      %v848 = vld [vmem:[#allocation2 + $0x12] sm:$0xff]
      %v849 = vld [vmem:[#allocation2 + $0x1a] sm:$0xff]
      %v850 = vld [vmem:[#allocation2 + $0x22] sm:$0xff]
      %v851 = vld [vmem:[#allocation2 + $0x2a] sm:$0xff]
      %v852 = vld [vmem:[#allocation2 + $0x32] sm:$0xff]
      %v853 = vld [vmem:[#allocation2 + $0x3a] sm:$0xff]
      %v854 = vld [vmem:[#allocation2 + $0x42] sm:$0xff]
      %v855 = vld [vmem:[#allocation2 + $0x4a] sm:$0xff]
      %v856 = vld [vmem:[#allocation2 + $0x52] sm:$0xff]
      %v857 = vld [vmem:[#allocation2 + $0x5a] sm:$0xff]
      %v858 = vld [vmem:[#allocation2 + $0x62] sm:$0xff]
      %v859 = vld [vmem:[#allocation2 + $0x6a] sm:$0xff]
      %v860 = vld [vmem:[#allocation2 + $0x72] sm:$0xff]
      %v861 = vld [vmem:[#allocation2 + $0x7a] sm:$0xff]
      %v862 = vld [vmem:[#allocation2 + $0x82] sm:$0xff]
      %v863 = vld [vmem:[#allocation2 + $0x8a] sm:$0xff]
      %v864 = vld [vmem:[#allocation2 + $0x92] sm:$0xff]
      %v865 = vld [vmem:[#allocation2 + $0x9a] sm:$0xff]
      %v866 = vld [vmem:[#allocation2 + $0xa2] sm:$0xff]
      %v867 = vld [vmem:[#allocation2 + $0xaa] sm:$0xff]
      %v868 = vld [vmem:[#allocation2 + $0xb2] sm:$0xff]
      %v869 = vld [vmem:[#allocation2 + $0xba] sm:$0xff]
      %v870 = vld [vmem:[#allocation2 + $0xc2] sm:$0xff]
      %v871 = vld [vmem:[#allocation2 + $0xca] sm:$0xff]
      %v872 = vld [vmem:[#allocation2 + $0xd2] sm:$0xff]
      %v873 = vld [vmem:[#allocation2 + $0xda] sm:$0xff]
      %v874 = vld [vmem:[#allocation2 + $0xe2] sm:$0xff]
      %v875 = vld [vmem:[#allocation2 + $0xea] sm:$0xff]
      %v876 = vld [vmem:[#allocation2 + $0xf2] sm:$0xff]
      %v877 = vld [vmem:[#allocation2 + $0xfa] sm:$0xff]
      %v878 = vld [vmem:[%s1 + $0x8] sm:$0xf]
      %v880 = vsel %vm282, %v846, 0
      %v883 = vsel %vm282, %v847, 0
      %v886 = vsel %vm282, %v848, 0
      %v889 = vsel %vm282, %v849, 0
      %v892 = vsel %vm282, %v850, 0
      %v895 = vsel %vm282, %v851, 0
      %v898 = vsel %vm282, %v852, 0
      %v901 = vsel %vm282, %v853, 0
      %v904 = vsel %vm282, %v854, 0
      %v907 = vsel %vm282, %v855, 0
      %v910 = vsel %vm282, %v856, 0
      %v913 = vsel %vm282, %v857, 0
      %v916 = vsel %vm282, %v858, 0
      %v919 = vsel %vm282, %v859, 0
      %v922 = vsel %vm282, %v860, 0
      %v925 = vsel %vm282, %v861, 0
      %v928 = vsel %vm282, %v862, 0
      %v931 = vsel %vm282, %v863, 0
      %v934 = vsel %vm282, %v864, 0
      %v937 = vsel %vm282, %v865, 0
      %v940 = vsel %vm282, %v866, 0
      %v943 = vsel %vm282, %v867, 0
      %v946 = vsel %vm282, %v868, 0
      %v949 = vsel %vm282, %v869, 0
      %v952 = vsel %vm282, %v870, 0
      %v955 = vsel %vm282, %v871, 0
      %v958 = vsel %vm282, %v872, 0
      %v961 = vsel %vm282, %v873, 0
      %v964 = vsel %vm282, %v874, 0
      %v967 = vsel %vm282, %v875, 0
      %v970 = vsel %vm282, %v876, 0
      %v973 = vsel %vm282, %v877, 0
      %v976 = vsel %vm517, %v878, 0
      %978 = vmatpush.msra.mxu0 0.0
      %979 = vmatpush.msra.mxu0 0.0
      %980 = vmatpush.msra.mxu0 0.0
      %981 = vmatpush.msra.mxu0 0.0
      %982 = vmatpush.msra.mxu0 0.0
      %983 = vmatpush.msra.mxu0 0.0
      %984 = vmatpush.msra.mxu0 0.0
      %985 = vmatpush.msra.mxu0 0.0
      %986 = vmatpush.msra.mxu0 0.0
      %987 = vmatpush.msra.mxu0 0.0
      %988 = vmatpush.msra.mxu0 0.0
      %989 = vmatpush.msra.mxu0 0.0
      %990 = vmatpush.msra.mxu0 0.0
      %991 = vmatpush.msra.mxu0 0.0
      %992 = vmatpush.msra.mxu0 0.0
      %993 = vmatpush.msra.mxu0 %v976
      %994 = vmatmul.f32.gmra.mxu0 %v880
      %v995 = vpop.f32.mrf.mxu0
      %v996 = vadd.f32 0.0, %v995
      %997 = vmatmul.f32.gmra.mxu0 %v883
      %v998 = vpop.f32.mrf.mxu0
      %v999 = vadd.f32 0.0, %v998
      %1000 = vmatmul.f32.gmra.mxu0 %v886
      %v1001 = vpop.f32.mrf.mxu0
      %v1002 = vadd.f32 0.0, %v1001
      %1003 = vmatmul.f32.gmra.mxu0 %v889
      %v1004 = vpop.f32.mrf.mxu0
      %v1005 = vadd.f32 0.0, %v1004
      %1006 = vmatmul.f32.gmra.mxu0 %v892
      %v1007 = vpop.f32.mrf.mxu0
      %v1008 = vadd.f32 0.0, %v1007
      %1009 = vmatmul.f32.gmra.mxu0 %v895
      %v1010 = vpop.f32.mrf.mxu0
      %v1011 = vadd.f32 0.0, %v1010
      %1012 = vmatmul.f32.gmra.mxu0 %v898
      %v1013 = vpop.f32.mrf.mxu0
      %v1014 = vadd.f32 0.0, %v1013
      %1015 = vmatmul.f32.gmra.mxu0 %v901
      %v1016 = vpop.f32.mrf.mxu0
      %v1017 = vadd.f32 0.0, %v1016
      %1018 = vmatmul.f32.gmra.mxu0 %v904
      %v1019 = vpop.f32.mrf.mxu0
      %v1020 = vadd.f32 0.0, %v1019
      %1021 = vmatmul.f32.gmra.mxu0 %v907
      %v1022 = vpop.f32.mrf.mxu0
      %v1023 = vadd.f32 0.0, %v1022
      %1024 = vmatmul.f32.gmra.mxu0 %v910
      %v1025 = vpop.f32.mrf.mxu0
      %v1026 = vadd.f32 0.0, %v1025
      %1027 = vmatmul.f32.gmra.mxu0 %v913
      %v1028 = vpop.f32.mrf.mxu0
      %v1029 = vadd.f32 0.0, %v1028
      %1030 = vmatmul.f32.gmra.mxu0 %v916
      %v1031 = vpop.f32.mrf.mxu0
      %v1032 = vadd.f32 0.0, %v1031
      %1033 = vmatmul.f32.gmra.mxu0 %v919
      %v1034 = vpop.f32.mrf.mxu0
      %v1035 = vadd.f32 0.0, %v1034
      %1036 = vmatmul.f32.gmra.mxu0 %v922
      %v1037 = vpop.f32.mrf.mxu0
      %v1038 = vadd.f32 0.0, %v1037
      %1039 = vmatmul.f32.gmra.mxu0 %v925
      %v1040 = vpop.f32.mrf.mxu0
      %v1041 = vadd.f32 0.0, %v1040
      %1042 = vmatmul.f32.gmra.mxu0 %v928
      %v1043 = vpop.f32.mrf.mxu0
      %v1044 = vadd.f32 0.0, %v1043
      %1045 = vmatmul.f32.gmra.mxu0 %v931
      %v1046 = vpop.f32.mrf.mxu0
      %v1047 = vadd.f32 0.0, %v1046
      %1048 = vmatmul.f32.gmra.mxu0 %v934
      %v1049 = vpop.f32.mrf.mxu0
      %v1050 = vadd.f32 0.0, %v1049
      %1051 = vmatmul.f32.gmra.mxu0 %v937
      %v1052 = vpop.f32.mrf.mxu0
      %v1053 = vadd.f32 0.0, %v1052
      %1054 = vmatmul.f32.gmra.mxu0 %v940
      %v1055 = vpop.f32.mrf.mxu0
      %v1056 = vadd.f32 0.0, %v1055
      %1057 = vmatmul.f32.gmra.mxu0 %v943
      %v1058 = vpop.f32.mrf.mxu0
      %v1059 = vadd.f32 0.0, %v1058
      %1060 = vmatmul.f32.gmra.mxu0 %v946
      %v1061 = vpop.f32.mrf.mxu0
      %v1062 = vadd.f32 0.0, %v1061
      %1063 = vmatmul.f32.gmra.mxu0 %v949
      %v1064 = vpop.f32.mrf.mxu0
      %v1065 = vadd.f32 0.0, %v1064
      %1066 = vmatmul.f32.gmra.mxu0 %v952
      %v1067 = vpop.f32.mrf.mxu0
      %v1068 = vadd.f32 0.0, %v1067
      %1069 = vmatmul.f32.gmra.mxu0 %v955
      %v1070 = vpop.f32.mrf.mxu0
      %v1071 = vadd.f32 0.0, %v1070
      %1072 = vmatmul.f32.gmra.mxu0 %v958
      %v1073 = vpop.f32.mrf.mxu0
      %v1074 = vadd.f32 0.0, %v1073
      %1075 = vmatmul.f32.gmra.mxu0 %v961
      %v1076 = vpop.f32.mrf.mxu0
      %v1077 = vadd.f32 0.0, %v1076
      %1078 = vmatmul.f32.gmra.mxu0 %v964
      %v1079 = vpop.f32.mrf.mxu0
      %v1080 = vadd.f32 0.0, %v1079
      %1081 = vmatmul.f32.gmra.mxu0 %v967
      %v1082 = vpop.f32.mrf.mxu0
      %v1083 = vadd.f32 0.0, %v1082
      %1084 = vmatmul.f32.gmra.mxu0 %v970
      %v1085 = vpop.f32.mrf.mxu0
      %v1086 = vadd.f32 0.0, %v1085
      %1087 = vmatmul.f32.gmra.mxu0 %v973
      %v1088 = vpop.f32.mrf.mxu0
      %v1089 = vadd.f32 0.0, %v1088
      %1090 = vdwg.mxu0
      %v1091 = vadd.f32 %v751, %v996
      %v1092 = vadd.f32 %v754, %v999
      %v1093 = vadd.f32 %v757, %v1002
      %v1094 = vadd.f32 %v760, %v1005
      %v1095 = vadd.f32 %v763, %v1008
      %v1096 = vadd.f32 %v766, %v1011
      %v1097 = vadd.f32 %v769, %v1014
      %v1098 = vadd.f32 %v772, %v1017
      %v1099 = vadd.f32 %v775, %v1020
      %v1100 = vadd.f32 %v778, %v1023
      %v1101 = vadd.f32 %v781, %v1026
      %v1102 = vadd.f32 %v784, %v1029
      %v1103 = vadd.f32 %v787, %v1032
      %v1104 = vadd.f32 %v790, %v1035
      %v1105 = vadd.f32 %v793, %v1038
      %v1106 = vadd.f32 %v796, %v1041
      %v1107 = vadd.f32 %v799, %v1044
      %v1108 = vadd.f32 %v802, %v1047
      %v1109 = vadd.f32 %v805, %v1050
      %v1110 = vadd.f32 %v808, %v1053
      %v1111 = vadd.f32 %v811, %v1056
      %v1112 = vadd.f32 %v814, %v1059
      %v1113 = vadd.f32 %v817, %v1062
      %v1114 = vadd.f32 %v820, %v1065
      %v1115 = vadd.f32 %v823, %v1068
      %v1116 = vadd.f32 %v826, %v1071
      %v1117 = vadd.f32 %v829, %v1074
      %v1118 = vadd.f32 %v832, %v1077
      %v1119 = vadd.f32 %v835, %v1080
      %v1120 = vadd.f32 %v838, %v1083
      %v1121 = vadd.f32 %v841, %v1086
      %v1122 = vadd.f32 %v844, %v1089
      %v1123 = vld [vmem:[#allocation2 + $0x10] sm:$0xff]
      %v1124 = vld [vmem:[#allocation2 + $0x18] sm:$0xff]
      %v1125 = vld [vmem:[#allocation2 + $0x20] sm:$0xff]
      %v1126 = vld [vmem:[#allocation2 + $0x28] sm:$0xff]
      %v1127 = vld [vmem:[#allocation2 + $0x30] sm:$0xff]
      %v1128 = vld [vmem:[#allocation2 + $0x38] sm:$0xff]
      %v1129 = vld [vmem:[#allocation2 + $0x40] sm:$0xff]
      %v1130 = vld [vmem:[#allocation2 + $0x48] sm:$0xff]
      %v1131 = vld [vmem:[#allocation2 + $0x50] sm:$0xff]
      %v1132 = vld [vmem:[#allocation2 + $0x58] sm:$0xff]
      %v1133 = vld [vmem:[#allocation2 + $0x60] sm:$0xff]
      %v1134 = vld [vmem:[#allocation2 + $0x68] sm:$0xff]
      %v1135 = vld [vmem:[#allocation2 + $0x70] sm:$0xff]
      %v1136 = vld [vmem:[#allocation2 + $0x78] sm:$0xff]
      %v1137 = vld [vmem:[#allocation2 + $0x80] sm:$0xff]
      %v1138 = vld [vmem:[#allocation2 + $0x88] sm:$0xff]
      %v1139 = vld [vmem:[#allocation2 + $0x90] sm:$0xff]
      %v1140 = vld [vmem:[#allocation2 + $0x98] sm:$0xff]
      %v1141 = vld [vmem:[#allocation2 + $0xa0] sm:$0xff]
      %v1142 = vld [vmem:[#allocation2 + $0xa8] sm:$0xff]
      %v1143 = vld [vmem:[#allocation2 + $0xb0] sm:$0xff]
      %v1144 = vld [vmem:[#allocation2 + $0xb8] sm:$0xff]
      %v1145 = vld [vmem:[#allocation2 + $0xc0] sm:$0xff]
      %v1146 = vld [vmem:[#allocation2 + $0xc8] sm:$0xff]
      %v1147 = vld [vmem:[#allocation2 + $0xd0] sm:$0xff]
      %v1148 = vld [vmem:[#allocation2 + $0xd8] sm:$0xff]
      %v1149 = vld [vmem:[#allocation2 + $0xe0] sm:$0xff]
      %v1150 = vld [vmem:[#allocation2 + $0xe8] sm:$0xff]
      %v1151 = vld [vmem:[#allocation2 + $0xf0] sm:$0xff]
      %v1152 = vld [vmem:[#allocation2 + $0xf8] sm:$0xff]
      %v1153 = vld [vmem:[#allocation2 + $0x100] sm:$0xff]
      %v1154 = vld [vmem:[#allocation2 + $0x108] sm:$0xff]
      %v1155 = vld [vmem:[%s1 + $0xc] sm:$0xf]
      %v1157 = vsel %vm282, %v1123, 0
      %v1160 = vsel %vm282, %v1124, 0
      %v1163 = vsel %vm282, %v1125, 0
      %v1166 = vsel %vm282, %v1126, 0
      %v1169 = vsel %vm282, %v1127, 0
      %v1172 = vsel %vm282, %v1128, 0
      %v1175 = vsel %vm282, %v1129, 0
      %v1178 = vsel %vm282, %v1130, 0
      %v1181 = vsel %vm282, %v1131, 0
      %v1184 = vsel %vm282, %v1132, 0
      %v1187 = vsel %vm282, %v1133, 0
      %v1190 = vsel %vm282, %v1134, 0
      %v1193 = vsel %vm282, %v1135, 0
      %v1196 = vsel %vm282, %v1136, 0
      %v1199 = vsel %vm282, %v1137, 0
      %v1202 = vsel %vm282, %v1138, 0
      %v1205 = vsel %vm282, %v1139, 0
      %v1208 = vsel %vm282, %v1140, 0
      %v1211 = vsel %vm282, %v1141, 0
      %v1214 = vsel %vm282, %v1142, 0
      %v1217 = vsel %vm282, %v1143, 0
      %v1220 = vsel %vm282, %v1144, 0
      %v1223 = vsel %vm282, %v1145, 0
      %v1226 = vsel %vm282, %v1146, 0
      %v1229 = vsel %vm282, %v1147, 0
      %v1232 = vsel %vm282, %v1148, 0
      %v1235 = vsel %vm282, %v1149, 0
      %v1238 = vsel %vm282, %v1150, 0
      %v1241 = vsel %vm282, %v1151, 0
      %v1244 = vsel %vm282, %v1152, 0
      %v1247 = vsel %vm282, %v1153, 0
      %v1250 = vsel %vm282, %v1154, 0
      %v1253 = vsel %vm517, %v1155, 0
      %1255 = vmatpush.msra.mxu0 0.0
      %1256 = vmatpush.msra.mxu0 0.0
      %1257 = vmatpush.msra.mxu0 0.0
      %1258 = vmatpush.msra.mxu0 0.0
      %1259 = vmatpush.msra.mxu0 0.0
      %1260 = vmatpush.msra.mxu0 0.0
      %1261 = vmatpush.msra.mxu0 0.0
      %1262 = vmatpush.msra.mxu0 0.0
      %1263 = vmatpush.msra.mxu0 0.0
      %1264 = vmatpush.msra.mxu0 0.0
      %1265 = vmatpush.msra.mxu0 0.0
      %1266 = vmatpush.msra.mxu0 0.0
      %1267 = vmatpush.msra.mxu0 0.0
      %1268 = vmatpush.msra.mxu0 0.0
      %1269 = vmatpush.msra.mxu0 0.0
      %1270 = vmatpush.msra.mxu0 %v1253
      %1271 = vmatmul.f32.gmra.mxu0 %v1157
      %v1272 = vpop.f32.mrf.mxu0
      %v1273 = vadd.f32 0.0, %v1272
      %1274 = vmatmul.f32.gmra.mxu0 %v1160
      %v1275 = vpop.f32.mrf.mxu0
      %v1276 = vadd.f32 0.0, %v1275
      %1277 = vmatmul.f32.gmra.mxu0 %v1163
      %v1278 = vpop.f32.mrf.mxu0
      %v1279 = vadd.f32 0.0, %v1278
      %1280 = vmatmul.f32.gmra.mxu0 %v1166
      %v1281 = vpop.f32.mrf.mxu0
      %v1282 = vadd.f32 0.0, %v1281
      %1283 = vmatmul.f32.gmra.mxu0 %v1169
      %v1284 = vpop.f32.mrf.mxu0
      %v1285 = vadd.f32 0.0, %v1284
      %1286 = vmatmul.f32.gmra.mxu0 %v1172
      %v1287 = vpop.f32.mrf.mxu0
      %v1288 = vadd.f32 0.0, %v1287
      %1289 = vmatmul.f32.gmra.mxu0 %v1175
      %v1290 = vpop.f32.mrf.mxu0
      %v1291 = vadd.f32 0.0, %v1290
      %1292 = vmatmul.f32.gmra.mxu0 %v1178
      %v1293 = vpop.f32.mrf.mxu0
      %v1294 = vadd.f32 0.0, %v1293
      %1295 = vmatmul.f32.gmra.mxu0 %v1181
      %v1296 = vpop.f32.mrf.mxu0
      %v1297 = vadd.f32 0.0, %v1296
      %1298 = vmatmul.f32.gmra.mxu0 %v1184
      %v1299 = vpop.f32.mrf.mxu0
      %v1300 = vadd.f32 0.0, %v1299
      %1301 = vmatmul.f32.gmra.mxu0 %v1187
      %v1302 = vpop.f32.mrf.mxu0
      %v1303 = vadd.f32 0.0, %v1302
      %1304 = vmatmul.f32.gmra.mxu0 %v1190
      %v1305 = vpop.f32.mrf.mxu0
      %v1306 = vadd.f32 0.0, %v1305
      %1307 = vmatmul.f32.gmra.mxu0 %v1193
      %v1308 = vpop.f32.mrf.mxu0
      %v1309 = vadd.f32 0.0, %v1308
      %1310 = vmatmul.f32.gmra.mxu0 %v1196
      %v1311 = vpop.f32.mrf.mxu0
      %v1312 = vadd.f32 0.0, %v1311
      %1313 = vmatmul.f32.gmra.mxu0 %v1199
      %v1314 = vpop.f32.mrf.mxu0
      %v1315 = vadd.f32 0.0, %v1314
      %1316 = vmatmul.f32.gmra.mxu0 %v1202
      %v1317 = vpop.f32.mrf.mxu0
      %v1318 = vadd.f32 0.0, %v1317
      %1319 = vmatmul.f32.gmra.mxu0 %v1205
      %v1320 = vpop.f32.mrf.mxu0
      %v1321 = vadd.f32 0.0, %v1320
      %1322 = vmatmul.f32.gmra.mxu0 %v1208
      %v1323 = vpop.f32.mrf.mxu0
      %v1324 = vadd.f32 0.0, %v1323
      %1325 = vmatmul.f32.gmra.mxu0 %v1211
      %v1326 = vpop.f32.mrf.mxu0
      %v1327 = vadd.f32 0.0, %v1326
      %1328 = vmatmul.f32.gmra.mxu0 %v1214
      %v1329 = vpop.f32.mrf.mxu0
      %v1330 = vadd.f32 0.0, %v1329
      %1331 = vmatmul.f32.gmra.mxu0 %v1217
      %v1332 = vpop.f32.mrf.mxu0
      %v1333 = vadd.f32 0.0, %v1332
      %1334 = vmatmul.f32.gmra.mxu0 %v1220
      %v1335 = vpop.f32.mrf.mxu0
      %v1336 = vadd.f32 0.0, %v1335
      %1337 = vmatmul.f32.gmra.mxu0 %v1223
      %v1338 = vpop.f32.mrf.mxu0
      %v1339 = vadd.f32 0.0, %v1338
      %1340 = vmatmul.f32.gmra.mxu0 %v1226
      %v1341 = vpop.f32.mrf.mxu0
      %v1342 = vadd.f32 0.0, %v1341
      %1343 = vmatmul.f32.gmra.mxu0 %v1229
      %v1344 = vpop.f32.mrf.mxu0
      %v1345 = vadd.f32 0.0, %v1344
      %1346 = vmatmul.f32.gmra.mxu0 %v1232
      %v1347 = vpop.f32.mrf.mxu0
      %v1348 = vadd.f32 0.0, %v1347
      %1349 = vmatmul.f32.gmra.mxu0 %v1235
      %v1350 = vpop.f32.mrf.mxu0
      %v1351 = vadd.f32 0.0, %v1350
      %1352 = vmatmul.f32.gmra.mxu0 %v1238
      %v1353 = vpop.f32.mrf.mxu0
      %v1354 = vadd.f32 0.0, %v1353
      %1355 = vmatmul.f32.gmra.mxu0 %v1241
      %v1356 = vpop.f32.mrf.mxu0
      %v1357 = vadd.f32 0.0, %v1356
      %1358 = vmatmul.f32.gmra.mxu0 %v1244
      %v1359 = vpop.f32.mrf.mxu0
      %v1360 = vadd.f32 0.0, %v1359
      %1361 = vmatmul.f32.gmra.mxu0 %v1247
      %v1362 = vpop.f32.mrf.mxu0
      %v1363 = vadd.f32 0.0, %v1362
      %1364 = vmatmul.f32.gmra.mxu0 %v1250
      %v1365 = vpop.f32.mrf.mxu0
      %v1366 = vadd.f32 0.0, %v1365
      %1367 = vdwg.mxu0
      %v1368 = vadd.f32 %v1091, %v1273
      %v1369 = vadd.f32 %v1092, %v1276
      %v1370 = vadd.f32 %v1093, %v1279
      %v1371 = vadd.f32 %v1094, %v1282
      %v1372 = vadd.f32 %v1095, %v1285
      %v1373 = vadd.f32 %v1096, %v1288
      %v1374 = vadd.f32 %v1097, %v1291
      %v1375 = vadd.f32 %v1098, %v1294
      %v1376 = vadd.f32 %v1099, %v1297
      %v1377 = vadd.f32 %v1100, %v1300
      %v1378 = vadd.f32 %v1101, %v1303
      %v1379 = vadd.f32 %v1102, %v1306
      %v1380 = vadd.f32 %v1103, %v1309
      %v1381 = vadd.f32 %v1104, %v1312
      %v1382 = vadd.f32 %v1105, %v1315
      %v1383 = vadd.f32 %v1106, %v1318
      %v1384 = vadd.f32 %v1107, %v1321
      %v1385 = vadd.f32 %v1108, %v1324
      %v1386 = vadd.f32 %v1109, %v1327
      %v1387 = vadd.f32 %v1110, %v1330
      %v1388 = vadd.f32 %v1111, %v1333
      %v1389 = vadd.f32 %v1112, %v1336
      %v1390 = vadd.f32 %v1113, %v1339
      %v1391 = vadd.f32 %v1114, %v1342
      %v1392 = vadd.f32 %v1115, %v1345
      %v1393 = vadd.f32 %v1116, %v1348
      %v1394 = vadd.f32 %v1117, %v1351
      %v1395 = vadd.f32 %v1118, %v1354
      %v1396 = vadd.f32 %v1119, %v1357
      %v1397 = vadd.f32 %v1120, %v1360
      %v1398 = vadd.f32 %v1121, %v1363
      %v1399 = vadd.f32 %v1122, %v1366
      %v1400 = vld [vmem:[#allocation2 + $0x11] sm:$0xff]
      %v1401 = vld [vmem:[#allocation2 + $0x19] sm:$0xff]
      %v1402 = vld [vmem:[#allocation2 + $0x21] sm:$0xff]
      %v1403 = vld [vmem:[#allocation2 + $0x29] sm:$0xff]
      %v1404 = vld [vmem:[#allocation2 + $0x31] sm:$0xff]
      %v1405 = vld [vmem:[#allocation2 + $0x39] sm:$0xff]
      %v1406 = vld [vmem:[#allocation2 + $0x41] sm:$0xff]
      %v1407 = vld [vmem:[#allocation2 + $0x49] sm:$0xff]
      %v1408 = vld [vmem:[#allocation2 + $0x51] sm:$0xff]
      %v1409 = vld [vmem:[#allocation2 + $0x59] sm:$0xff]
      %v1410 = vld [vmem:[#allocation2 + $0x61] sm:$0xff]
      %v1411 = vld [vmem:[#allocation2 + $0x69] sm:$0xff]
      %v1412 = vld [vmem:[#allocation2 + $0x71] sm:$0xff]
      %v1413 = vld [vmem:[#allocation2 + $0x79] sm:$0xff]
      %v1414 = vld [vmem:[#allocation2 + $0x81] sm:$0xff]
      %v1415 = vld [vmem:[#allocation2 + $0x89] sm:$0xff]
      %v1416 = vld [vmem:[#allocation2 + $0x91] sm:$0xff]
      %v1417 = vld [vmem:[#allocation2 + $0x99] sm:$0xff]
      %v1418 = vld [vmem:[#allocation2 + $0xa1] sm:$0xff]
      %v1419 = vld [vmem:[#allocation2 + $0xa9] sm:$0xff]
      %v1420 = vld [vmem:[#allocation2 + $0xb1] sm:$0xff]
      %v1421 = vld [vmem:[#allocation2 + $0xb9] sm:$0xff]
      %v1422 = vld [vmem:[#allocation2 + $0xc1] sm:$0xff]
      %v1423 = vld [vmem:[#allocation2 + $0xc9] sm:$0xff]
      %v1424 = vld [vmem:[#allocation2 + $0xd1] sm:$0xff]
      %v1425 = vld [vmem:[#allocation2 + $0xd9] sm:$0xff]
      %v1426 = vld [vmem:[#allocation2 + $0xe1] sm:$0xff]
      %v1427 = vld [vmem:[#allocation2 + $0xe9] sm:$0xff]
      %v1428 = vld [vmem:[#allocation2 + $0xf1] sm:$0xff]
      %v1429 = vld [vmem:[#allocation2 + $0xf9] sm:$0xff]
      %v1430 = vld [vmem:[#allocation2 + $0x101] sm:$0xff]
      %v1431 = vld [vmem:[#allocation2 + $0x109] sm:$0xff]
      %v1432 = vld [vmem:[%s1 + $0x10] sm:$0xf]
      %v1434 = vsel %vm282, %v1400, 0
      %v1437 = vsel %vm282, %v1401, 0
      %v1440 = vsel %vm282, %v1402, 0
      %v1443 = vsel %vm282, %v1403, 0
      %v1446 = vsel %vm282, %v1404, 0
      %v1449 = vsel %vm282, %v1405, 0
      %v1452 = vsel %vm282, %v1406, 0
      %v1455 = vsel %vm282, %v1407, 0
      %v1458 = vsel %vm282, %v1408, 0
      %v1461 = vsel %vm282, %v1409, 0
      %v1464 = vsel %vm282, %v1410, 0
      %v1467 = vsel %vm282, %v1411, 0
      %v1470 = vsel %vm282, %v1412, 0
      %v1473 = vsel %vm282, %v1413, 0
      %v1476 = vsel %vm282, %v1414, 0
      %v1479 = vsel %vm282, %v1415, 0
      %v1482 = vsel %vm282, %v1416, 0
      %v1485 = vsel %vm282, %v1417, 0
      %v1488 = vsel %vm282, %v1418, 0
      %v1491 = vsel %vm282, %v1419, 0
      %v1494 = vsel %vm282, %v1420, 0
      %v1497 = vsel %vm282, %v1421, 0
      %v1500 = vsel %vm282, %v1422, 0
      %v1503 = vsel %vm282, %v1423, 0
      %v1506 = vsel %vm282, %v1424, 0
      %v1509 = vsel %vm282, %v1425, 0
      %v1512 = vsel %vm282, %v1426, 0
      %v1515 = vsel %vm282, %v1427, 0
      %v1518 = vsel %vm282, %v1428, 0
      %v1521 = vsel %vm282, %v1429, 0
      %v1524 = vsel %vm282, %v1430, 0
      %v1527 = vsel %vm282, %v1431, 0
      %v1530 = vsel %vm517, %v1432, 0
      %1532 = vmatpush.msra.mxu0 0.0
      %1533 = vmatpush.msra.mxu0 0.0
      %1534 = vmatpush.msra.mxu0 0.0
      %1535 = vmatpush.msra.mxu0 0.0
      %1536 = vmatpush.msra.mxu0 0.0
      %1537 = vmatpush.msra.mxu0 0.0
      %1538 = vmatpush.msra.mxu0 0.0
      %1539 = vmatpush.msra.mxu0 0.0
      %1540 = vmatpush.msra.mxu0 0.0
      %1541 = vmatpush.msra.mxu0 0.0
      %1542 = vmatpush.msra.mxu0 0.0
      %1543 = vmatpush.msra.mxu0 0.0
      %1544 = vmatpush.msra.mxu0 0.0
      %1545 = vmatpush.msra.mxu0 0.0
      %1546 = vmatpush.msra.mxu0 0.0
      %1547 = vmatpush.msra.mxu0 %v1530
      %1548 = vmatmul.f32.gmra.mxu0 %v1434
      %v1549 = vpop.f32.mrf.mxu0
      %v1550 = vadd.f32 0.0, %v1549
      %1551 = vmatmul.f32.gmra.mxu0 %v1437
      %v1552 = vpop.f32.mrf.mxu0
      %v1553 = vadd.f32 0.0, %v1552
      %1554 = vmatmul.f32.gmra.mxu0 %v1440
      %v1555 = vpop.f32.mrf.mxu0
      %v1556 = vadd.f32 0.0, %v1555
      %1557 = vmatmul.f32.gmra.mxu0 %v1443
      %v1558 = vpop.f32.mrf.mxu0
      %v1559 = vadd.f32 0.0, %v1558
      %1560 = vmatmul.f32.gmra.mxu0 %v1446
      %v1561 = vpop.f32.mrf.mxu0
      %v1562 = vadd.f32 0.0, %v1561
      %1563 = vmatmul.f32.gmra.mxu0 %v1449
      %v1564 = vpop.f32.mrf.mxu0
      %v1565 = vadd.f32 0.0, %v1564
      %1566 = vmatmul.f32.gmra.mxu0 %v1452
      %v1567 = vpop.f32.mrf.mxu0
      %v1568 = vadd.f32 0.0, %v1567
      %1569 = vmatmul.f32.gmra.mxu0 %v1455
      %v1570 = vpop.f32.mrf.mxu0
      %v1571 = vadd.f32 0.0, %v1570
      %1572 = vmatmul.f32.gmra.mxu0 %v1458
      %v1573 = vpop.f32.mrf.mxu0
      %v1574 = vadd.f32 0.0, %v1573
      %1575 = vmatmul.f32.gmra.mxu0 %v1461
      %v1576 = vpop.f32.mrf.mxu0
      %v1577 = vadd.f32 0.0, %v1576
      %1578 = vmatmul.f32.gmra.mxu0 %v1464
      %v1579 = vpop.f32.mrf.mxu0
      %v1580 = vadd.f32 0.0, %v1579
      %1581 = vmatmul.f32.gmra.mxu0 %v1467
      %v1582 = vpop.f32.mrf.mxu0
      %v1583 = vadd.f32 0.0, %v1582
      %1584 = vmatmul.f32.gmra.mxu0 %v1470
      %v1585 = vpop.f32.mrf.mxu0
      %v1586 = vadd.f32 0.0, %v1585
      %1587 = vmatmul.f32.gmra.mxu0 %v1473
      %v1588 = vpop.f32.mrf.mxu0
      %v1589 = vadd.f32 0.0, %v1588
      %1590 = vmatmul.f32.gmra.mxu0 %v1476
      %v1591 = vpop.f32.mrf.mxu0
      %v1592 = vadd.f32 0.0, %v1591
      %1593 = vmatmul.f32.gmra.mxu0 %v1479
      %v1594 = vpop.f32.mrf.mxu0
      %v1595 = vadd.f32 0.0, %v1594
      %1596 = vmatmul.f32.gmra.mxu0 %v1482
      %v1597 = vpop.f32.mrf.mxu0
      %v1598 = vadd.f32 0.0, %v1597
      %1599 = vmatmul.f32.gmra.mxu0 %v1485
      %v1600 = vpop.f32.mrf.mxu0
      %v1601 = vadd.f32 0.0, %v1600
      %1602 = vmatmul.f32.gmra.mxu0 %v1488
      %v1603 = vpop.f32.mrf.mxu0
      %v1604 = vadd.f32 0.0, %v1603
      %1605 = vmatmul.f32.gmra.mxu0 %v1491
      %v1606 = vpop.f32.mrf.mxu0
      %v1607 = vadd.f32 0.0, %v1606
      %1608 = vmatmul.f32.gmra.mxu0 %v1494
      %v1609 = vpop.f32.mrf.mxu0
      %v1610 = vadd.f32 0.0, %v1609
      %1611 = vmatmul.f32.gmra.mxu0 %v1497
      %v1612 = vpop.f32.mrf.mxu0
      %v1613 = vadd.f32 0.0, %v1612
      %1614 = vmatmul.f32.gmra.mxu0 %v1500
      %v1615 = vpop.f32.mrf.mxu0
      %v1616 = vadd.f32 0.0, %v1615
      %1617 = vmatmul.f32.gmra.mxu0 %v1503
      %v1618 = vpop.f32.mrf.mxu0
      %v1619 = vadd.f32 0.0, %v1618
      %1620 = vmatmul.f32.gmra.mxu0 %v1506
      %v1621 = vpop.f32.mrf.mxu0
      %v1622 = vadd.f32 0.0, %v1621
      %1623 = vmatmul.f32.gmra.mxu0 %v1509
      %v1624 = vpop.f32.mrf.mxu0
      %v1625 = vadd.f32 0.0, %v1624
      %1626 = vmatmul.f32.gmra.mxu0 %v1512
      %v1627 = vpop.f32.mrf.mxu0
      %v1628 = vadd.f32 0.0, %v1627
      %1629 = vmatmul.f32.gmra.mxu0 %v1515
      %v1630 = vpop.f32.mrf.mxu0
      %v1631 = vadd.f32 0.0, %v1630
      %1632 = vmatmul.f32.gmra.mxu0 %v1518
      %v1633 = vpop.f32.mrf.mxu0
      %v1634 = vadd.f32 0.0, %v1633
      %1635 = vmatmul.f32.gmra.mxu0 %v1521
      %v1636 = vpop.f32.mrf.mxu0
      %v1637 = vadd.f32 0.0, %v1636
      %1638 = vmatmul.f32.gmra.mxu0 %v1524
      %v1639 = vpop.f32.mrf.mxu0
      %v1640 = vadd.f32 0.0, %v1639
      %1641 = vmatmul.f32.gmra.mxu0 %v1527
      %v1642 = vpop.f32.mrf.mxu0
      %v1643 = vadd.f32 0.0, %v1642
      %1644 = vdwg.mxu0
      %v1645 = vadd.f32 %v1368, %v1550
      %v1646 = vadd.f32 %v1369, %v1553
      %v1647 = vadd.f32 %v1370, %v1556
      %v1648 = vadd.f32 %v1371, %v1559
      %v1649 = vadd.f32 %v1372, %v1562
      %v1650 = vadd.f32 %v1373, %v1565
      %v1651 = vadd.f32 %v1374, %v1568
      %v1652 = vadd.f32 %v1375, %v1571
      %v1653 = vadd.f32 %v1376, %v1574
      %v1654 = vadd.f32 %v1377, %v1577
      %v1655 = vadd.f32 %v1378, %v1580
      %v1656 = vadd.f32 %v1379, %v1583
      %v1657 = vadd.f32 %v1380, %v1586
      %v1658 = vadd.f32 %v1381, %v1589
      %v1659 = vadd.f32 %v1382, %v1592
      %v1660 = vadd.f32 %v1383, %v1595
      %v1661 = vadd.f32 %v1384, %v1598
      %v1662 = vadd.f32 %v1385, %v1601
      %v1663 = vadd.f32 %v1386, %v1604
      %v1664 = vadd.f32 %v1387, %v1607
      %v1665 = vadd.f32 %v1388, %v1610
      %v1666 = vadd.f32 %v1389, %v1613
      %v1667 = vadd.f32 %v1390, %v1616
      %v1668 = vadd.f32 %v1391, %v1619
      %v1669 = vadd.f32 %v1392, %v1622
      %v1670 = vadd.f32 %v1393, %v1625
      %v1671 = vadd.f32 %v1394, %v1628
      %v1672 = vadd.f32 %v1395, %v1631
      %v1673 = vadd.f32 %v1396, %v1634
      %v1674 = vadd.f32 %v1397, %v1637
      %v1675 = vadd.f32 %v1398, %v1640
      %v1676 = vadd.f32 %v1399, %v1643
      %v1677 = vld [vmem:[#allocation2 + $0x12] sm:$0xff]
      %v1678 = vld [vmem:[#allocation2 + $0x1a] sm:$0xff]
      %v1679 = vld [vmem:[#allocation2 + $0x22] sm:$0xff]
      %v1680 = vld [vmem:[#allocation2 + $0x2a] sm:$0xff]
      %v1681 = vld [vmem:[#allocation2 + $0x32] sm:$0xff]
      %v1682 = vld [vmem:[#allocation2 + $0x3a] sm:$0xff]
      %v1683 = vld [vmem:[#allocation2 + $0x42] sm:$0xff]
      %v1684 = vld [vmem:[#allocation2 + $0x4a] sm:$0xff]
      %v1685 = vld [vmem:[#allocation2 + $0x52] sm:$0xff]
      %v1686 = vld [vmem:[#allocation2 + $0x5a] sm:$0xff]
      %v1687 = vld [vmem:[#allocation2 + $0x62] sm:$0xff]
      %v1688 = vld [vmem:[#allocation2 + $0x6a] sm:$0xff]
      %v1689 = vld [vmem:[#allocation2 + $0x72] sm:$0xff]
      %v1690 = vld [vmem:[#allocation2 + $0x7a] sm:$0xff]
      %v1691 = vld [vmem:[#allocation2 + $0x82] sm:$0xff]
      %v1692 = vld [vmem:[#allocation2 + $0x8a] sm:$0xff]
      %v1693 = vld [vmem:[#allocation2 + $0x92] sm:$0xff]
      %v1694 = vld [vmem:[#allocation2 + $0x9a] sm:$0xff]
      %v1695 = vld [vmem:[#allocation2 + $0xa2] sm:$0xff]
      %v1696 = vld [vmem:[#allocation2 + $0xaa] sm:$0xff]
      %v1697 = vld [vmem:[#allocation2 + $0xb2] sm:$0xff]
      %v1698 = vld [vmem:[#allocation2 + $0xba] sm:$0xff]
      %v1699 = vld [vmem:[#allocation2 + $0xc2] sm:$0xff]
      %v1700 = vld [vmem:[#allocation2 + $0xca] sm:$0xff]
      %v1701 = vld [vmem:[#allocation2 + $0xd2] sm:$0xff]
      %v1702 = vld [vmem:[#allocation2 + $0xda] sm:$0xff]
      %v1703 = vld [vmem:[#allocation2 + $0xe2] sm:$0xff]
      %v1704 = vld [vmem:[#allocation2 + $0xea] sm:$0xff]
      %v1705 = vld [vmem:[#allocation2 + $0xf2] sm:$0xff]
      %v1706 = vld [vmem:[#allocation2 + $0xfa] sm:$0xff]
      %v1707 = vld [vmem:[#allocation2 + $0x102] sm:$0xff]
      %v1708 = vld [vmem:[#allocation2 + $0x10a] sm:$0xff]
      %v1709 = vld [vmem:[%s1 + $0x14] sm:$0xf]
      %v1711 = vsel %vm282, %v1677, 0
      %v1714 = vsel %vm282, %v1678, 0
      %v1717 = vsel %vm282, %v1679, 0
      %v1720 = vsel %vm282, %v1680, 0
      %v1723 = vsel %vm282, %v1681, 0
      %v1726 = vsel %vm282, %v1682, 0
      %v1729 = vsel %vm282, %v1683, 0
      %v1732 = vsel %vm282, %v1684, 0
      %v1735 = vsel %vm282, %v1685, 0
      %v1738 = vsel %vm282, %v1686, 0
      %v1741 = vsel %vm282, %v1687, 0
      %v1744 = vsel %vm282, %v1688, 0
      %v1747 = vsel %vm282, %v1689, 0
      %v1750 = vsel %vm282, %v1690, 0
      %v1753 = vsel %vm282, %v1691, 0
      %v1756 = vsel %vm282, %v1692, 0
      %v1759 = vsel %vm282, %v1693, 0
      %v1762 = vsel %vm282, %v1694, 0
      %v1765 = vsel %vm282, %v1695, 0
      %v1768 = vsel %vm282, %v1696, 0
      %v1771 = vsel %vm282, %v1697, 0
      %v1774 = vsel %vm282, %v1698, 0
      %v1777 = vsel %vm282, %v1699, 0
      %v1780 = vsel %vm282, %v1700, 0
      %v1783 = vsel %vm282, %v1701, 0
      %v1786 = vsel %vm282, %v1702, 0
      %v1789 = vsel %vm282, %v1703, 0
      %v1792 = vsel %vm282, %v1704, 0
      %v1795 = vsel %vm282, %v1705, 0
      %v1798 = vsel %vm282, %v1706, 0
      %v1801 = vsel %vm282, %v1707, 0
      %v1804 = vsel %vm282, %v1708, 0
      %v1807 = vsel %vm517, %v1709, 0
      %1809 = vmatpush.msra.mxu0 0.0
      %1810 = vmatpush.msra.mxu0 0.0
      %1811 = vmatpush.msra.mxu0 0.0
      %1812 = vmatpush.msra.mxu0 0.0
      %1813 = vmatpush.msra.mxu0 0.0
      %1814 = vmatpush.msra.mxu0 0.0
      %1815 = vmatpush.msra.mxu0 0.0
      %1816 = vmatpush.msra.mxu0 0.0
      %1817 = vmatpush.msra.mxu0 0.0
      %1818 = vmatpush.msra.mxu0 0.0
      %1819 = vmatpush.msra.mxu0 0.0
      %1820 = vmatpush.msra.mxu0 0.0
      %1821 = vmatpush.msra.mxu0 0.0
      %1822 = vmatpush.msra.mxu0 0.0
      %1823 = vmatpush.msra.mxu0 0.0
      %1824 = vmatpush.msra.mxu0 %v1807
      %1825 = vmatmul.f32.gmra.mxu0 %v1711
      %v1826 = vpop.f32.mrf.mxu0
      %v1827 = vadd.f32 0.0, %v1826
      %1828 = vmatmul.f32.gmra.mxu0 %v1714
      %v1829 = vpop.f32.mrf.mxu0
      %v1830 = vadd.f32 0.0, %v1829
      %1831 = vmatmul.f32.gmra.mxu0 %v1717
      %v1832 = vpop.f32.mrf.mxu0
      %v1833 = vadd.f32 0.0, %v1832
      %1834 = vmatmul.f32.gmra.mxu0 %v1720
      %v1835 = vpop.f32.mrf.mxu0
      %v1836 = vadd.f32 0.0, %v1835
      %1837 = vmatmul.f32.gmra.mxu0 %v1723
      %v1838 = vpop.f32.mrf.mxu0
      %v1839 = vadd.f32 0.0, %v1838
      %1840 = vmatmul.f32.gmra.mxu0 %v1726
      %v1841 = vpop.f32.mrf.mxu0
      %v1842 = vadd.f32 0.0, %v1841
      %1843 = vmatmul.f32.gmra.mxu0 %v1729
      %v1844 = vpop.f32.mrf.mxu0
      %v1845 = vadd.f32 0.0, %v1844
      %1846 = vmatmul.f32.gmra.mxu0 %v1732
      %v1847 = vpop.f32.mrf.mxu0
      %v1848 = vadd.f32 0.0, %v1847
      %1849 = vmatmul.f32.gmra.mxu0 %v1735
      %v1850 = vpop.f32.mrf.mxu0
      %v1851 = vadd.f32 0.0, %v1850
      %1852 = vmatmul.f32.gmra.mxu0 %v1738
      %v1853 = vpop.f32.mrf.mxu0
      %v1854 = vadd.f32 0.0, %v1853
      %1855 = vmatmul.f32.gmra.mxu0 %v1741
      %v1856 = vpop.f32.mrf.mxu0
      %v1857 = vadd.f32 0.0, %v1856
      %1858 = vmatmul.f32.gmra.mxu0 %v1744
      %v1859 = vpop.f32.mrf.mxu0
      %v1860 = vadd.f32 0.0, %v1859
      %1861 = vmatmul.f32.gmra.mxu0 %v1747
      %v1862 = vpop.f32.mrf.mxu0
      %v1863 = vadd.f32 0.0, %v1862
      %1864 = vmatmul.f32.gmra.mxu0 %v1750
      %v1865 = vpop.f32.mrf.mxu0
      %v1866 = vadd.f32 0.0, %v1865
      %1867 = vmatmul.f32.gmra.mxu0 %v1753
      %v1868 = vpop.f32.mrf.mxu0
      %v1869 = vadd.f32 0.0, %v1868
      %1870 = vmatmul.f32.gmra.mxu0 %v1756
      %v1871 = vpop.f32.mrf.mxu0
      %v1872 = vadd.f32 0.0, %v1871
      %1873 = vmatmul.f32.gmra.mxu0 %v1759
      %v1874 = vpop.f32.mrf.mxu0
      %v1875 = vadd.f32 0.0, %v1874
      %1876 = vmatmul.f32.gmra.mxu0 %v1762
      %v1877 = vpop.f32.mrf.mxu0
      %v1878 = vadd.f32 0.0, %v1877
      %1879 = vmatmul.f32.gmra.mxu0 %v1765
      %v1880 = vpop.f32.mrf.mxu0
      %v1881 = vadd.f32 0.0, %v1880
      %1882 = vmatmul.f32.gmra.mxu0 %v1768
      %v1883 = vpop.f32.mrf.mxu0
      %v1884 = vadd.f32 0.0, %v1883
      %1885 = vmatmul.f32.gmra.mxu0 %v1771
      %v1886 = vpop.f32.mrf.mxu0
      %v1887 = vadd.f32 0.0, %v1886
      %1888 = vmatmul.f32.gmra.mxu0 %v1774
      %v1889 = vpop.f32.mrf.mxu0
      %v1890 = vadd.f32 0.0, %v1889
      %1891 = vmatmul.f32.gmra.mxu0 %v1777
      %v1892 = vpop.f32.mrf.mxu0
      %v1893 = vadd.f32 0.0, %v1892
      %1894 = vmatmul.f32.gmra.mxu0 %v1780
      %v1895 = vpop.f32.mrf.mxu0
      %v1896 = vadd.f32 0.0, %v1895
      %1897 = vmatmul.f32.gmra.mxu0 %v1783
      %v1898 = vpop.f32.mrf.mxu0
      %v1899 = vadd.f32 0.0, %v1898
      %1900 = vmatmul.f32.gmra.mxu0 %v1786
      %v1901 = vpop.f32.mrf.mxu0
      %v1902 = vadd.f32 0.0, %v1901
      %1903 = vmatmul.f32.gmra.mxu0 %v1789
      %v1904 = vpop.f32.mrf.mxu0
      %v1905 = vadd.f32 0.0, %v1904
      %1906 = vmatmul.f32.gmra.mxu0 %v1792
      %v1907 = vpop.f32.mrf.mxu0
      %v1908 = vadd.f32 0.0, %v1907
      %1909 = vmatmul.f32.gmra.mxu0 %v1795
      %v1910 = vpop.f32.mrf.mxu0
      %v1911 = vadd.f32 0.0, %v1910
      %1912 = vmatmul.f32.gmra.mxu0 %v1798
      %v1913 = vpop.f32.mrf.mxu0
      %v1914 = vadd.f32 0.0, %v1913
      %1915 = vmatmul.f32.gmra.mxu0 %v1801
      %v1916 = vpop.f32.mrf.mxu0
      %v1917 = vadd.f32 0.0, %v1916
      %1918 = vmatmul.f32.gmra.mxu0 %v1804
      %v1919 = vpop.f32.mrf.mxu0
      %v1920 = vadd.f32 0.0, %v1919
      %1921 = vdwg.mxu0
      %v1922 = vadd.f32 %v1645, %v1827
      %v1923 = vadd.f32 %v1646, %v1830
      %v1924 = vadd.f32 %v1647, %v1833
      %v1925 = vadd.f32 %v1648, %v1836
      %v1926 = vadd.f32 %v1649, %v1839
      %v1927 = vadd.f32 %v1650, %v1842
      %v1928 = vadd.f32 %v1651, %v1845
      %v1929 = vadd.f32 %v1652, %v1848
      %v1930 = vadd.f32 %v1653, %v1851
      %v1931 = vadd.f32 %v1654, %v1854
      %v1932 = vadd.f32 %v1655, %v1857
      %v1933 = vadd.f32 %v1656, %v1860
      %v1934 = vadd.f32 %v1657, %v1863
      %v1935 = vadd.f32 %v1658, %v1866
      %v1936 = vadd.f32 %v1659, %v1869
      %v1937 = vadd.f32 %v1660, %v1872
      %v1938 = vadd.f32 %v1661, %v1875
      %v1939 = vadd.f32 %v1662, %v1878
      %v1940 = vadd.f32 %v1663, %v1881
      %v1941 = vadd.f32 %v1664, %v1884
      %v1942 = vadd.f32 %v1665, %v1887
      %v1943 = vadd.f32 %v1666, %v1890
      %v1944 = vadd.f32 %v1667, %v1893
      %v1945 = vadd.f32 %v1668, %v1896
      %v1946 = vadd.f32 %v1669, %v1899
      %v1947 = vadd.f32 %v1670, %v1902
      %v1948 = vadd.f32 %v1671, %v1905
      %v1949 = vadd.f32 %v1672, %v1908
      %v1950 = vadd.f32 %v1673, %v1911
      %v1951 = vadd.f32 %v1674, %v1914
      %v1952 = vadd.f32 %v1675, %v1917
      %v1953 = vadd.f32 %v1676, %v1920
      %v1954 = vld [vmem:[#allocation2 + $0x20] sm:$0xff]
      %v1955 = vld [vmem:[#allocation2 + $0x28] sm:$0xff]
      %v1956 = vld [vmem:[#allocation2 + $0x30] sm:$0xff]
      %v1957 = vld [vmem:[#allocation2 + $0x38] sm:$0xff]
      %v1958 = vld [vmem:[#allocation2 + $0x40] sm:$0xff]
      %v1959 = vld [vmem:[#allocation2 + $0x48] sm:$0xff]
      %v1960 = vld [vmem:[#allocation2 + $0x50] sm:$0xff]
      %v1961 = vld [vmem:[#allocation2 + $0x58] sm:$0xff]
      %v1962 = vld [vmem:[#allocation2 + $0x60] sm:$0xff]
      %v1963 = vld [vmem:[#allocation2 + $0x68] sm:$0xff]
      %v1964 = vld [vmem:[#allocation2 + $0x70] sm:$0xff]
      %v1965 = vld [vmem:[#allocation2 + $0x78] sm:$0xff]
      %v1966 = vld [vmem:[#allocation2 + $0x80] sm:$0xff]
      %v1967 = vld [vmem:[#allocation2 + $0x88] sm:$0xff]
      %v1968 = vld [vmem:[#allocation2 + $0x90] sm:$0xff]
      %v1969 = vld [vmem:[#allocation2 + $0x98] sm:$0xff]
      %v1970 = vld [vmem:[#allocation2 + $0xa0] sm:$0xff]
      %v1971 = vld [vmem:[#allocation2 + $0xa8] sm:$0xff]
      %v1972 = vld [vmem:[#allocation2 + $0xb0] sm:$0xff]
      %v1973 = vld [vmem:[#allocation2 + $0xb8] sm:$0xff]
      %v1974 = vld [vmem:[#allocation2 + $0xc0] sm:$0xff]
      %v1975 = vld [vmem:[#allocation2 + $0xc8] sm:$0xff]
      %v1976 = vld [vmem:[#allocation2 + $0xd0] sm:$0xff]
      %v1977 = vld [vmem:[#allocation2 + $0xd8] sm:$0xff]
      %v1978 = vld [vmem:[#allocation2 + $0xe0] sm:$0xff]
      %v1979 = vld [vmem:[#allocation2 + $0xe8] sm:$0xff]
      %v1980 = vld [vmem:[#allocation2 + $0xf0] sm:$0xff]
      %v1981 = vld [vmem:[#allocation2 + $0xf8] sm:$0xff]
      %v1982 = vld [vmem:[#allocation2 + $0x100] sm:$0xff]
      %v1983 = vld [vmem:[#allocation2 + $0x108] sm:$0xff]
      %v1984 = vld [vmem:[#allocation2 + $0x110] sm:$0xff]
      %v1985 = vld [vmem:[#allocation2 + $0x118] sm:$0xff]
      %v1986 = vld [vmem:[%s1 + $0x18] sm:$0xf]
      %v1988 = vsel %vm282, %v1954, 0
      %v1991 = vsel %vm282, %v1955, 0
      %v1994 = vsel %vm282, %v1956, 0
      %v1997 = vsel %vm282, %v1957, 0
      %v2000 = vsel %vm282, %v1958, 0
      %v2003 = vsel %vm282, %v1959, 0
      %v2006 = vsel %vm282, %v1960, 0
      %v2009 = vsel %vm282, %v1961, 0
      %v2012 = vsel %vm282, %v1962, 0
      %v2015 = vsel %vm282, %v1963, 0
      %v2018 = vsel %vm282, %v1964, 0
      %v2021 = vsel %vm282, %v1965, 0
      %v2024 = vsel %vm282, %v1966, 0
      %v2027 = vsel %vm282, %v1967, 0
      %v2030 = vsel %vm282, %v1968, 0
      %v2033 = vsel %vm282, %v1969, 0
      %v2036 = vsel %vm282, %v1970, 0
      %v2039 = vsel %vm282, %v1971, 0
      %v2042 = vsel %vm282, %v1972, 0
      %v2045 = vsel %vm282, %v1973, 0
      %v2048 = vsel %vm282, %v1974, 0
      %v2051 = vsel %vm282, %v1975, 0
      %v2054 = vsel %vm282, %v1976, 0
      %v2057 = vsel %vm282, %v1977, 0
      %v2060 = vsel %vm282, %v1978, 0
      %v2063 = vsel %vm282, %v1979, 0
      %v2066 = vsel %vm282, %v1980, 0
      %v2069 = vsel %vm282, %v1981, 0
      %v2072 = vsel %vm282, %v1982, 0
      %v2075 = vsel %vm282, %v1983, 0
      %v2078 = vsel %vm282, %v1984, 0
      %v2081 = vsel %vm282, %v1985, 0
      %v2084 = vsel %vm517, %v1986, 0
      %2086 = vmatpush.msra.mxu0 0.0
      %2087 = vmatpush.msra.mxu0 0.0
      %2088 = vmatpush.msra.mxu0 0.0
      %2089 = vmatpush.msra.mxu0 0.0
      %2090 = vmatpush.msra.mxu0 0.0
      %2091 = vmatpush.msra.mxu0 0.0
      %2092 = vmatpush.msra.mxu0 0.0
      %2093 = vmatpush.msra.mxu0 0.0
      %2094 = vmatpush.msra.mxu0 0.0
      %2095 = vmatpush.msra.mxu0 0.0
      %2096 = vmatpush.msra.mxu0 0.0
      %2097 = vmatpush.msra.mxu0 0.0
      %2098 = vmatpush.msra.mxu0 0.0
      %2099 = vmatpush.msra.mxu0 0.0
      %2100 = vmatpush.msra.mxu0 0.0
      %2101 = vmatpush.msra.mxu0 %v2084
      %2102 = vmatmul.f32.gmra.mxu0 %v1988
      %v2103 = vpop.f32.mrf.mxu0
      %v2104 = vadd.f32 0.0, %v2103
      %2105 = vmatmul.f32.gmra.mxu0 %v1991
      %v2106 = vpop.f32.mrf.mxu0
      %v2107 = vadd.f32 0.0, %v2106
      %2108 = vmatmul.f32.gmra.mxu0 %v1994
      %v2109 = vpop.f32.mrf.mxu0
      %v2110 = vadd.f32 0.0, %v2109
      %2111 = vmatmul.f32.gmra.mxu0 %v1997
      %v2112 = vpop.f32.mrf.mxu0
      %v2113 = vadd.f32 0.0, %v2112
      %2114 = vmatmul.f32.gmra.mxu0 %v2000
      %v2115 = vpop.f32.mrf.mxu0
      %v2116 = vadd.f32 0.0, %v2115
      %2117 = vmatmul.f32.gmra.mxu0 %v2003
      %v2118 = vpop.f32.mrf.mxu0
      %v2119 = vadd.f32 0.0, %v2118
      %2120 = vmatmul.f32.gmra.mxu0 %v2006
      %v2121 = vpop.f32.mrf.mxu0
      %v2122 = vadd.f32 0.0, %v2121
      %2123 = vmatmul.f32.gmra.mxu0 %v2009
      %v2124 = vpop.f32.mrf.mxu0
      %v2125 = vadd.f32 0.0, %v2124
      %2126 = vmatmul.f32.gmra.mxu0 %v2012
      %v2127 = vpop.f32.mrf.mxu0
      %v2128 = vadd.f32 0.0, %v2127
      %2129 = vmatmul.f32.gmra.mxu0 %v2015
      %v2130 = vpop.f32.mrf.mxu0
      %v2131 = vadd.f32 0.0, %v2130
      %2132 = vmatmul.f32.gmra.mxu0 %v2018
      %v2133 = vpop.f32.mrf.mxu0
      %v2134 = vadd.f32 0.0, %v2133
      %2135 = vmatmul.f32.gmra.mxu0 %v2021
      %v2136 = vpop.f32.mrf.mxu0
      %v2137 = vadd.f32 0.0, %v2136
      %2138 = vmatmul.f32.gmra.mxu0 %v2024
      %v2139 = vpop.f32.mrf.mxu0
      %v2140 = vadd.f32 0.0, %v2139
      %2141 = vmatmul.f32.gmra.mxu0 %v2027
      %v2142 = vpop.f32.mrf.mxu0
      %v2143 = vadd.f32 0.0, %v2142
      %2144 = vmatmul.f32.gmra.mxu0 %v2030
      %v2145 = vpop.f32.mrf.mxu0
      %v2146 = vadd.f32 0.0, %v2145
      %2147 = vmatmul.f32.gmra.mxu0 %v2033
      %v2148 = vpop.f32.mrf.mxu0
      %v2149 = vadd.f32 0.0, %v2148
      %2150 = vmatmul.f32.gmra.mxu0 %v2036
      %v2151 = vpop.f32.mrf.mxu0
      %v2152 = vadd.f32 0.0, %v2151
      %2153 = vmatmul.f32.gmra.mxu0 %v2039
      %v2154 = vpop.f32.mrf.mxu0
      %v2155 = vadd.f32 0.0, %v2154
      %2156 = vmatmul.f32.gmra.mxu0 %v2042
      %v2157 = vpop.f32.mrf.mxu0
      %v2158 = vadd.f32 0.0, %v2157
      %2159 = vmatmul.f32.gmra.mxu0 %v2045
      %v2160 = vpop.f32.mrf.mxu0
      %v2161 = vadd.f32 0.0, %v2160
      %2162 = vmatmul.f32.gmra.mxu0 %v2048
      %v2163 = vpop.f32.mrf.mxu0
      %v2164 = vadd.f32 0.0, %v2163
      %2165 = vmatmul.f32.gmra.mxu0 %v2051
      %v2166 = vpop.f32.mrf.mxu0
      %v2167 = vadd.f32 0.0, %v2166
      %2168 = vmatmul.f32.gmra.mxu0 %v2054
      %v2169 = vpop.f32.mrf.mxu0
      %v2170 = vadd.f32 0.0, %v2169
      %2171 = vmatmul.f32.gmra.mxu0 %v2057
      %v2172 = vpop.f32.mrf.mxu0
      %v2173 = vadd.f32 0.0, %v2172
      %2174 = vmatmul.f32.gmra.mxu0 %v2060
      %v2175 = vpop.f32.mrf.mxu0
      %v2176 = vadd.f32 0.0, %v2175
      %2177 = vmatmul.f32.gmra.mxu0 %v2063
      %v2178 = vpop.f32.mrf.mxu0
      %v2179 = vadd.f32 0.0, %v2178
      %2180 = vmatmul.f32.gmra.mxu0 %v2066
      %v2181 = vpop.f32.mrf.mxu0
      %v2182 = vadd.f32 0.0, %v2181
      %2183 = vmatmul.f32.gmra.mxu0 %v2069
      %v2184 = vpop.f32.mrf.mxu0
      %v2185 = vadd.f32 0.0, %v2184
      %2186 = vmatmul.f32.gmra.mxu0 %v2072
      %v2187 = vpop.f32.mrf.mxu0
      %v2188 = vadd.f32 0.0, %v2187
      %2189 = vmatmul.f32.gmra.mxu0 %v2075
      %v2190 = vpop.f32.mrf.mxu0
      %v2191 = vadd.f32 0.0, %v2190
      %2192 = vmatmul.f32.gmra.mxu0 %v2078
      %v2193 = vpop.f32.mrf.mxu0
      %v2194 = vadd.f32 0.0, %v2193
      %2195 = vmatmul.f32.gmra.mxu0 %v2081
      %v2196 = vpop.f32.mrf.mxu0
      %v2197 = vadd.f32 0.0, %v2196
      %2198 = vdwg.mxu0
      %v2199 = vadd.f32 %v1922, %v2104
      %v2200 = vadd.f32 %v1923, %v2107
      %v2201 = vadd.f32 %v1924, %v2110
      %v2202 = vadd.f32 %v1925, %v2113
      %v2203 = vadd.f32 %v1926, %v2116
      %v2204 = vadd.f32 %v1927, %v2119
      %v2205 = vadd.f32 %v1928, %v2122
      %v2206 = vadd.f32 %v1929, %v2125
      %v2207 = vadd.f32 %v1930, %v2128
      %v2208 = vadd.f32 %v1931, %v2131
      %v2209 = vadd.f32 %v1932, %v2134
      %v2210 = vadd.f32 %v1933, %v2137
      %v2211 = vadd.f32 %v1934, %v2140
      %v2212 = vadd.f32 %v1935, %v2143
      %v2213 = vadd.f32 %v1936, %v2146
      %v2214 = vadd.f32 %v1937, %v2149
      %v2215 = vadd.f32 %v1938, %v2152
      %v2216 = vadd.f32 %v1939, %v2155
      %v2217 = vadd.f32 %v1940, %v2158
      %v2218 = vadd.f32 %v1941, %v2161
      %v2219 = vadd.f32 %v1942, %v2164
      %v2220 = vadd.f32 %v1943, %v2167
      %v2221 = vadd.f32 %v1944, %v2170
      %v2222 = vadd.f32 %v1945, %v2173
      %v2223 = vadd.f32 %v1946, %v2176
      %v2224 = vadd.f32 %v1947, %v2179
      %v2225 = vadd.f32 %v1948, %v2182
      %v2226 = vadd.f32 %v1949, %v2185
      %v2227 = vadd.f32 %v1950, %v2188
      %v2228 = vadd.f32 %v1951, %v2191
      %v2229 = vadd.f32 %v1952, %v2194
      %v2230 = vadd.f32 %v1953, %v2197
      %v2231 = vld [vmem:[#allocation2 + $0x21] sm:$0xff]
      %v2232 = vld [vmem:[#allocation2 + $0x29] sm:$0xff]
      %v2233 = vld [vmem:[#allocation2 + $0x31] sm:$0xff]
      %v2234 = vld [vmem:[#allocation2 + $0x39] sm:$0xff]
      %v2235 = vld [vmem:[#allocation2 + $0x41] sm:$0xff]
      %v2236 = vld [vmem:[#allocation2 + $0x49] sm:$0xff]
      %v2237 = vld [vmem:[#allocation2 + $0x51] sm:$0xff]
      %v2238 = vld [vmem:[#allocation2 + $0x59] sm:$0xff]
      %v2239 = vld [vmem:[#allocation2 + $0x61] sm:$0xff]
      %v2240 = vld [vmem:[#allocation2 + $0x69] sm:$0xff]
      %v2241 = vld [vmem:[#allocation2 + $0x71] sm:$0xff]
      %v2242 = vld [vmem:[#allocation2 + $0x79] sm:$0xff]
      %v2243 = vld [vmem:[#allocation2 + $0x81] sm:$0xff]
      %v2244 = vld [vmem:[#allocation2 + $0x89] sm:$0xff]
      %v2245 = vld [vmem:[#allocation2 + $0x91] sm:$0xff]
      %v2246 = vld [vmem:[#allocation2 + $0x99] sm:$0xff]
      %v2247 = vld [vmem:[#allocation2 + $0xa1] sm:$0xff]
      %v2248 = vld [vmem:[#allocation2 + $0xa9] sm:$0xff]
      %v2249 = vld [vmem:[#allocation2 + $0xb1] sm:$0xff]
      %v2250 = vld [vmem:[#allocation2 + $0xb9] sm:$0xff]
      %v2251 = vld [vmem:[#allocation2 + $0xc1] sm:$0xff]
      %v2252 = vld [vmem:[#allocation2 + $0xc9] sm:$0xff]
      %v2253 = vld [vmem:[#allocation2 + $0xd1] sm:$0xff]
      %v2254 = vld [vmem:[#allocation2 + $0xd9] sm:$0xff]
      %v2255 = vld [vmem:[#allocation2 + $0xe1] sm:$0xff]
      %v2256 = vld [vmem:[#allocation2 + $0xe9] sm:$0xff]
      %v2257 = vld [vmem:[#allocation2 + $0xf1] sm:$0xff]
      %v2258 = vld [vmem:[#allocation2 + $0xf9] sm:$0xff]
      %v2259 = vld [vmem:[#allocation2 + $0x101] sm:$0xff]
      %v2260 = vld [vmem:[#allocation2 + $0x109] sm:$0xff]
      %v2261 = vld [vmem:[#allocation2 + $0x111] sm:$0xff]
      %v2262 = vld [vmem:[#allocation2 + $0x119] sm:$0xff]
      %v2263 = vld [vmem:[%s1 + $0x1c] sm:$0xf]
      %v2265 = vsel %vm282, %v2231, 0
      %v2268 = vsel %vm282, %v2232, 0
      %v2271 = vsel %vm282, %v2233, 0
      %v2274 = vsel %vm282, %v2234, 0
      %v2277 = vsel %vm282, %v2235, 0
      %v2280 = vsel %vm282, %v2236, 0
      %v2283 = vsel %vm282, %v2237, 0
      %v2286 = vsel %vm282, %v2238, 0
      %v2289 = vsel %vm282, %v2239, 0
      %v2292 = vsel %vm282, %v2240, 0
      %v2295 = vsel %vm282, %v2241, 0
      %v2298 = vsel %vm282, %v2242, 0
      %v2301 = vsel %vm282, %v2243, 0
      %v2304 = vsel %vm282, %v2244, 0
      %v2307 = vsel %vm282, %v2245, 0
      %v2310 = vsel %vm282, %v2246, 0
      %v2313 = vsel %vm282, %v2247, 0
      %v2316 = vsel %vm282, %v2248, 0
      %v2319 = vsel %vm282, %v2249, 0
      %v2322 = vsel %vm282, %v2250, 0
      %v2325 = vsel %vm282, %v2251, 0
      %v2328 = vsel %vm282, %v2252, 0
      %v2331 = vsel %vm282, %v2253, 0
      %v2334 = vsel %vm282, %v2254, 0
      %v2337 = vsel %vm282, %v2255, 0
      %v2340 = vsel %vm282, %v2256, 0
      %v2343 = vsel %vm282, %v2257, 0
      %v2346 = vsel %vm282, %v2258, 0
      %v2349 = vsel %vm282, %v2259, 0
      %v2352 = vsel %vm282, %v2260, 0
      %v2355 = vsel %vm282, %v2261, 0
      %v2358 = vsel %vm282, %v2262, 0
      %v2361 = vsel %vm517, %v2263, 0
      %2363 = vmatpush.msra.mxu0 0.0
      %2364 = vmatpush.msra.mxu0 0.0
      %2365 = vmatpush.msra.mxu0 0.0
      %2366 = vmatpush.msra.mxu0 0.0
      %2367 = vmatpush.msra.mxu0 0.0
      %2368 = vmatpush.msra.mxu0 0.0
      %2369 = vmatpush.msra.mxu0 0.0
      %2370 = vmatpush.msra.mxu0 0.0
      %2371 = vmatpush.msra.mxu0 0.0
      %2372 = vmatpush.msra.mxu0 0.0
      %2373 = vmatpush.msra.mxu0 0.0
      %2374 = vmatpush.msra.mxu0 0.0
      %2375 = vmatpush.msra.mxu0 0.0
      %2376 = vmatpush.msra.mxu0 0.0
      %2377 = vmatpush.msra.mxu0 0.0
      %2378 = vmatpush.msra.mxu0 %v2361
      %2379 = vmatmul.f32.gmra.mxu0 %v2265
      %v2380 = vpop.f32.mrf.mxu0
      %v2381 = vadd.f32 0.0, %v2380
      %2382 = vmatmul.f32.gmra.mxu0 %v2268
      %v2383 = vpop.f32.mrf.mxu0
      %v2384 = vadd.f32 0.0, %v2383
      %2385 = vmatmul.f32.gmra.mxu0 %v2271
      %v2386 = vpop.f32.mrf.mxu0
      %v2387 = vadd.f32 0.0, %v2386
      %2388 = vmatmul.f32.gmra.mxu0 %v2274
      %v2389 = vpop.f32.mrf.mxu0
      %v2390 = vadd.f32 0.0, %v2389
      %2391 = vmatmul.f32.gmra.mxu0 %v2277
      %v2392 = vpop.f32.mrf.mxu0
      %v2393 = vadd.f32 0.0, %v2392
      %2394 = vmatmul.f32.gmra.mxu0 %v2280
      %v2395 = vpop.f32.mrf.mxu0
      %v2396 = vadd.f32 0.0, %v2395
      %2397 = vmatmul.f32.gmra.mxu0 %v2283
      %v2398 = vpop.f32.mrf.mxu0
      %v2399 = vadd.f32 0.0, %v2398
      %2400 = vmatmul.f32.gmra.mxu0 %v2286
      %v2401 = vpop.f32.mrf.mxu0
      %v2402 = vadd.f32 0.0, %v2401
      %2403 = vmatmul.f32.gmra.mxu0 %v2289
      %v2404 = vpop.f32.mrf.mxu0
      %v2405 = vadd.f32 0.0, %v2404
      %2406 = vmatmul.f32.gmra.mxu0 %v2292
      %v2407 = vpop.f32.mrf.mxu0
      %v2408 = vadd.f32 0.0, %v2407
      %2409 = vmatmul.f32.gmra.mxu0 %v2295
      %v2410 = vpop.f32.mrf.mxu0
      %v2411 = vadd.f32 0.0, %v2410
      %2412 = vmatmul.f32.gmra.mxu0 %v2298
      %v2413 = vpop.f32.mrf.mxu0
      %v2414 = vadd.f32 0.0, %v2413
      %2415 = vmatmul.f32.gmra.mxu0 %v2301
      %v2416 = vpop.f32.mrf.mxu0
      %v2417 = vadd.f32 0.0, %v2416
      %2418 = vmatmul.f32.gmra.mxu0 %v2304
      %v2419 = vpop.f32.mrf.mxu0
      %v2420 = vadd.f32 0.0, %v2419
      %2421 = vmatmul.f32.gmra.mxu0 %v2307
      %v2422 = vpop.f32.mrf.mxu0
      %v2423 = vadd.f32 0.0, %v2422
      %2424 = vmatmul.f32.gmra.mxu0 %v2310
      %v2425 = vpop.f32.mrf.mxu0
      %v2426 = vadd.f32 0.0, %v2425
      %2427 = vmatmul.f32.gmra.mxu0 %v2313
      %v2428 = vpop.f32.mrf.mxu0
      %v2429 = vadd.f32 0.0, %v2428
      %2430 = vmatmul.f32.gmra.mxu0 %v2316
      %v2431 = vpop.f32.mrf.mxu0
      %v2432 = vadd.f32 0.0, %v2431
      %2433 = vmatmul.f32.gmra.mxu0 %v2319
      %v2434 = vpop.f32.mrf.mxu0
      %v2435 = vadd.f32 0.0, %v2434
      %2436 = vmatmul.f32.gmra.mxu0 %v2322
      %v2437 = vpop.f32.mrf.mxu0
      %v2438 = vadd.f32 0.0, %v2437
      %2439 = vmatmul.f32.gmra.mxu0 %v2325
      %v2440 = vpop.f32.mrf.mxu0
      %v2441 = vadd.f32 0.0, %v2440
      %2442 = vmatmul.f32.gmra.mxu0 %v2328
      %v2443 = vpop.f32.mrf.mxu0
      %v2444 = vadd.f32 0.0, %v2443
      %2445 = vmatmul.f32.gmra.mxu0 %v2331
      %v2446 = vpop.f32.mrf.mxu0
      %v2447 = vadd.f32 0.0, %v2446
      %2448 = vmatmul.f32.gmra.mxu0 %v2334
      %v2449 = vpop.f32.mrf.mxu0
      %v2450 = vadd.f32 0.0, %v2449
      %2451 = vmatmul.f32.gmra.mxu0 %v2337
      %v2452 = vpop.f32.mrf.mxu0
      %v2453 = vadd.f32 0.0, %v2452
      %2454 = vmatmul.f32.gmra.mxu0 %v2340
      %v2455 = vpop.f32.mrf.mxu0
      %v2456 = vadd.f32 0.0, %v2455
      %2457 = vmatmul.f32.gmra.mxu0 %v2343
      %v2458 = vpop.f32.mrf.mxu0
      %v2459 = vadd.f32 0.0, %v2458
      %2460 = vmatmul.f32.gmra.mxu0 %v2346
      %v2461 = vpop.f32.mrf.mxu0
      %v2462 = vadd.f32 0.0, %v2461
      %2463 = vmatmul.f32.gmra.mxu0 %v2349
      %v2464 = vpop.f32.mrf.mxu0
      %v2465 = vadd.f32 0.0, %v2464
      %2466 = vmatmul.f32.gmra.mxu0 %v2352
      %v2467 = vpop.f32.mrf.mxu0
      %v2468 = vadd.f32 0.0, %v2467
      %2469 = vmatmul.f32.gmra.mxu0 %v2355
      %v2470 = vpop.f32.mrf.mxu0
      %v2471 = vadd.f32 0.0, %v2470
      %2472 = vmatmul.f32.gmra.mxu0 %v2358
      %v2473 = vpop.f32.mrf.mxu0
      %v2474 = vadd.f32 0.0, %v2473
      %2475 = vdwg.mxu0
      %v2476 = vadd.f32 %v2199, %v2381
      %v2477 = vadd.f32 %v2200, %v2384
      %v2478 = vadd.f32 %v2201, %v2387
      %v2479 = vadd.f32 %v2202, %v2390
      %v2480 = vadd.f32 %v2203, %v2393
      %v2481 = vadd.f32 %v2204, %v2396
      %v2482 = vadd.f32 %v2205, %v2399
      %v2483 = vadd.f32 %v2206, %v2402
      %v2484 = vadd.f32 %v2207, %v2405
      %v2485 = vadd.f32 %v2208, %v2408
      %v2486 = vadd.f32 %v2209, %v2411
      %v2487 = vadd.f32 %v2210, %v2414
      %v2488 = vadd.f32 %v2211, %v2417
      %v2489 = vadd.f32 %v2212, %v2420
      %v2490 = vadd.f32 %v2213, %v2423
      %v2491 = vadd.f32 %v2214, %v2426
      %v2492 = vadd.f32 %v2215, %v2429
      %v2493 = vadd.f32 %v2216, %v2432
      %v2494 = vadd.f32 %v2217, %v2435
      %v2495 = vadd.f32 %v2218, %v2438
      %v2496 = vadd.f32 %v2219, %v2441
      %v2497 = vadd.f32 %v2220, %v2444
      %v2498 = vadd.f32 %v2221, %v2447
      %v2499 = vadd.f32 %v2222, %v2450
      %v2500 = vadd.f32 %v2223, %v2453
      %v2501 = vadd.f32 %v2224, %v2456
      %v2502 = vadd.f32 %v2225, %v2459
      %v2503 = vadd.f32 %v2226, %v2462
      %v2504 = vadd.f32 %v2227, %v2465
      %v2505 = vadd.f32 %v2228, %v2468
      %v2506 = vadd.f32 %v2229, %v2471
      %v2507 = vadd.f32 %v2230, %v2474
      %v2508 = vld [vmem:[#allocation2 + $0x22] sm:$0xff]
      %v2509 = vld [vmem:[#allocation2 + $0x2a] sm:$0xff]
      %v2510 = vld [vmem:[#allocation2 + $0x32] sm:$0xff]
      %v2511 = vld [vmem:[#allocation2 + $0x3a] sm:$0xff]
      %v2512 = vld [vmem:[#allocation2 + $0x42] sm:$0xff]
      %v2513 = vld [vmem:[#allocation2 + $0x4a] sm:$0xff]
      %v2514 = vld [vmem:[#allocation2 + $0x52] sm:$0xff]
      %v2515 = vld [vmem:[#allocation2 + $0x5a] sm:$0xff]
      %v2516 = vld [vmem:[#allocation2 + $0x62] sm:$0xff]
      %v2517 = vld [vmem:[#allocation2 + $0x6a] sm:$0xff]
      %v2518 = vld [vmem:[#allocation2 + $0x72] sm:$0xff]
      %v2519 = vld [vmem:[#allocation2 + $0x7a] sm:$0xff]
      %v2520 = vld [vmem:[#allocation2 + $0x82] sm:$0xff]
      %v2521 = vld [vmem:[#allocation2 + $0x8a] sm:$0xff]
      %v2522 = vld [vmem:[#allocation2 + $0x92] sm:$0xff]
      %v2523 = vld [vmem:[#allocation2 + $0x9a] sm:$0xff]
      %v2524 = vld [vmem:[#allocation2 + $0xa2] sm:$0xff]
      %v2525 = vld [vmem:[#allocation2 + $0xaa] sm:$0xff]
      %v2526 = vld [vmem:[#allocation2 + $0xb2] sm:$0xff]
      %v2527 = vld [vmem:[#allocation2 + $0xba] sm:$0xff]
      %v2528 = vld [vmem:[#allocation2 + $0xc2] sm:$0xff]
      %v2529 = vld [vmem:[#allocation2 + $0xca] sm:$0xff]
      %v2530 = vld [vmem:[#allocation2 + $0xd2] sm:$0xff]
      %v2531 = vld [vmem:[#allocation2 + $0xda] sm:$0xff]
      %v2532 = vld [vmem:[#allocation2 + $0xe2] sm:$0xff]
      %v2533 = vld [vmem:[#allocation2 + $0xea] sm:$0xff]
      %v2534 = vld [vmem:[#allocation2 + $0xf2] sm:$0xff]
      %v2535 = vld [vmem:[#allocation2 + $0xfa] sm:$0xff]
      %v2536 = vld [vmem:[#allocation2 + $0x102] sm:$0xff]
      %v2537 = vld [vmem:[#allocation2 + $0x10a] sm:$0xff]
      %v2538 = vld [vmem:[#allocation2 + $0x112] sm:$0xff]
      %v2539 = vld [vmem:[#allocation2 + $0x11a] sm:$0xff]
      %v2540 = vld [vmem:[%s1 + $0x20] sm:$0xf]
      %v2542 = vsel %vm282, %v2508, 0
      %v2545 = vsel %vm282, %v2509, 0
      %v2548 = vsel %vm282, %v2510, 0
      %v2551 = vsel %vm282, %v2511, 0
      %v2554 = vsel %vm282, %v2512, 0
      %v2557 = vsel %vm282, %v2513, 0
      %v2560 = vsel %vm282, %v2514, 0
      %v2563 = vsel %vm282, %v2515, 0
      %v2566 = vsel %vm282, %v2516, 0
      %v2569 = vsel %vm282, %v2517, 0
      %v2572 = vsel %vm282, %v2518, 0
      %v2575 = vsel %vm282, %v2519, 0
      %v2578 = vsel %vm282, %v2520, 0
      %v2581 = vsel %vm282, %v2521, 0
      %v2584 = vsel %vm282, %v2522, 0
      %v2587 = vsel %vm282, %v2523, 0
      %v2590 = vsel %vm282, %v2524, 0
      %v2593 = vsel %vm282, %v2525, 0
      %v2596 = vsel %vm282, %v2526, 0
      %v2599 = vsel %vm282, %v2527, 0
      %v2602 = vsel %vm282, %v2528, 0
      %v2605 = vsel %vm282, %v2529, 0
      %v2608 = vsel %vm282, %v2530, 0
      %v2611 = vsel %vm282, %v2531, 0
      %v2614 = vsel %vm282, %v2532, 0
      %v2617 = vsel %vm282, %v2533, 0
      %v2620 = vsel %vm282, %v2534, 0
      %v2623 = vsel %vm282, %v2535, 0
      %v2626 = vsel %vm282, %v2536, 0
      %v2629 = vsel %vm282, %v2537, 0
      %v2632 = vsel %vm282, %v2538, 0
      %v2635 = vsel %vm282, %v2539, 0
      %v2638 = vsel %vm517, %v2540, 0
      %2640 = vmatpush.msra.mxu0 0.0
      %2641 = vmatpush.msra.mxu0 0.0
      %2642 = vmatpush.msra.mxu0 0.0
      %2643 = vmatpush.msra.mxu0 0.0
      %2644 = vmatpush.msra.mxu0 0.0
      %2645 = vmatpush.msra.mxu0 0.0
      %2646 = vmatpush.msra.mxu0 0.0
      %2647 = vmatpush.msra.mxu0 0.0
      %2648 = vmatpush.msra.mxu0 0.0
      %2649 = vmatpush.msra.mxu0 0.0
      %2650 = vmatpush.msra.mxu0 0.0
      %2651 = vmatpush.msra.mxu0 0.0
      %2652 = vmatpush.msra.mxu0 0.0
      %2653 = vmatpush.msra.mxu0 0.0
      %2654 = vmatpush.msra.mxu0 0.0
      %2655 = vmatpush.msra.mxu0 %v2638
      %2656 = vmatmul.f32.gmra.mxu0 %v2542
      %v2657 = vpop.f32.mrf.mxu0
      %v2658 = vadd.f32 0.0, %v2657
      %2659 = vmatmul.f32.gmra.mxu0 %v2545
      %v2660 = vpop.f32.mrf.mxu0
      %v2661 = vadd.f32 0.0, %v2660
      %2662 = vmatmul.f32.gmra.mxu0 %v2548
      %v2663 = vpop.f32.mrf.mxu0
      %v2664 = vadd.f32 0.0, %v2663
      %2665 = vmatmul.f32.gmra.mxu0 %v2551
      %v2666 = vpop.f32.mrf.mxu0
      %v2667 = vadd.f32 0.0, %v2666
      %2668 = vmatmul.f32.gmra.mxu0 %v2554
      %v2669 = vpop.f32.mrf.mxu0
      %v2670 = vadd.f32 0.0, %v2669
      %2671 = vmatmul.f32.gmra.mxu0 %v2557
      %v2672 = vpop.f32.mrf.mxu0
      %v2673 = vadd.f32 0.0, %v2672
      %2674 = vmatmul.f32.gmra.mxu0 %v2560
      %v2675 = vpop.f32.mrf.mxu0
      %v2676 = vadd.f32 0.0, %v2675
      %2677 = vmatmul.f32.gmra.mxu0 %v2563
      %v2678 = vpop.f32.mrf.mxu0
      %v2679 = vadd.f32 0.0, %v2678
      %2680 = vmatmul.f32.gmra.mxu0 %v2566
      %v2681 = vpop.f32.mrf.mxu0
      %v2682 = vadd.f32 0.0, %v2681
      %2683 = vmatmul.f32.gmra.mxu0 %v2569
      %v2684 = vpop.f32.mrf.mxu0
      %v2685 = vadd.f32 0.0, %v2684
      %2686 = vmatmul.f32.gmra.mxu0 %v2572
      %v2687 = vpop.f32.mrf.mxu0
      %v2688 = vadd.f32 0.0, %v2687
      %2689 = vmatmul.f32.gmra.mxu0 %v2575
      %v2690 = vpop.f32.mrf.mxu0
      %v2691 = vadd.f32 0.0, %v2690
      %2692 = vmatmul.f32.gmra.mxu0 %v2578
      %v2693 = vpop.f32.mrf.mxu0
      %v2694 = vadd.f32 0.0, %v2693
      %2695 = vmatmul.f32.gmra.mxu0 %v2581
      %v2696 = vpop.f32.mrf.mxu0
      %v2697 = vadd.f32 0.0, %v2696
      %2698 = vmatmul.f32.gmra.mxu0 %v2584
      %v2699 = vpop.f32.mrf.mxu0
      %v2700 = vadd.f32 0.0, %v2699
      %2701 = vmatmul.f32.gmra.mxu0 %v2587
      %v2702 = vpop.f32.mrf.mxu0
      %v2703 = vadd.f32 0.0, %v2702
      %2704 = vmatmul.f32.gmra.mxu0 %v2590
      %v2705 = vpop.f32.mrf.mxu0
      %v2706 = vadd.f32 0.0, %v2705
      %2707 = vmatmul.f32.gmra.mxu0 %v2593
      %v2708 = vpop.f32.mrf.mxu0
      %v2709 = vadd.f32 0.0, %v2708
      %2710 = vmatmul.f32.gmra.mxu0 %v2596
      %v2711 = vpop.f32.mrf.mxu0
      %v2712 = vadd.f32 0.0, %v2711
      %2713 = vmatmul.f32.gmra.mxu0 %v2599
      %v2714 = vpop.f32.mrf.mxu0
      %v2715 = vadd.f32 0.0, %v2714
      %2716 = vmatmul.f32.gmra.mxu0 %v2602
      %v2717 = vpop.f32.mrf.mxu0
      %v2718 = vadd.f32 0.0, %v2717
      %2719 = vmatmul.f32.gmra.mxu0 %v2605
      %v2720 = vpop.f32.mrf.mxu0
      %v2721 = vadd.f32 0.0, %v2720
      %2722 = vmatmul.f32.gmra.mxu0 %v2608
      %v2723 = vpop.f32.mrf.mxu0
      %v2724 = vadd.f32 0.0, %v2723
      %2725 = vmatmul.f32.gmra.mxu0 %v2611
      %v2726 = vpop.f32.mrf.mxu0
      %v2727 = vadd.f32 0.0, %v2726
      %2728 = vmatmul.f32.gmra.mxu0 %v2614
      %v2729 = vpop.f32.mrf.mxu0
      %v2730 = vadd.f32 0.0, %v2729
      %2731 = vmatmul.f32.gmra.mxu0 %v2617
      %v2732 = vpop.f32.mrf.mxu0
      %v2733 = vadd.f32 0.0, %v2732
      %2734 = vmatmul.f32.gmra.mxu0 %v2620
      %v2735 = vpop.f32.mrf.mxu0
      %v2736 = vadd.f32 0.0, %v2735
      %2737 = vmatmul.f32.gmra.mxu0 %v2623
      %v2738 = vpop.f32.mrf.mxu0
      %v2739 = vadd.f32 0.0, %v2738
      %2740 = vmatmul.f32.gmra.mxu0 %v2626
      %v2741 = vpop.f32.mrf.mxu0
      %v2742 = vadd.f32 0.0, %v2741
      %2743 = vmatmul.f32.gmra.mxu0 %v2629
      %v2744 = vpop.f32.mrf.mxu0
      %v2745 = vadd.f32 0.0, %v2744
      %2746 = vmatmul.f32.gmra.mxu0 %v2632
      %v2747 = vpop.f32.mrf.mxu0
      %v2748 = vadd.f32 0.0, %v2747
      %2749 = vmatmul.f32.gmra.mxu0 %v2635
      %v2750 = vpop.f32.mrf.mxu0
      %v2751 = vadd.f32 0.0, %v2750
      %2752 = vdwg.mxu0
      %v2753 = vadd.f32 %v2476, %v2658
      %v2754 = vadd.f32 %v2477, %v2661
      %v2755 = vadd.f32 %v2478, %v2664
      %v2756 = vadd.f32 %v2479, %v2667
      %v2757 = vadd.f32 %v2480, %v2670
      %v2758 = vadd.f32 %v2481, %v2673
      %v2759 = vadd.f32 %v2482, %v2676
      %v2760 = vadd.f32 %v2483, %v2679
      %v2761 = vadd.f32 %v2484, %v2682
      %v2762 = vadd.f32 %v2485, %v2685
      %v2763 = vadd.f32 %v2486, %v2688
      %v2764 = vadd.f32 %v2487, %v2691
      %v2765 = vadd.f32 %v2488, %v2694
      %v2766 = vadd.f32 %v2489, %v2697
      %v2767 = vadd.f32 %v2490, %v2700
      %v2768 = vadd.f32 %v2491, %v2703
      %v2769 = vadd.f32 %v2492, %v2706
      %v2770 = vadd.f32 %v2493, %v2709
      %v2771 = vadd.f32 %v2494, %v2712
      %v2772 = vadd.f32 %v2495, %v2715
      %v2773 = vadd.f32 %v2496, %v2718
      %v2774 = vadd.f32 %v2497, %v2721
      %v2775 = vadd.f32 %v2498, %v2724
      %v2776 = vadd.f32 %v2499, %v2727
      %v2777 = vadd.f32 %v2500, %v2730
      %v2778 = vadd.f32 %v2501, %v2733
      %v2779 = vadd.f32 %v2502, %v2736
      %v2780 = vadd.f32 %v2503, %v2739
      %v2781 = vadd.f32 %v2504, %v2742
      %v2782 = vadd.f32 %v2505, %v2745
      %v2783 = vadd.f32 %v2506, %v2748
      %v2784 = vadd.f32 %v2507, %v2751
      %v2785 = vld [vmem:[%s4] sm:$0x1]
      %v2787 = vperm.slane %v2785, 0
      %v2789 = vadd.f32 %v2753, %v2787
      %v2790 = vadd.f32 %v2754, %v2787
      %v2791 = vadd.f32 %v2755, %v2787
      %v2792 = vadd.f32 %v2756, %v2787
      %v2793 = vadd.f32 %v2757, %v2787
      %v2794 = vadd.f32 %v2758, %v2787
      %v2795 = vadd.f32 %v2759, %v2787
      %v2796 = vadd.f32 %v2760, %v2787
      %v2797 = vadd.f32 %v2761, %v2787
      %v2798 = vadd.f32 %v2762, %v2787
      %v2799 = vadd.f32 %v2763, %v2787
      %v2800 = vadd.f32 %v2764, %v2787
      %v2801 = vadd.f32 %v2765, %v2787
      %v2802 = vadd.f32 %v2766, %v2787
      %v2803 = vadd.f32 %v2767, %v2787
      %v2804 = vadd.f32 %v2768, %v2787
      %v2805 = vadd.f32 %v2769, %v2787
      %v2806 = vadd.f32 %v2770, %v2787
      %v2807 = vadd.f32 %v2771, %v2787
      %v2808 = vadd.f32 %v2772, %v2787
      %v2809 = vadd.f32 %v2773, %v2787
      %v2810 = vadd.f32 %v2774, %v2787
      %v2811 = vadd.f32 %v2775, %v2787
      %v2812 = vadd.f32 %v2776, %v2787
      %v2813 = vadd.f32 %v2777, %v2787
      %v2814 = vadd.f32 %v2778, %v2787
      %v2815 = vadd.f32 %v2779, %v2787
      %v2816 = vadd.f32 %v2780, %v2787
      %v2817 = vadd.f32 %v2781, %v2787
      %v2818 = vadd.f32 %v2782, %v2787
      %v2819 = vadd.f32 %v2783, %v2787
      %v2820 = vadd.f32 %v2784, %v2787
      %vm2821 = vcmp.ge.f32.partialorder %v2789, 0.0
      %vm2822 = vcmp.ge.f32.partialorder %v2790, 0.0
      %vm2823 = vcmp.ge.f32.partialorder %v2791, 0.0
      %vm2824 = vcmp.ge.f32.partialorder %v2792, 0.0
      %vm2825 = vcmp.ge.f32.partialorder %v2793, 0.0
      %vm2826 = vcmp.ge.f32.partialorder %v2794, 0.0
      %vm2827 = vcmp.ge.f32.partialorder %v2795, 0.0
      %vm2828 = vcmp.ge.f32.partialorder %v2796, 0.0
      %vm2829 = vcmp.ge.f32.partialorder %v2797, 0.0
      %vm2830 = vcmp.ge.f32.partialorder %v2798, 0.0
      %vm2831 = vcmp.ge.f32.partialorder %v2799, 0.0
      %vm2832 = vcmp.ge.f32.partialorder %v2800, 0.0
      %vm2833 = vcmp.ge.f32.partialorder %v2801, 0.0
      %vm2834 = vcmp.ge.f32.partialorder %v2802, 0.0
      %vm2835 = vcmp.ge.f32.partialorder %v2803, 0.0
      %vm2836 = vcmp.ge.f32.partialorder %v2804, 0.0
      %vm2837 = vcmp.ge.f32.partialorder %v2805, 0.0
      %vm2838 = vcmp.ge.f32.partialorder %v2806, 0.0
      %vm2839 = vcmp.ge.f32.partialorder %v2807, 0.0
      %vm2840 = vcmp.ge.f32.partialorder %v2808, 0.0
      %vm2841 = vcmp.ge.f32.partialorder %v2809, 0.0
      %vm2842 = vcmp.ge.f32.partialorder %v2810, 0.0
      %vm2843 = vcmp.ge.f32.partialorder %v2811, 0.0
      %vm2844 = vcmp.ge.f32.partialorder %v2812, 0.0
      %vm2845 = vcmp.ge.f32.partialorder %v2813, 0.0
      %vm2846 = vcmp.ge.f32.partialorder %v2814, 0.0
      %vm2847 = vcmp.ge.f32.partialorder %v2815, 0.0
      %vm2848 = vcmp.ge.f32.partialorder %v2816, 0.0
      %vm2849 = vcmp.ge.f32.partialorder %v2817, 0.0
      %vm2850 = vcmp.ge.f32.partialorder %v2818, 0.0
      %vm2851 = vcmp.ge.f32.partialorder %v2819, 0.0
      %vm2852 = vcmp.ge.f32.partialorder %v2820, 0.0
      %v2853 = vmul.f32 %v2789, 0.01
      %v2854 = vmul.f32 %v2790, 0.01
      %v2855 = vmul.f32 %v2791, 0.01
      %v2856 = vmul.f32 %v2792, 0.01
      %v2857 = vmul.f32 %v2793, 0.01
      %v2858 = vmul.f32 %v2794, 0.01
      %v2859 = vmul.f32 %v2795, 0.01
      %v2860 = vmul.f32 %v2796, 0.01
      %v2861 = vmul.f32 %v2797, 0.01
      %v2862 = vmul.f32 %v2798, 0.01
      %v2863 = vmul.f32 %v2799, 0.01
      %v2864 = vmul.f32 %v2800, 0.01
      %v2865 = vmul.f32 %v2801, 0.01
      %v2866 = vmul.f32 %v2802, 0.01
      %v2867 = vmul.f32 %v2803, 0.01
      %v2868 = vmul.f32 %v2804, 0.01
      %v2869 = vmul.f32 %v2805, 0.01
      %v2870 = vmul.f32 %v2806, 0.01
      %v2871 = vmul.f32 %v2807, 0.01
      %v2872 = vmul.f32 %v2808, 0.01
      %v2873 = vmul.f32 %v2809, 0.01
      %v2874 = vmul.f32 %v2810, 0.01
      %v2875 = vmul.f32 %v2811, 0.01
      %v2876 = vmul.f32 %v2812, 0.01
      %v2877 = vmul.f32 %v2813, 0.01
      %v2878 = vmul.f32 %v2814, 0.01
      %v2879 = vmul.f32 %v2815, 0.01
      %v2880 = vmul.f32 %v2816, 0.01
      %v2881 = vmul.f32 %v2817, 0.01
      %v2882 = vmul.f32 %v2818, 0.01
      %v2883 = vmul.f32 %v2819, 0.01
      %v2884 = vmul.f32 %v2820, 0.01
      %v2885 = vsel %vm2821, %v2789, %v2853
      %v2886 = vsel %vm2822, %v2790, %v2854
      %v2887 = vsel %vm2823, %v2791, %v2855
      %v2888 = vsel %vm2824, %v2792, %v2856
      %v2889 = vsel %vm2825, %v2793, %v2857
      %v2890 = vsel %vm2826, %v2794, %v2858
      %v2891 = vsel %vm2827, %v2795, %v2859
      %v2892 = vsel %vm2828, %v2796, %v2860
      %v2893 = vsel %vm2829, %v2797, %v2861
      %v2894 = vsel %vm2830, %v2798, %v2862
      %v2895 = vsel %vm2831, %v2799, %v2863
      %v2896 = vsel %vm2832, %v2800, %v2864
      %v2897 = vsel %vm2833, %v2801, %v2865
      %v2898 = vsel %vm2834, %v2802, %v2866
      %v2899 = vsel %vm2835, %v2803, %v2867
      %v2900 = vsel %vm2836, %v2804, %v2868
      %v2901 = vsel %vm2837, %v2805, %v2869
      %v2902 = vsel %vm2838, %v2806, %v2870
      %v2903 = vsel %vm2839, %v2807, %v2871
      %v2904 = vsel %vm2840, %v2808, %v2872
      %v2905 = vsel %vm2841, %v2809, %v2873
      %v2906 = vsel %vm2842, %v2810, %v2874
      %v2907 = vsel %vm2843, %v2811, %v2875
      %v2908 = vsel %vm2844, %v2812, %v2876
      %v2909 = vsel %vm2845, %v2813, %v2877
      %v2910 = vsel %vm2846, %v2814, %v2878
      %v2911 = vsel %vm2847, %v2815, %v2879
      %v2912 = vsel %vm2848, %v2816, %v2880
      %v2913 = vsel %vm2849, %v2817, %v2881
      %v2914 = vsel %vm2850, %v2818, %v2882
      %v2915 = vsel %vm2851, %v2819, %v2883
      %v2916 = vsel %vm2852, %v2820, %v2884
      %2917 = vst [vmem:[#allocation3] sm:$0xff] %v2885
      %2918 = vst [vmem:[#allocation3 + $0x8] sm:$0xff] %v2886
      %2919 = vst [vmem:[#allocation3 + $0x10] sm:$0xff] %v2887
      %2920 = vst [vmem:[#allocation3 + $0x18] sm:$0xff] %v2888
      %2921 = vst [vmem:[#allocation3 + $0x20] sm:$0xff] %v2889
      %2922 = vst [vmem:[#allocation3 + $0x28] sm:$0xff] %v2890
      %2923 = vst [vmem:[#allocation3 + $0x30] sm:$0xff] %v2891
      %2924 = vst [vmem:[#allocation3 + $0x38] sm:$0xff] %v2892
      %2925 = vst [vmem:[#allocation3 + $0x40] sm:$0xff] %v2893
      %2926 = vst [vmem:[#allocation3 + $0x48] sm:$0xff] %v2894
      %2927 = vst [vmem:[#allocation3 + $0x50] sm:$0xff] %v2895
      %2928 = vst [vmem:[#allocation3 + $0x58] sm:$0xff] %v2896
      %2929 = vst [vmem:[#allocation3 + $0x60] sm:$0xff] %v2897
      %2930 = vst [vmem:[#allocation3 + $0x68] sm:$0xff] %v2898
      %2931 = vst [vmem:[#allocation3 + $0x70] sm:$0xff] %v2899
      %2932 = vst [vmem:[#allocation3 + $0x78] sm:$0xff] %v2900
      %2933 = vst [vmem:[#allocation3 + $0x80] sm:$0xff] %v2901
      %2934 = vst [vmem:[#allocation3 + $0x88] sm:$0xff] %v2902
      %2935 = vst [vmem:[#allocation3 + $0x90] sm:$0xff] %v2903
      %2936 = vst [vmem:[#allocation3 + $0x98] sm:$0xff] %v2904
      %2937 = vst [vmem:[#allocation3 + $0xa0] sm:$0xff] %v2905
      %2938 = vst [vmem:[#allocation3 + $0xa8] sm:$0xff] %v2906
      %2939 = vst [vmem:[#allocation3 + $0xb0] sm:$0xff] %v2907
      %2940 = vst [vmem:[#allocation3 + $0xb8] sm:$0xff] %v2908
      %2941 = vst [vmem:[#allocation3 + $0xc0] sm:$0xff] %v2909
      %2942 = vst [vmem:[#allocation3 + $0xc8] sm:$0xff] %v2910
      %2943 = vst [vmem:[#allocation3 + $0xd0] sm:$0xff] %v2911
      %2944 = vst [vmem:[#allocation3 + $0xd8] sm:$0xff] %v2912
      %2945 = vst [vmem:[#allocation3 + $0xe0] sm:$0xff] %v2913
      %2946 = vst [vmem:[#allocation3 + $0xe8] sm:$0xff] %v2914
      %2947 = vst [vmem:[#allocation3 + $0xf0] sm:$0xff] %v2915
      %2948 = vst [vmem:[#allocation3 + $0xf8] sm:$0xff] %v2916
      %2949 = vst [vmem:[#allocation3 + $0x100] sm:$0xff] 0.0
      %2950 = vst [vmem:[#allocation3 + $0x108] sm:$0xff] 0.0
      %2951 = vst [vmem:[#allocation3 + $0x110] sm:$0xff] 0.0
      %2952 = vst [vmem:[#allocation3 + $0x118] sm:$0xff] 0.0
      %2953 = vst [vmem:[#allocation3 + $0x120] sm:$0xff] 0.0
      %2954 = vst [vmem:[#allocation3 + $0x128] sm:$0xff] 0.0
      %2955 = vst [vmem:[#allocation3 + $0x130] sm:$0xff] 0.0
      %2956 = vst [vmem:[#allocation3 + $0x138] sm:$0xff] 0.0
      %v2957 = vld [vmem:[#allocation3] sm:$0xff]
      %v2958 = vld [vmem:[#allocation3 + $0x8] sm:$0xff]
      %v2959 = vld [vmem:[#allocation3 + $0x10] sm:$0xff]
      %v2960 = vld [vmem:[#allocation3 + $0x18] sm:$0xff]
      %v2961 = vld [vmem:[#allocation3 + $0x20] sm:$0xff]
      %v2962 = vld [vmem:[#allocation3 + $0x28] sm:$0xff]
      %v2963 = vld [vmem:[#allocation3 + $0x30] sm:$0xff]
      %v2964 = vld [vmem:[#allocation3 + $0x38] sm:$0xff]
      %v2965 = vld [vmem:[#allocation3 + $0x40] sm:$0xff]
      %v2966 = vld [vmem:[#allocation3 + $0x48] sm:$0xff]
      %v2967 = vld [vmem:[#allocation3 + $0x50] sm:$0xff]
      %v2968 = vld [vmem:[#allocation3 + $0x58] sm:$0xff]
      %v2969 = vld [vmem:[#allocation3 + $0x60] sm:$0xff]
      %v2970 = vld [vmem:[#allocation3 + $0x68] sm:$0xff]
      %v2971 = vld [vmem:[#allocation3 + $0x70] sm:$0xff]
      %v2972 = vld [vmem:[#allocation3 + $0x78] sm:$0xff]
      %v2973 = vld [vmem:[#allocation3 + $0x80] sm:$0xff]
      %v2974 = vld [vmem:[#allocation3 + $0x88] sm:$0xff]
      %v2975 = vld [vmem:[#allocation3 + $0x90] sm:$0xff]
      %v2976 = vld [vmem:[#allocation3 + $0x98] sm:$0xff]
      %v2977 = vld [vmem:[#allocation3 + $0xa0] sm:$0xff]
      %v2978 = vld [vmem:[#allocation3 + $0xa8] sm:$0xff]
      %v2979 = vld [vmem:[#allocation3 + $0xb0] sm:$0xff]
      %v2980 = vld [vmem:[#allocation3 + $0xb8] sm:$0xff]
      %v2981 = vld [vmem:[#allocation3 + $0xc0] sm:$0xff]
      %v2982 = vld [vmem:[#allocation3 + $0xc8] sm:$0xff]
      %v2983 = vld [vmem:[#allocation3 + $0xd0] sm:$0xff]
      %v2984 = vld [vmem:[#allocation3 + $0xd8] sm:$0xff]
      %v2985 = vld [vmem:[#allocation3 + $0xe0] sm:$0xff]
      %v2986 = vld [vmem:[#allocation3 + $0xe8] sm:$0xff]
      %v2987 = vld [vmem:[#allocation3 + $0xf0] sm:$0xff]
      %v2988 = vld [vmem:[#allocation3 + $0xf8] sm:$0xff]
      %v2989 = vld [vmem:[%s2] sm:$0xff]
      %v2990 = vld [vmem:[#allocation3 + $0x1] sm:$0xff]
      %v2991 = vld [vmem:[#allocation3 + $0x9] sm:$0xff]
      %v2992 = vld [vmem:[#allocation3 + $0x11] sm:$0xff]
      %v2993 = vld [vmem:[#allocation3 + $0x19] sm:$0xff]
      %v2994 = vld [vmem:[#allocation3 + $0x21] sm:$0xff]
      %v2995 = vld [vmem:[#allocation3 + $0x29] sm:$0xff]
      %v2996 = vld [vmem:[#allocation3 + $0x31] sm:$0xff]
      %v2997 = vld [vmem:[#allocation3 + $0x39] sm:$0xff]
      %v2998 = vld [vmem:[#allocation3 + $0x41] sm:$0xff]
      %v2999 = vld [vmem:[#allocation3 + $0x49] sm:$0xff]
      %v3000 = vld [vmem:[#allocation3 + $0x51] sm:$0xff]
      %v3001 = vld [vmem:[#allocation3 + $0x59] sm:$0xff]
      %v3002 = vld [vmem:[#allocation3 + $0x61] sm:$0xff]
      %v3003 = vld [vmem:[#allocation3 + $0x69] sm:$0xff]
      %v3004 = vld [vmem:[#allocation3 + $0x71] sm:$0xff]
      %v3005 = vld [vmem:[#allocation3 + $0x79] sm:$0xff]
      %v3006 = vld [vmem:[#allocation3 + $0x81] sm:$0xff]
      %v3007 = vld [vmem:[#allocation3 + $0x89] sm:$0xff]
      %v3008 = vld [vmem:[#allocation3 + $0x91] sm:$0xff]
      %v3009 = vld [vmem:[#allocation3 + $0x99] sm:$0xff]
      %v3010 = vld [vmem:[#allocation3 + $0xa1] sm:$0xff]
      %v3011 = vld [vmem:[#allocation3 + $0xa9] sm:$0xff]
      %v3012 = vld [vmem:[#allocation3 + $0xb1] sm:$0xff]
      %v3013 = vld [vmem:[#allocation3 + $0xb9] sm:$0xff]
      %v3014 = vld [vmem:[#allocation3 + $0xc1] sm:$0xff]
      %v3015 = vld [vmem:[#allocation3 + $0xc9] sm:$0xff]
      %v3016 = vld [vmem:[#allocation3 + $0xd1] sm:$0xff]
      %v3017 = vld [vmem:[#allocation3 + $0xd9] sm:$0xff]
      %v3018 = vld [vmem:[#allocation3 + $0xe1] sm:$0xff]
      %v3019 = vld [vmem:[#allocation3 + $0xe9] sm:$0xff]
      %v3020 = vld [vmem:[#allocation3 + $0xf1] sm:$0xff]
      %v3021 = vld [vmem:[#allocation3 + $0xf9] sm:$0xff]
      %v3022 = vld [vmem:[%s2 + $0x8] sm:$0xff]
      %vm3023 = vcmask 64512
      %v3025 = vsel %vm3023, %v2990, 0
      %v3028 = vsel %vm3023, %v2991, 0
      %v3031 = vsel %vm3023, %v2992, 0
      %v3034 = vsel %vm3023, %v2993, 0
      %v3037 = vsel %vm3023, %v2994, 0
      %v3040 = vsel %vm3023, %v2995, 0
      %v3043 = vsel %vm3023, %v2996, 0
      %v3046 = vsel %vm3023, %v2997, 0
      %v3049 = vsel %vm3023, %v2998, 0
      %v3052 = vsel %vm3023, %v2999, 0
      %v3055 = vsel %vm3023, %v3000, 0
      %v3058 = vsel %vm3023, %v3001, 0
      %v3061 = vsel %vm3023, %v3002, 0
      %v3064 = vsel %vm3023, %v3003, 0
      %v3067 = vsel %vm3023, %v3004, 0
      %v3070 = vsel %vm3023, %v3005, 0
      %v3073 = vsel %vm3023, %v3006, 0
      %v3076 = vsel %vm3023, %v3007, 0
      %v3079 = vsel %vm3023, %v3008, 0
      %v3082 = vsel %vm3023, %v3009, 0
      %v3085 = vsel %vm3023, %v3010, 0
      %v3088 = vsel %vm3023, %v3011, 0
      %v3091 = vsel %vm3023, %v3012, 0
      %v3094 = vsel %vm3023, %v3013, 0
      %v3097 = vsel %vm3023, %v3014, 0
      %v3100 = vsel %vm3023, %v3015, 0
      %v3103 = vsel %vm3023, %v3016, 0
      %v3106 = vsel %vm3023, %v3017, 0
      %v3109 = vsel %vm3023, %v3018, 0
      %v3112 = vsel %vm3023, %v3019, 0
      %v3115 = vsel %vm3023, %v3020, 0
      %v3118 = vsel %vm3023, %v3021, 0
      %3120 = vmatpush.msra.mxu0 0.0
      %3121 = vmatpush.msra.mxu0 0.0
      %3122 = vmatpush.msra.mxu0 0.0
      %3123 = vmatpush.msra.mxu0 0.0
      %3124 = vmatpush.msra.mxu0 0.0
      %3125 = vmatpush.msra.mxu0 0.0
      %3126 = vmatpush.msra.mxu0 0.0
      %3127 = vmatpush.msra.mxu0 0.0
      %3128 = vmatpush.msra.mxu0 0.0
      %3129 = vmatpush.msra.mxu0 0.0
      %3130 = vmatpush.msra.mxu0 0.0
      %3131 = vmatpush.msra.mxu0 0.0
      %3132 = vmatpush.msra.mxu0 0.0
      %3133 = vmatpush.msra.mxu0 0.0
      %3134 = vmatpush.msra.mxu0 0.0
      %3135 = vmatpush.msra.mxu0 %v3022
      %3136 = vmatmul.f32.gmra.mxu0 %v3025
      %v3137 = vpop.f32.mrf.mxu0
      %v3138 = vadd.f32 0.0, %v3137
      %3139 = vmatmul.f32.gmra.mxu0 %v3028
      %v3140 = vpop.f32.mrf.mxu0
      %v3141 = vadd.f32 0.0, %v3140
      %3142 = vmatmul.f32.gmra.mxu0 %v3031
      %v3143 = vpop.f32.mrf.mxu0
      %v3144 = vadd.f32 0.0, %v3143
      %3145 = vmatmul.f32.gmra.mxu0 %v3034
      %v3146 = vpop.f32.mrf.mxu0
      %v3147 = vadd.f32 0.0, %v3146
      %3148 = vmatmul.f32.gmra.mxu0 %v3037
      %v3149 = vpop.f32.mrf.mxu0
      %v3150 = vadd.f32 0.0, %v3149
      %3151 = vmatmul.f32.gmra.mxu0 %v3040
      %v3152 = vpop.f32.mrf.mxu0
      %v3153 = vadd.f32 0.0, %v3152
      %3154 = vmatmul.f32.gmra.mxu0 %v3043
      %v3155 = vpop.f32.mrf.mxu0
      %v3156 = vadd.f32 0.0, %v3155
      %3157 = vmatmul.f32.gmra.mxu0 %v3046
      %v3158 = vpop.f32.mrf.mxu0
      %v3159 = vadd.f32 0.0, %v3158
      %3160 = vmatmul.f32.gmra.mxu0 %v3049
      %v3161 = vpop.f32.mrf.mxu0
      %v3162 = vadd.f32 0.0, %v3161
      %3163 = vmatmul.f32.gmra.mxu0 %v3052
      %v3164 = vpop.f32.mrf.mxu0
      %v3165 = vadd.f32 0.0, %v3164
      %3166 = vmatmul.f32.gmra.mxu0 %v3055
      %v3167 = vpop.f32.mrf.mxu0
      %v3168 = vadd.f32 0.0, %v3167
      %3169 = vmatmul.f32.gmra.mxu0 %v3058
      %v3170 = vpop.f32.mrf.mxu0
      %v3171 = vadd.f32 0.0, %v3170
      %3172 = vmatmul.f32.gmra.mxu0 %v3061
      %v3173 = vpop.f32.mrf.mxu0
      %v3174 = vadd.f32 0.0, %v3173
      %3175 = vmatmul.f32.gmra.mxu0 %v3064
      %v3176 = vpop.f32.mrf.mxu0
      %v3177 = vadd.f32 0.0, %v3176
      %3178 = vmatmul.f32.gmra.mxu0 %v3067
      %v3179 = vpop.f32.mrf.mxu0
      %v3180 = vadd.f32 0.0, %v3179
      %3181 = vmatmul.f32.gmra.mxu0 %v3070
      %v3182 = vpop.f32.mrf.mxu0
      %v3183 = vadd.f32 0.0, %v3182
      %3184 = vmatmul.f32.gmra.mxu0 %v3073
      %v3185 = vpop.f32.mrf.mxu0
      %v3186 = vadd.f32 0.0, %v3185
      %3187 = vmatmul.f32.gmra.mxu0 %v3076
      %v3188 = vpop.f32.mrf.mxu0
      %v3189 = vadd.f32 0.0, %v3188
      %3190 = vmatmul.f32.gmra.mxu0 %v3079
      %v3191 = vpop.f32.mrf.mxu0
      %v3192 = vadd.f32 0.0, %v3191
      %3193 = vmatmul.f32.gmra.mxu0 %v3082
      %v3194 = vpop.f32.mrf.mxu0
      %v3195 = vadd.f32 0.0, %v3194
      %3196 = vmatmul.f32.gmra.mxu0 %v3085
      %v3197 = vpop.f32.mrf.mxu0
      %v3198 = vadd.f32 0.0, %v3197
      %3199 = vmatmul.f32.gmra.mxu0 %v3088
      %v3200 = vpop.f32.mrf.mxu0
      %v3201 = vadd.f32 0.0, %v3200
      %3202 = vmatmul.f32.gmra.mxu0 %v3091
      %v3203 = vpop.f32.mrf.mxu0
      %v3204 = vadd.f32 0.0, %v3203
      %3205 = vmatmul.f32.gmra.mxu0 %v3094
      %v3206 = vpop.f32.mrf.mxu0
      %v3207 = vadd.f32 0.0, %v3206
      %3208 = vmatmul.f32.gmra.mxu0 %v3097
      %v3209 = vpop.f32.mrf.mxu0
      %v3210 = vadd.f32 0.0, %v3209
      %3211 = vmatmul.f32.gmra.mxu0 %v3100
      %v3212 = vpop.f32.mrf.mxu0
      %v3213 = vadd.f32 0.0, %v3212
      %3214 = vmatmul.f32.gmra.mxu0 %v3103
      %v3215 = vpop.f32.mrf.mxu0
      %v3216 = vadd.f32 0.0, %v3215
      %3217 = vmatmul.f32.gmra.mxu0 %v3106
      %v3218 = vpop.f32.mrf.mxu0
      %v3219 = vadd.f32 0.0, %v3218
      %3220 = vmatmul.f32.gmra.mxu0 %v3109
      %v3221 = vpop.f32.mrf.mxu0
      %v3222 = vadd.f32 0.0, %v3221
      %3223 = vmatmul.f32.gmra.mxu0 %v3112
      %v3224 = vpop.f32.mrf.mxu0
      %v3225 = vadd.f32 0.0, %v3224
      %3226 = vmatmul.f32.gmra.mxu0 %v3115
      %v3227 = vpop.f32.mrf.mxu0
      %v3228 = vadd.f32 0.0, %v3227
      %3229 = vmatmul.f32.gmra.mxu0 %v3118
      %v3230 = vpop.f32.mrf.mxu0
      %v3231 = vadd.f32 0.0, %v3230
      %3232 = vdwg.mxu0
      %v3234 = vsel %vm3023, %v2957, 0
      %v3237 = vsel %vm3023, %v2958, 0
      %v3240 = vsel %vm3023, %v2959, 0
      %v3243 = vsel %vm3023, %v2960, 0
      %v3246 = vsel %vm3023, %v2961, 0
      %v3249 = vsel %vm3023, %v2962, 0
      %v3252 = vsel %vm3023, %v2963, 0
      %v3255 = vsel %vm3023, %v2964, 0
      %v3258 = vsel %vm3023, %v2965, 0
      %v3261 = vsel %vm3023, %v2966, 0
      %v3264 = vsel %vm3023, %v2967, 0
      %v3267 = vsel %vm3023, %v2968, 0
      %v3270 = vsel %vm3023, %v2969, 0
      %v3273 = vsel %vm3023, %v2970, 0
      %v3276 = vsel %vm3023, %v2971, 0
      %v3279 = vsel %vm3023, %v2972, 0
      %v3282 = vsel %vm3023, %v2973, 0
      %v3285 = vsel %vm3023, %v2974, 0
      %v3288 = vsel %vm3023, %v2975, 0
      %v3291 = vsel %vm3023, %v2976, 0
      %v3294 = vsel %vm3023, %v2977, 0
      %v3297 = vsel %vm3023, %v2978, 0
      %v3300 = vsel %vm3023, %v2979, 0
      %v3303 = vsel %vm3023, %v2980, 0
      %v3306 = vsel %vm3023, %v2981, 0
      %v3309 = vsel %vm3023, %v2982, 0
      %v3312 = vsel %vm3023, %v2983, 0
      %v3315 = vsel %vm3023, %v2984, 0
      %v3318 = vsel %vm3023, %v2985, 0
      %v3321 = vsel %vm3023, %v2986, 0
      %v3324 = vsel %vm3023, %v2987, 0
      %v3327 = vsel %vm3023, %v2988, 0
      %3329 = vmatpush.msra.mxu0 0.0
      %3330 = vmatpush.msra.mxu0 0.0
      %3331 = vmatpush.msra.mxu0 0.0
      %3332 = vmatpush.msra.mxu0 0.0
      %3333 = vmatpush.msra.mxu0 0.0
      %3334 = vmatpush.msra.mxu0 0.0
      %3335 = vmatpush.msra.mxu0 0.0
      %3336 = vmatpush.msra.mxu0 0.0
      %3337 = vmatpush.msra.mxu0 0.0
      %3338 = vmatpush.msra.mxu0 0.0
      %3339 = vmatpush.msra.mxu0 0.0
      %3340 = vmatpush.msra.mxu0 0.0
      %3341 = vmatpush.msra.mxu0 0.0
      %3342 = vmatpush.msra.mxu0 0.0
      %3343 = vmatpush.msra.mxu0 0.0
      %3344 = vmatpush.msra.mxu0 %v2989
      %3345 = vmatmul.f32.gmra.mxu0 %v3234
      %v3346 = vpop.f32.mrf.mxu0
      %v3347 = vadd.f32 %v3138, %v3346
      %3348 = vmatmul.f32.gmra.mxu0 %v3237
      %v3349 = vpop.f32.mrf.mxu0
      %v3350 = vadd.f32 %v3141, %v3349
      %3351 = vmatmul.f32.gmra.mxu0 %v3240
      %v3352 = vpop.f32.mrf.mxu0
      %v3353 = vadd.f32 %v3144, %v3352
      %3354 = vmatmul.f32.gmra.mxu0 %v3243
      %v3355 = vpop.f32.mrf.mxu0
      %v3356 = vadd.f32 %v3147, %v3355
      %3357 = vmatmul.f32.gmra.mxu0 %v3246
      %v3358 = vpop.f32.mrf.mxu0
      %v3359 = vadd.f32 %v3150, %v3358
      %3360 = vmatmul.f32.gmra.mxu0 %v3249
      %v3361 = vpop.f32.mrf.mxu0
      %v3362 = vadd.f32 %v3153, %v3361
      %3363 = vmatmul.f32.gmra.mxu0 %v3252
      %v3364 = vpop.f32.mrf.mxu0
      %v3365 = vadd.f32 %v3156, %v3364
      %3366 = vmatmul.f32.gmra.mxu0 %v3255
      %v3367 = vpop.f32.mrf.mxu0
      %v3368 = vadd.f32 %v3159, %v3367
      %3369 = vmatmul.f32.gmra.mxu0 %v3258
      %v3370 = vpop.f32.mrf.mxu0
      %v3371 = vadd.f32 %v3162, %v3370
      %3372 = vmatmul.f32.gmra.mxu0 %v3261
      %v3373 = vpop.f32.mrf.mxu0
      %v3374 = vadd.f32 %v3165, %v3373
      %3375 = vmatmul.f32.gmra.mxu0 %v3264
      %v3376 = vpop.f32.mrf.mxu0
      %v3377 = vadd.f32 %v3168, %v3376
      %3378 = vmatmul.f32.gmra.mxu0 %v3267
      %v3379 = vpop.f32.mrf.mxu0
      %v3380 = vadd.f32 %v3171, %v3379
      %3381 = vmatmul.f32.gmra.mxu0 %v3270
      %v3382 = vpop.f32.mrf.mxu0
      %v3383 = vadd.f32 %v3174, %v3382
      %3384 = vmatmul.f32.gmra.mxu0 %v3273
      %v3385 = vpop.f32.mrf.mxu0
      %v3386 = vadd.f32 %v3177, %v3385
      %3387 = vmatmul.f32.gmra.mxu0 %v3276
      %v3388 = vpop.f32.mrf.mxu0
      %v3389 = vadd.f32 %v3180, %v3388
      %3390 = vmatmul.f32.gmra.mxu0 %v3279
      %v3391 = vpop.f32.mrf.mxu0
      %v3392 = vadd.f32 %v3183, %v3391
      %3393 = vmatmul.f32.gmra.mxu0 %v3282
      %v3394 = vpop.f32.mrf.mxu0
      %v3395 = vadd.f32 %v3186, %v3394
      %3396 = vmatmul.f32.gmra.mxu0 %v3285
      %v3397 = vpop.f32.mrf.mxu0
      %v3398 = vadd.f32 %v3189, %v3397
      %3399 = vmatmul.f32.gmra.mxu0 %v3288
      %v3400 = vpop.f32.mrf.mxu0
      %v3401 = vadd.f32 %v3192, %v3400
      %3402 = vmatmul.f32.gmra.mxu0 %v3291
      %v3403 = vpop.f32.mrf.mxu0
      %v3404 = vadd.f32 %v3195, %v3403
      %3405 = vmatmul.f32.gmra.mxu0 %v3294
      %v3406 = vpop.f32.mrf.mxu0
      %v3407 = vadd.f32 %v3198, %v3406
      %3408 = vmatmul.f32.gmra.mxu0 %v3297
      %v3409 = vpop.f32.mrf.mxu0
      %v3410 = vadd.f32 %v3201, %v3409
      %3411 = vmatmul.f32.gmra.mxu0 %v3300
      %v3412 = vpop.f32.mrf.mxu0
      %v3413 = vadd.f32 %v3204, %v3412
      %3414 = vmatmul.f32.gmra.mxu0 %v3303
      %v3415 = vpop.f32.mrf.mxu0
      %v3416 = vadd.f32 %v3207, %v3415
      %3417 = vmatmul.f32.gmra.mxu0 %v3306
      %v3418 = vpop.f32.mrf.mxu0
      %v3419 = vadd.f32 %v3210, %v3418
      %3420 = vmatmul.f32.gmra.mxu0 %v3309
      %v3421 = vpop.f32.mrf.mxu0
      %v3422 = vadd.f32 %v3213, %v3421
      %3423 = vmatmul.f32.gmra.mxu0 %v3312
      %v3424 = vpop.f32.mrf.mxu0
      %v3425 = vadd.f32 %v3216, %v3424
      %3426 = vmatmul.f32.gmra.mxu0 %v3315
      %v3427 = vpop.f32.mrf.mxu0
      %v3428 = vadd.f32 %v3219, %v3427
      %3429 = vmatmul.f32.gmra.mxu0 %v3318
      %v3430 = vpop.f32.mrf.mxu0
      %v3431 = vadd.f32 %v3222, %v3430
      %3432 = vmatmul.f32.gmra.mxu0 %v3321
      %v3433 = vpop.f32.mrf.mxu0
      %v3434 = vadd.f32 %v3225, %v3433
      %3435 = vmatmul.f32.gmra.mxu0 %v3324
      %v3436 = vpop.f32.mrf.mxu0
      %v3437 = vadd.f32 %v3228, %v3436
      %3438 = vmatmul.f32.gmra.mxu0 %v3327
      %v3439 = vpop.f32.mrf.mxu0
      %v3440 = vadd.f32 %v3231, %v3439
      %3441 = vdwg.mxu0
      %v3442 = vld [vmem:[#allocation3 + $0x2] sm:$0xff]
      %v3443 = vld [vmem:[#allocation3 + $0xa] sm:$0xff]
      %v3444 = vld [vmem:[#allocation3 + $0x12] sm:$0xff]
      %v3445 = vld [vmem:[#allocation3 + $0x1a] sm:$0xff]
      %v3446 = vld [vmem:[#allocation3 + $0x22] sm:$0xff]
      %v3447 = vld [vmem:[#allocation3 + $0x2a] sm:$0xff]
      %v3448 = vld [vmem:[#allocation3 + $0x32] sm:$0xff]
      %v3449 = vld [vmem:[#allocation3 + $0x3a] sm:$0xff]
      %v3450 = vld [vmem:[#allocation3 + $0x42] sm:$0xff]
      %v3451 = vld [vmem:[#allocation3 + $0x4a] sm:$0xff]
      %v3452 = vld [vmem:[#allocation3 + $0x52] sm:$0xff]
      %v3453 = vld [vmem:[#allocation3 + $0x5a] sm:$0xff]
      %v3454 = vld [vmem:[#allocation3 + $0x62] sm:$0xff]
      %v3455 = vld [vmem:[#allocation3 + $0x6a] sm:$0xff]
      %v3456 = vld [vmem:[#allocation3 + $0x72] sm:$0xff]
      %v3457 = vld [vmem:[#allocation3 + $0x7a] sm:$0xff]
      %v3458 = vld [vmem:[#allocation3 + $0x82] sm:$0xff]
      %v3459 = vld [vmem:[#allocation3 + $0x8a] sm:$0xff]
      %v3460 = vld [vmem:[#allocation3 + $0x92] sm:$0xff]
      %v3461 = vld [vmem:[#allocation3 + $0x9a] sm:$0xff]
      %v3462 = vld [vmem:[#allocation3 + $0xa2] sm:$0xff]
      %v3463 = vld [vmem:[#allocation3 + $0xaa] sm:$0xff]
      %v3464 = vld [vmem:[#allocation3 + $0xb2] sm:$0xff]
      %v3465 = vld [vmem:[#allocation3 + $0xba] sm:$0xff]
      %v3466 = vld [vmem:[#allocation3 + $0xc2] sm:$0xff]
      %v3467 = vld [vmem:[#allocation3 + $0xca] sm:$0xff]
      %v3468 = vld [vmem:[#allocation3 + $0xd2] sm:$0xff]
      %v3469 = vld [vmem:[#allocation3 + $0xda] sm:$0xff]
      %v3470 = vld [vmem:[#allocation3 + $0xe2] sm:$0xff]
      %v3471 = vld [vmem:[#allocation3 + $0xea] sm:$0xff]
      %v3472 = vld [vmem:[#allocation3 + $0xf2] sm:$0xff]
      %v3473 = vld [vmem:[#allocation3 + $0xfa] sm:$0xff]
      %v3474 = vld [vmem:[%s2 + $0x10] sm:$0xff]
      %v3476 = vsel %vm3023, %v3442, 0
      %v3479 = vsel %vm3023, %v3443, 0
      %v3482 = vsel %vm3023, %v3444, 0
      %v3485 = vsel %vm3023, %v3445, 0
      %v3488 = vsel %vm3023, %v3446, 0
      %v3491 = vsel %vm3023, %v3447, 0
      %v3494 = vsel %vm3023, %v3448, 0
      %v3497 = vsel %vm3023, %v3449, 0
      %v3500 = vsel %vm3023, %v3450, 0
      %v3503 = vsel %vm3023, %v3451, 0
      %v3506 = vsel %vm3023, %v3452, 0
      %v3509 = vsel %vm3023, %v3453, 0
      %v3512 = vsel %vm3023, %v3454, 0
      %v3515 = vsel %vm3023, %v3455, 0
      %v3518 = vsel %vm3023, %v3456, 0
      %v3521 = vsel %vm3023, %v3457, 0
      %v3524 = vsel %vm3023, %v3458, 0
      %v3527 = vsel %vm3023, %v3459, 0
      %v3530 = vsel %vm3023, %v3460, 0
      %v3533 = vsel %vm3023, %v3461, 0
      %v3536 = vsel %vm3023, %v3462, 0
      %v3539 = vsel %vm3023, %v3463, 0
      %v3542 = vsel %vm3023, %v3464, 0
      %v3545 = vsel %vm3023, %v3465, 0
      %v3548 = vsel %vm3023, %v3466, 0
      %v3551 = vsel %vm3023, %v3467, 0
      %v3554 = vsel %vm3023, %v3468, 0
      %v3557 = vsel %vm3023, %v3469, 0
      %v3560 = vsel %vm3023, %v3470, 0
      %v3563 = vsel %vm3023, %v3471, 0
      %v3566 = vsel %vm3023, %v3472, 0
      %v3569 = vsel %vm3023, %v3473, 0
      %3571 = vmatpush.msra.mxu0 0.0
      %3572 = vmatpush.msra.mxu0 0.0
      %3573 = vmatpush.msra.mxu0 0.0
      %3574 = vmatpush.msra.mxu0 0.0
      %3575 = vmatpush.msra.mxu0 0.0
      %3576 = vmatpush.msra.mxu0 0.0
      %3577 = vmatpush.msra.mxu0 0.0
      %3578 = vmatpush.msra.mxu0 0.0
      %3579 = vmatpush.msra.mxu0 0.0
      %3580 = vmatpush.msra.mxu0 0.0
      %3581 = vmatpush.msra.mxu0 0.0
      %3582 = vmatpush.msra.mxu0 0.0
      %3583 = vmatpush.msra.mxu0 0.0
      %3584 = vmatpush.msra.mxu0 0.0
      %3585 = vmatpush.msra.mxu0 0.0
      %3586 = vmatpush.msra.mxu0 %v3474
      %3587 = vmatmul.f32.gmra.mxu0 %v3476
      %v3588 = vpop.f32.mrf.mxu0
      %v3589 = vadd.f32 0.0, %v3588
      %3590 = vmatmul.f32.gmra.mxu0 %v3479
      %v3591 = vpop.f32.mrf.mxu0
      %v3592 = vadd.f32 0.0, %v3591
      %3593 = vmatmul.f32.gmra.mxu0 %v3482
      %v3594 = vpop.f32.mrf.mxu0
      %v3595 = vadd.f32 0.0, %v3594
      %3596 = vmatmul.f32.gmra.mxu0 %v3485
      %v3597 = vpop.f32.mrf.mxu0
      %v3598 = vadd.f32 0.0, %v3597
      %3599 = vmatmul.f32.gmra.mxu0 %v3488
      %v3600 = vpop.f32.mrf.mxu0
      %v3601 = vadd.f32 0.0, %v3600
      %3602 = vmatmul.f32.gmra.mxu0 %v3491
      %v3603 = vpop.f32.mrf.mxu0
      %v3604 = vadd.f32 0.0, %v3603
      %3605 = vmatmul.f32.gmra.mxu0 %v3494
      %v3606 = vpop.f32.mrf.mxu0
      %v3607 = vadd.f32 0.0, %v3606
      %3608 = vmatmul.f32.gmra.mxu0 %v3497
      %v3609 = vpop.f32.mrf.mxu0
      %v3610 = vadd.f32 0.0, %v3609
      %3611 = vmatmul.f32.gmra.mxu0 %v3500
      %v3612 = vpop.f32.mrf.mxu0
      %v3613 = vadd.f32 0.0, %v3612
      %3614 = vmatmul.f32.gmra.mxu0 %v3503
      %v3615 = vpop.f32.mrf.mxu0
      %v3616 = vadd.f32 0.0, %v3615
      %3617 = vmatmul.f32.gmra.mxu0 %v3506
      %v3618 = vpop.f32.mrf.mxu0
      %v3619 = vadd.f32 0.0, %v3618
      %3620 = vmatmul.f32.gmra.mxu0 %v3509
      %v3621 = vpop.f32.mrf.mxu0
      %v3622 = vadd.f32 0.0, %v3621
      %3623 = vmatmul.f32.gmra.mxu0 %v3512
      %v3624 = vpop.f32.mrf.mxu0
      %v3625 = vadd.f32 0.0, %v3624
      %3626 = vmatmul.f32.gmra.mxu0 %v3515
      %v3627 = vpop.f32.mrf.mxu0
      %v3628 = vadd.f32 0.0, %v3627
      %3629 = vmatmul.f32.gmra.mxu0 %v3518
      %v3630 = vpop.f32.mrf.mxu0
      %v3631 = vadd.f32 0.0, %v3630
      %3632 = vmatmul.f32.gmra.mxu0 %v3521
      %v3633 = vpop.f32.mrf.mxu0
      %v3634 = vadd.f32 0.0, %v3633
      %3635 = vmatmul.f32.gmra.mxu0 %v3524
      %v3636 = vpop.f32.mrf.mxu0
      %v3637 = vadd.f32 0.0, %v3636
      %3638 = vmatmul.f32.gmra.mxu0 %v3527
      %v3639 = vpop.f32.mrf.mxu0
      %v3640 = vadd.f32 0.0, %v3639
      %3641 = vmatmul.f32.gmra.mxu0 %v3530
      %v3642 = vpop.f32.mrf.mxu0
      %v3643 = vadd.f32 0.0, %v3642
      %3644 = vmatmul.f32.gmra.mxu0 %v3533
      %v3645 = vpop.f32.mrf.mxu0
      %v3646 = vadd.f32 0.0, %v3645
      %3647 = vmatmul.f32.gmra.mxu0 %v3536
      %v3648 = vpop.f32.mrf.mxu0
      %v3649 = vadd.f32 0.0, %v3648
      %3650 = vmatmul.f32.gmra.mxu0 %v3539
      %v3651 = vpop.f32.mrf.mxu0
      %v3652 = vadd.f32 0.0, %v3651
      %3653 = vmatmul.f32.gmra.mxu0 %v3542
      %v3654 = vpop.f32.mrf.mxu0
      %v3655 = vadd.f32 0.0, %v3654
      %3656 = vmatmul.f32.gmra.mxu0 %v3545
      %v3657 = vpop.f32.mrf.mxu0
      %v3658 = vadd.f32 0.0, %v3657
      %3659 = vmatmul.f32.gmra.mxu0 %v3548
      %v3660 = vpop.f32.mrf.mxu0
      %v3661 = vadd.f32 0.0, %v3660
      %3662 = vmatmul.f32.gmra.mxu0 %v3551
      %v3663 = vpop.f32.mrf.mxu0
      %v3664 = vadd.f32 0.0, %v3663
      %3665 = vmatmul.f32.gmra.mxu0 %v3554
      %v3666 = vpop.f32.mrf.mxu0
      %v3667 = vadd.f32 0.0, %v3666
      %3668 = vmatmul.f32.gmra.mxu0 %v3557
      %v3669 = vpop.f32.mrf.mxu0
      %v3670 = vadd.f32 0.0, %v3669
      %3671 = vmatmul.f32.gmra.mxu0 %v3560
      %v3672 = vpop.f32.mrf.mxu0
      %v3673 = vadd.f32 0.0, %v3672
      %3674 = vmatmul.f32.gmra.mxu0 %v3563
      %v3675 = vpop.f32.mrf.mxu0
      %v3676 = vadd.f32 0.0, %v3675
      %3677 = vmatmul.f32.gmra.mxu0 %v3566
      %v3678 = vpop.f32.mrf.mxu0
      %v3679 = vadd.f32 0.0, %v3678
      %3680 = vmatmul.f32.gmra.mxu0 %v3569
      %v3681 = vpop.f32.mrf.mxu0
      %v3682 = vadd.f32 0.0, %v3681
      %3683 = vdwg.mxu0
      %v3684 = vadd.f32 %v3347, %v3589
      %v3685 = vadd.f32 %v3350, %v3592
      %v3686 = vadd.f32 %v3353, %v3595
      %v3687 = vadd.f32 %v3356, %v3598
      %v3688 = vadd.f32 %v3359, %v3601
      %v3689 = vadd.f32 %v3362, %v3604
      %v3690 = vadd.f32 %v3365, %v3607
      %v3691 = vadd.f32 %v3368, %v3610
      %v3692 = vadd.f32 %v3371, %v3613
      %v3693 = vadd.f32 %v3374, %v3616
      %v3694 = vadd.f32 %v3377, %v3619
      %v3695 = vadd.f32 %v3380, %v3622
      %v3696 = vadd.f32 %v3383, %v3625
      %v3697 = vadd.f32 %v3386, %v3628
      %v3698 = vadd.f32 %v3389, %v3631
      %v3699 = vadd.f32 %v3392, %v3634
      %v3700 = vadd.f32 %v3395, %v3637
      %v3701 = vadd.f32 %v3398, %v3640
      %v3702 = vadd.f32 %v3401, %v3643
      %v3703 = vadd.f32 %v3404, %v3646
      %v3704 = vadd.f32 %v3407, %v3649
      %v3705 = vadd.f32 %v3410, %v3652
      %v3706 = vadd.f32 %v3413, %v3655
      %v3707 = vadd.f32 %v3416, %v3658
      %v3708 = vadd.f32 %v3419, %v3661
      %v3709 = vadd.f32 %v3422, %v3664
      %v3710 = vadd.f32 %v3425, %v3667
      %v3711 = vadd.f32 %v3428, %v3670
      %v3712 = vadd.f32 %v3431, %v3673
      %v3713 = vadd.f32 %v3434, %v3676
      %v3714 = vadd.f32 %v3437, %v3679
      %v3715 = vadd.f32 %v3440, %v3682
      %v3716 = vld [vmem:[#allocation3 + $0x10] sm:$0xff]
      %v3717 = vld [vmem:[#allocation3 + $0x18] sm:$0xff]
      %v3718 = vld [vmem:[#allocation3 + $0x20] sm:$0xff]
      %v3719 = vld [vmem:[#allocation3 + $0x28] sm:$0xff]
      %v3720 = vld [vmem:[#allocation3 + $0x30] sm:$0xff]
      %v3721 = vld [vmem:[#allocation3 + $0x38] sm:$0xff]
      %v3722 = vld [vmem:[#allocation3 + $0x40] sm:$0xff]
      %v3723 = vld [vmem:[#allocation3 + $0x48] sm:$0xff]
      %v3724 = vld [vmem:[#allocation3 + $0x50] sm:$0xff]
      %v3725 = vld [vmem:[#allocation3 + $0x58] sm:$0xff]
      %v3726 = vld [vmem:[#allocation3 + $0x60] sm:$0xff]
      %v3727 = vld [vmem:[#allocation3 + $0x68] sm:$0xff]
      %v3728 = vld [vmem:[#allocation3 + $0x70] sm:$0xff]
      %v3729 = vld [vmem:[#allocation3 + $0x78] sm:$0xff]
      %v3730 = vld [vmem:[#allocation3 + $0x80] sm:$0xff]
      %v3731 = vld [vmem:[#allocation3 + $0x88] sm:$0xff]
      %v3732 = vld [vmem:[#allocation3 + $0x90] sm:$0xff]
      %v3733 = vld [vmem:[#allocation3 + $0x98] sm:$0xff]
      %v3734 = vld [vmem:[#allocation3 + $0xa0] sm:$0xff]
      %v3735 = vld [vmem:[#allocation3 + $0xa8] sm:$0xff]
      %v3736 = vld [vmem:[#allocation3 + $0xb0] sm:$0xff]
      %v3737 = vld [vmem:[#allocation3 + $0xb8] sm:$0xff]
      %v3738 = vld [vmem:[#allocation3 + $0xc0] sm:$0xff]
      %v3739 = vld [vmem:[#allocation3 + $0xc8] sm:$0xff]
      %v3740 = vld [vmem:[#allocation3 + $0xd0] sm:$0xff]
      %v3741 = vld [vmem:[#allocation3 + $0xd8] sm:$0xff]
      %v3742 = vld [vmem:[#allocation3 + $0xe0] sm:$0xff]
      %v3743 = vld [vmem:[#allocation3 + $0xe8] sm:$0xff]
      %v3744 = vld [vmem:[#allocation3 + $0xf0] sm:$0xff]
      %v3745 = vld [vmem:[#allocation3 + $0xf8] sm:$0xff]
      %v3746 = vld [vmem:[#allocation3 + $0x100] sm:$0xff]
      %v3747 = vld [vmem:[#allocation3 + $0x108] sm:$0xff]
      %v3748 = vld [vmem:[%s2 + $0x18] sm:$0xff]
      %v3750 = vsel %vm3023, %v3716, 0
      %v3753 = vsel %vm3023, %v3717, 0
      %v3756 = vsel %vm3023, %v3718, 0
      %v3759 = vsel %vm3023, %v3719, 0
      %v3762 = vsel %vm3023, %v3720, 0
      %v3765 = vsel %vm3023, %v3721, 0
      %v3768 = vsel %vm3023, %v3722, 0
      %v3771 = vsel %vm3023, %v3723, 0
      %v3774 = vsel %vm3023, %v3724, 0
      %v3777 = vsel %vm3023, %v3725, 0
      %v3780 = vsel %vm3023, %v3726, 0
      %v3783 = vsel %vm3023, %v3727, 0
      %v3786 = vsel %vm3023, %v3728, 0
      %v3789 = vsel %vm3023, %v3729, 0
      %v3792 = vsel %vm3023, %v3730, 0
      %v3795 = vsel %vm3023, %v3731, 0
      %v3798 = vsel %vm3023, %v3732, 0
      %v3801 = vsel %vm3023, %v3733, 0
      %v3804 = vsel %vm3023, %v3734, 0
      %v3807 = vsel %vm3023, %v3735, 0
      %v3810 = vsel %vm3023, %v3736, 0
      %v3813 = vsel %vm3023, %v3737, 0
      %v3816 = vsel %vm3023, %v3738, 0
      %v3819 = vsel %vm3023, %v3739, 0
      %v3822 = vsel %vm3023, %v3740, 0
      %v3825 = vsel %vm3023, %v3741, 0
      %v3828 = vsel %vm3023, %v3742, 0
      %v3831 = vsel %vm3023, %v3743, 0
      %v3834 = vsel %vm3023, %v3744, 0
      %v3837 = vsel %vm3023, %v3745, 0
      %v3840 = vsel %vm3023, %v3746, 0
      %v3843 = vsel %vm3023, %v3747, 0
      %3845 = vmatpush.msra.mxu0 0.0
      %3846 = vmatpush.msra.mxu0 0.0
      %3847 = vmatpush.msra.mxu0 0.0
      %3848 = vmatpush.msra.mxu0 0.0
      %3849 = vmatpush.msra.mxu0 0.0
      %3850 = vmatpush.msra.mxu0 0.0
      %3851 = vmatpush.msra.mxu0 0.0
      %3852 = vmatpush.msra.mxu0 0.0
      %3853 = vmatpush.msra.mxu0 0.0
      %3854 = vmatpush.msra.mxu0 0.0
      %3855 = vmatpush.msra.mxu0 0.0
      %3856 = vmatpush.msra.mxu0 0.0
      %3857 = vmatpush.msra.mxu0 0.0
      %3858 = vmatpush.msra.mxu0 0.0
      %3859 = vmatpush.msra.mxu0 0.0
      %3860 = vmatpush.msra.mxu0 %v3748
      %3861 = vmatmul.f32.gmra.mxu0 %v3750
      %v3862 = vpop.f32.mrf.mxu0
      %v3863 = vadd.f32 0.0, %v3862
      %3864 = vmatmul.f32.gmra.mxu0 %v3753
      %v3865 = vpop.f32.mrf.mxu0
      %v3866 = vadd.f32 0.0, %v3865
      %3867 = vmatmul.f32.gmra.mxu0 %v3756
      %v3868 = vpop.f32.mrf.mxu0
      %v3869 = vadd.f32 0.0, %v3868
      %3870 = vmatmul.f32.gmra.mxu0 %v3759
      %v3871 = vpop.f32.mrf.mxu0
      %v3872 = vadd.f32 0.0, %v3871
      %3873 = vmatmul.f32.gmra.mxu0 %v3762
      %v3874 = vpop.f32.mrf.mxu0
      %v3875 = vadd.f32 0.0, %v3874
      %3876 = vmatmul.f32.gmra.mxu0 %v3765
      %v3877 = vpop.f32.mrf.mxu0
      %v3878 = vadd.f32 0.0, %v3877
      %3879 = vmatmul.f32.gmra.mxu0 %v3768
      %v3880 = vpop.f32.mrf.mxu0
      %v3881 = vadd.f32 0.0, %v3880
      %3882 = vmatmul.f32.gmra.mxu0 %v3771
      %v3883 = vpop.f32.mrf.mxu0
      %v3884 = vadd.f32 0.0, %v3883
      %3885 = vmatmul.f32.gmra.mxu0 %v3774
      %v3886 = vpop.f32.mrf.mxu0
      %v3887 = vadd.f32 0.0, %v3886
      %3888 = vmatmul.f32.gmra.mxu0 %v3777
      %v3889 = vpop.f32.mrf.mxu0
      %v3890 = vadd.f32 0.0, %v3889
      %3891 = vmatmul.f32.gmra.mxu0 %v3780
      %v3892 = vpop.f32.mrf.mxu0
      %v3893 = vadd.f32 0.0, %v3892
      %3894 = vmatmul.f32.gmra.mxu0 %v3783
      %v3895 = vpop.f32.mrf.mxu0
      %v3896 = vadd.f32 0.0, %v3895
      %3897 = vmatmul.f32.gmra.mxu0 %v3786
      %v3898 = vpop.f32.mrf.mxu0
      %v3899 = vadd.f32 0.0, %v3898
      %3900 = vmatmul.f32.gmra.mxu0 %v3789
      %v3901 = vpop.f32.mrf.mxu0
      %v3902 = vadd.f32 0.0, %v3901
      %3903 = vmatmul.f32.gmra.mxu0 %v3792
      %v3904 = vpop.f32.mrf.mxu0
      %v3905 = vadd.f32 0.0, %v3904
      %3906 = vmatmul.f32.gmra.mxu0 %v3795
      %v3907 = vpop.f32.mrf.mxu0
      %v3908 = vadd.f32 0.0, %v3907
      %3909 = vmatmul.f32.gmra.mxu0 %v3798
      %v3910 = vpop.f32.mrf.mxu0
      %v3911 = vadd.f32 0.0, %v3910
      %3912 = vmatmul.f32.gmra.mxu0 %v3801
      %v3913 = vpop.f32.mrf.mxu0
      %v3914 = vadd.f32 0.0, %v3913
      %3915 = vmatmul.f32.gmra.mxu0 %v3804
      %v3916 = vpop.f32.mrf.mxu0
      %v3917 = vadd.f32 0.0, %v3916
      %3918 = vmatmul.f32.gmra.mxu0 %v3807
      %v3919 = vpop.f32.mrf.mxu0
      %v3920 = vadd.f32 0.0, %v3919
      %3921 = vmatmul.f32.gmra.mxu0 %v3810
      %v3922 = vpop.f32.mrf.mxu0
      %v3923 = vadd.f32 0.0, %v3922
      %3924 = vmatmul.f32.gmra.mxu0 %v3813
      %v3925 = vpop.f32.mrf.mxu0
      %v3926 = vadd.f32 0.0, %v3925
      %3927 = vmatmul.f32.gmra.mxu0 %v3816
      %v3928 = vpop.f32.mrf.mxu0
      %v3929 = vadd.f32 0.0, %v3928
      %3930 = vmatmul.f32.gmra.mxu0 %v3819
      %v3931 = vpop.f32.mrf.mxu0
      %v3932 = vadd.f32 0.0, %v3931
      %3933 = vmatmul.f32.gmra.mxu0 %v3822
      %v3934 = vpop.f32.mrf.mxu0
      %v3935 = vadd.f32 0.0, %v3934
      %3936 = vmatmul.f32.gmra.mxu0 %v3825
      %v3937 = vpop.f32.mrf.mxu0
      %v3938 = vadd.f32 0.0, %v3937
      %3939 = vmatmul.f32.gmra.mxu0 %v3828
      %v3940 = vpop.f32.mrf.mxu0
      %v3941 = vadd.f32 0.0, %v3940
      %3942 = vmatmul.f32.gmra.mxu0 %v3831
      %v3943 = vpop.f32.mrf.mxu0
      %v3944 = vadd.f32 0.0, %v3943
      %3945 = vmatmul.f32.gmra.mxu0 %v3834
      %v3946 = vpop.f32.mrf.mxu0
      %v3947 = vadd.f32 0.0, %v3946
      %3948 = vmatmul.f32.gmra.mxu0 %v3837
      %v3949 = vpop.f32.mrf.mxu0
      %v3950 = vadd.f32 0.0, %v3949
      %3951 = vmatmul.f32.gmra.mxu0 %v3840
      %v3952 = vpop.f32.mrf.mxu0
      %v3953 = vadd.f32 0.0, %v3952
      %3954 = vmatmul.f32.gmra.mxu0 %v3843
      %v3955 = vpop.f32.mrf.mxu0
      %v3956 = vadd.f32 0.0, %v3955
      %3957 = vdwg.mxu0
      %v3958 = vadd.f32 %v3684, %v3863
      %v3959 = vadd.f32 %v3685, %v3866
      %v3960 = vadd.f32 %v3686, %v3869
      %v3961 = vadd.f32 %v3687, %v3872
      %v3962 = vadd.f32 %v3688, %v3875
      %v3963 = vadd.f32 %v3689, %v3878
      %v3964 = vadd.f32 %v3690, %v3881
      %v3965 = vadd.f32 %v3691, %v3884
      %v3966 = vadd.f32 %v3692, %v3887
      %v3967 = vadd.f32 %v3693, %v3890
      %v3968 = vadd.f32 %v3694, %v3893
      %v3969 = vadd.f32 %v3695, %v3896
      %v3970 = vadd.f32 %v3696, %v3899
      %v3971 = vadd.f32 %v3697, %v3902
      %v3972 = vadd.f32 %v3698, %v3905
      %v3973 = vadd.f32 %v3699, %v3908
      %v3974 = vadd.f32 %v3700, %v3911
      %v3975 = vadd.f32 %v3701, %v3914
      %v3976 = vadd.f32 %v3702, %v3917
      %v3977 = vadd.f32 %v3703, %v3920
      %v3978 = vadd.f32 %v3704, %v3923
      %v3979 = vadd.f32 %v3705, %v3926
      %v3980 = vadd.f32 %v3706, %v3929
      %v3981 = vadd.f32 %v3707, %v3932
      %v3982 = vadd.f32 %v3708, %v3935
      %v3983 = vadd.f32 %v3709, %v3938
      %v3984 = vadd.f32 %v3710, %v3941
      %v3985 = vadd.f32 %v3711, %v3944
      %v3986 = vadd.f32 %v3712, %v3947
      %v3987 = vadd.f32 %v3713, %v3950
      %v3988 = vadd.f32 %v3714, %v3953
      %v3989 = vadd.f32 %v3715, %v3956
      %v3990 = vld [vmem:[#allocation3 + $0x11] sm:$0xff]
      %v3991 = vld [vmem:[#allocation3 + $0x19] sm:$0xff]
      %v3992 = vld [vmem:[#allocation3 + $0x21] sm:$0xff]
      %v3993 = vld [vmem:[#allocation3 + $0x29] sm:$0xff]
      %v3994 = vld [vmem:[#allocation3 + $0x31] sm:$0xff]
      %v3995 = vld [vmem:[#allocation3 + $0x39] sm:$0xff]
      %v3996 = vld [vmem:[#allocation3 + $0x41] sm:$0xff]
      %v3997 = vld [vmem:[#allocation3 + $0x49] sm:$0xff]
      %v3998 = vld [vmem:[#allocation3 + $0x51] sm:$0xff]
      %v3999 = vld [vmem:[#allocation3 + $0x59] sm:$0xff]
      %v4000 = vld [vmem:[#allocation3 + $0x61] sm:$0xff]
      %v4001 = vld [vmem:[#allocation3 + $0x69] sm:$0xff]
      %v4002 = vld [vmem:[#allocation3 + $0x71] sm:$0xff]
      %v4003 = vld [vmem:[#allocation3 + $0x79] sm:$0xff]
      %v4004 = vld [vmem:[#allocation3 + $0x81] sm:$0xff]
      %v4005 = vld [vmem:[#allocation3 + $0x89] sm:$0xff]
      %v4006 = vld [vmem:[#allocation3 + $0x91] sm:$0xff]
      %v4007 = vld [vmem:[#allocation3 + $0x99] sm:$0xff]
      %v4008 = vld [vmem:[#allocation3 + $0xa1] sm:$0xff]
      %v4009 = vld [vmem:[#allocation3 + $0xa9] sm:$0xff]
      %v4010 = vld [vmem:[#allocation3 + $0xb1] sm:$0xff]
      %v4011 = vld [vmem:[#allocation3 + $0xb9] sm:$0xff]
      %v4012 = vld [vmem:[#allocation3 + $0xc1] sm:$0xff]
      %v4013 = vld [vmem:[#allocation3 + $0xc9] sm:$0xff]
      %v4014 = vld [vmem:[#allocation3 + $0xd1] sm:$0xff]
      %v4015 = vld [vmem:[#allocation3 + $0xd9] sm:$0xff]
      %v4016 = vld [vmem:[#allocation3 + $0xe1] sm:$0xff]
      %v4017 = vld [vmem:[#allocation3 + $0xe9] sm:$0xff]
      %v4018 = vld [vmem:[#allocation3 + $0xf1] sm:$0xff]
      %v4019 = vld [vmem:[#allocation3 + $0xf9] sm:$0xff]
      %v4020 = vld [vmem:[#allocation3 + $0x101] sm:$0xff]
      %v4021 = vld [vmem:[#allocation3 + $0x109] sm:$0xff]
      %v4022 = vld [vmem:[%s2 + $0x20] sm:$0xff]
      %v4024 = vsel %vm3023, %v3990, 0
      %v4027 = vsel %vm3023, %v3991, 0
      %v4030 = vsel %vm3023, %v3992, 0
      %v4033 = vsel %vm3023, %v3993, 0
      %v4036 = vsel %vm3023, %v3994, 0
      %v4039 = vsel %vm3023, %v3995, 0
      %v4042 = vsel %vm3023, %v3996, 0
      %v4045 = vsel %vm3023, %v3997, 0
      %v4048 = vsel %vm3023, %v3998, 0
      %v4051 = vsel %vm3023, %v3999, 0
      %v4054 = vsel %vm3023, %v4000, 0
      %v4057 = vsel %vm3023, %v4001, 0
      %v4060 = vsel %vm3023, %v4002, 0
      %v4063 = vsel %vm3023, %v4003, 0
      %v4066 = vsel %vm3023, %v4004, 0
      %v4069 = vsel %vm3023, %v4005, 0
      %v4072 = vsel %vm3023, %v4006, 0
      %v4075 = vsel %vm3023, %v4007, 0
      %v4078 = vsel %vm3023, %v4008, 0
      %v4081 = vsel %vm3023, %v4009, 0
      %v4084 = vsel %vm3023, %v4010, 0
      %v4087 = vsel %vm3023, %v4011, 0
      %v4090 = vsel %vm3023, %v4012, 0
      %v4093 = vsel %vm3023, %v4013, 0
      %v4096 = vsel %vm3023, %v4014, 0
      %v4099 = vsel %vm3023, %v4015, 0
      %v4102 = vsel %vm3023, %v4016, 0
      %v4105 = vsel %vm3023, %v4017, 0
      %v4108 = vsel %vm3023, %v4018, 0
      %v4111 = vsel %vm3023, %v4019, 0
      %v4114 = vsel %vm3023, %v4020, 0
      %v4117 = vsel %vm3023, %v4021, 0
      %4119 = vmatpush.msra.mxu0 0.0
      %4120 = vmatpush.msra.mxu0 0.0
      %4121 = vmatpush.msra.mxu0 0.0
      %4122 = vmatpush.msra.mxu0 0.0
      %4123 = vmatpush.msra.mxu0 0.0
      %4124 = vmatpush.msra.mxu0 0.0
      %4125 = vmatpush.msra.mxu0 0.0
      %4126 = vmatpush.msra.mxu0 0.0
      %4127 = vmatpush.msra.mxu0 0.0
      %4128 = vmatpush.msra.mxu0 0.0
      %4129 = vmatpush.msra.mxu0 0.0
      %4130 = vmatpush.msra.mxu0 0.0
      %4131 = vmatpush.msra.mxu0 0.0
      %4132 = vmatpush.msra.mxu0 0.0
      %4133 = vmatpush.msra.mxu0 0.0
      %4134 = vmatpush.msra.mxu0 %v4022
      %4135 = vmatmul.f32.gmra.mxu0 %v4024
      %v4136 = vpop.f32.mrf.mxu0
      %v4137 = vadd.f32 0.0, %v4136
      %4138 = vmatmul.f32.gmra.mxu0 %v4027
      %v4139 = vpop.f32.mrf.mxu0
      %v4140 = vadd.f32 0.0, %v4139
      %4141 = vmatmul.f32.gmra.mxu0 %v4030
      %v4142 = vpop.f32.mrf.mxu0
      %v4143 = vadd.f32 0.0, %v4142
      %4144 = vmatmul.f32.gmra.mxu0 %v4033
      %v4145 = vpop.f32.mrf.mxu0
      %v4146 = vadd.f32 0.0, %v4145
      %4147 = vmatmul.f32.gmra.mxu0 %v4036
      %v4148 = vpop.f32.mrf.mxu0
      %v4149 = vadd.f32 0.0, %v4148
      %4150 = vmatmul.f32.gmra.mxu0 %v4039
      %v4151 = vpop.f32.mrf.mxu0
      %v4152 = vadd.f32 0.0, %v4151
      %4153 = vmatmul.f32.gmra.mxu0 %v4042
      %v4154 = vpop.f32.mrf.mxu0
      %v4155 = vadd.f32 0.0, %v4154
      %4156 = vmatmul.f32.gmra.mxu0 %v4045
      %v4157 = vpop.f32.mrf.mxu0
      %v4158 = vadd.f32 0.0, %v4157
      %4159 = vmatmul.f32.gmra.mxu0 %v4048
      %v4160 = vpop.f32.mrf.mxu0
      %v4161 = vadd.f32 0.0, %v4160
      %4162 = vmatmul.f32.gmra.mxu0 %v4051
      %v4163 = vpop.f32.mrf.mxu0
      %v4164 = vadd.f32 0.0, %v4163
      %4165 = vmatmul.f32.gmra.mxu0 %v4054
      %v4166 = vpop.f32.mrf.mxu0
      %v4167 = vadd.f32 0.0, %v4166
      %4168 = vmatmul.f32.gmra.mxu0 %v4057
      %v4169 = vpop.f32.mrf.mxu0
      %v4170 = vadd.f32 0.0, %v4169
      %4171 = vmatmul.f32.gmra.mxu0 %v4060
      %v4172 = vpop.f32.mrf.mxu0
      %v4173 = vadd.f32 0.0, %v4172
      %4174 = vmatmul.f32.gmra.mxu0 %v4063
      %v4175 = vpop.f32.mrf.mxu0
      %v4176 = vadd.f32 0.0, %v4175
      %4177 = vmatmul.f32.gmra.mxu0 %v4066
      %v4178 = vpop.f32.mrf.mxu0
      %v4179 = vadd.f32 0.0, %v4178
      %4180 = vmatmul.f32.gmra.mxu0 %v4069
      %v4181 = vpop.f32.mrf.mxu0
      %v4182 = vadd.f32 0.0, %v4181
      %4183 = vmatmul.f32.gmra.mxu0 %v4072
      %v4184 = vpop.f32.mrf.mxu0
      %v4185 = vadd.f32 0.0, %v4184
      %4186 = vmatmul.f32.gmra.mxu0 %v4075
      %v4187 = vpop.f32.mrf.mxu0
      %v4188 = vadd.f32 0.0, %v4187
      %4189 = vmatmul.f32.gmra.mxu0 %v4078
      %v4190 = vpop.f32.mrf.mxu0
      %v4191 = vadd.f32 0.0, %v4190
      %4192 = vmatmul.f32.gmra.mxu0 %v4081
      %v4193 = vpop.f32.mrf.mxu0
      %v4194 = vadd.f32 0.0, %v4193
      %4195 = vmatmul.f32.gmra.mxu0 %v4084
      %v4196 = vpop.f32.mrf.mxu0
      %v4197 = vadd.f32 0.0, %v4196
      %4198 = vmatmul.f32.gmra.mxu0 %v4087
      %v4199 = vpop.f32.mrf.mxu0
      %v4200 = vadd.f32 0.0, %v4199
      %4201 = vmatmul.f32.gmra.mxu0 %v4090
      %v4202 = vpop.f32.mrf.mxu0
      %v4203 = vadd.f32 0.0, %v4202
      %4204 = vmatmul.f32.gmra.mxu0 %v4093
      %v4205 = vpop.f32.mrf.mxu0
      %v4206 = vadd.f32 0.0, %v4205
      %4207 = vmatmul.f32.gmra.mxu0 %v4096
      %v4208 = vpop.f32.mrf.mxu0
      %v4209 = vadd.f32 0.0, %v4208
      %4210 = vmatmul.f32.gmra.mxu0 %v4099
      %v4211 = vpop.f32.mrf.mxu0
      %v4212 = vadd.f32 0.0, %v4211
      %4213 = vmatmul.f32.gmra.mxu0 %v4102
      %v4214 = vpop.f32.mrf.mxu0
      %v4215 = vadd.f32 0.0, %v4214
      %4216 = vmatmul.f32.gmra.mxu0 %v4105
      %v4217 = vpop.f32.mrf.mxu0
      %v4218 = vadd.f32 0.0, %v4217
      %4219 = vmatmul.f32.gmra.mxu0 %v4108
      %v4220 = vpop.f32.mrf.mxu0
      %v4221 = vadd.f32 0.0, %v4220
      %4222 = vmatmul.f32.gmra.mxu0 %v4111
      %v4223 = vpop.f32.mrf.mxu0
      %v4224 = vadd.f32 0.0, %v4223
      %4225 = vmatmul.f32.gmra.mxu0 %v4114
      %v4226 = vpop.f32.mrf.mxu0
      %v4227 = vadd.f32 0.0, %v4226
      %4228 = vmatmul.f32.gmra.mxu0 %v4117
      %v4229 = vpop.f32.mrf.mxu0
      %v4230 = vadd.f32 0.0, %v4229
      %4231 = vdwg.mxu0
      %v4232 = vadd.f32 %v3958, %v4137
      %v4233 = vadd.f32 %v3959, %v4140
      %v4234 = vadd.f32 %v3960, %v4143
      %v4235 = vadd.f32 %v3961, %v4146
      %v4236 = vadd.f32 %v3962, %v4149
      %v4237 = vadd.f32 %v3963, %v4152
      %v4238 = vadd.f32 %v3964, %v4155
      %v4239 = vadd.f32 %v3965, %v4158
      %v4240 = vadd.f32 %v3966, %v4161
      %v4241 = vadd.f32 %v3967, %v4164
      %v4242 = vadd.f32 %v3968, %v4167
      %v4243 = vadd.f32 %v3969, %v4170
      %v4244 = vadd.f32 %v3970, %v4173
      %v4245 = vadd.f32 %v3971, %v4176
      %v4246 = vadd.f32 %v3972, %v4179
      %v4247 = vadd.f32 %v3973, %v4182
      %v4248 = vadd.f32 %v3974, %v4185
      %v4249 = vadd.f32 %v3975, %v4188
      %v4250 = vadd.f32 %v3976, %v4191
      %v4251 = vadd.f32 %v3977, %v4194
      %v4252 = vadd.f32 %v3978, %v4197
      %v4253 = vadd.f32 %v3979, %v4200
      %v4254 = vadd.f32 %v3980, %v4203
      %v4255 = vadd.f32 %v3981, %v4206
      %v4256 = vadd.f32 %v3982, %v4209
      %v4257 = vadd.f32 %v3983, %v4212
      %v4258 = vadd.f32 %v3984, %v4215
      %v4259 = vadd.f32 %v3985, %v4218
      %v4260 = vadd.f32 %v3986, %v4221
      %v4261 = vadd.f32 %v3987, %v4224
      %v4262 = vadd.f32 %v3988, %v4227
      %v4263 = vadd.f32 %v3989, %v4230
      %v4264 = vld [vmem:[#allocation3 + $0x12] sm:$0xff]
      %v4265 = vld [vmem:[#allocation3 + $0x1a] sm:$0xff]
      %v4266 = vld [vmem:[#allocation3 + $0x22] sm:$0xff]
      %v4267 = vld [vmem:[#allocation3 + $0x2a] sm:$0xff]
      %v4268 = vld [vmem:[#allocation3 + $0x32] sm:$0xff]
      %v4269 = vld [vmem:[#allocation3 + $0x3a] sm:$0xff]
      %v4270 = vld [vmem:[#allocation3 + $0x42] sm:$0xff]
      %v4271 = vld [vmem:[#allocation3 + $0x4a] sm:$0xff]
      %v4272 = vld [vmem:[#allocation3 + $0x52] sm:$0xff]
      %v4273 = vld [vmem:[#allocation3 + $0x5a] sm:$0xff]
      %v4274 = vld [vmem:[#allocation3 + $0x62] sm:$0xff]
      %v4275 = vld [vmem:[#allocation3 + $0x6a] sm:$0xff]
      %v4276 = vld [vmem:[#allocation3 + $0x72] sm:$0xff]
      %v4277 = vld [vmem:[#allocation3 + $0x7a] sm:$0xff]
      %v4278 = vld [vmem:[#allocation3 + $0x82] sm:$0xff]
      %v4279 = vld [vmem:[#allocation3 + $0x8a] sm:$0xff]
      %v4280 = vld [vmem:[#allocation3 + $0x92] sm:$0xff]
      %v4281 = vld [vmem:[#allocation3 + $0x9a] sm:$0xff]
      %v4282 = vld [vmem:[#allocation3 + $0xa2] sm:$0xff]
      %v4283 = vld [vmem:[#allocation3 + $0xaa] sm:$0xff]
      %v4284 = vld [vmem:[#allocation3 + $0xb2] sm:$0xff]
      %v4285 = vld [vmem:[#allocation3 + $0xba] sm:$0xff]
      %v4286 = vld [vmem:[#allocation3 + $0xc2] sm:$0xff]
      %v4287 = vld [vmem:[#allocation3 + $0xca] sm:$0xff]
      %v4288 = vld [vmem:[#allocation3 + $0xd2] sm:$0xff]
      %v4289 = vld [vmem:[#allocation3 + $0xda] sm:$0xff]
      %v4290 = vld [vmem:[#allocation3 + $0xe2] sm:$0xff]
      %v4291 = vld [vmem:[#allocation3 + $0xea] sm:$0xff]
      %v4292 = vld [vmem:[#allocation3 + $0xf2] sm:$0xff]
      %v4293 = vld [vmem:[#allocation3 + $0xfa] sm:$0xff]
      %v4294 = vld [vmem:[#allocation3 + $0x102] sm:$0xff]
      %v4295 = vld [vmem:[#allocation3 + $0x10a] sm:$0xff]
      %v4296 = vld [vmem:[%s2 + $0x28] sm:$0xff]
      %v4298 = vsel %vm3023, %v4264, 0
      %v4301 = vsel %vm3023, %v4265, 0
      %v4304 = vsel %vm3023, %v4266, 0
      %v4307 = vsel %vm3023, %v4267, 0
      %v4310 = vsel %vm3023, %v4268, 0
      %v4313 = vsel %vm3023, %v4269, 0
      %v4316 = vsel %vm3023, %v4270, 0
      %v4319 = vsel %vm3023, %v4271, 0
      %v4322 = vsel %vm3023, %v4272, 0
      %v4325 = vsel %vm3023, %v4273, 0
      %v4328 = vsel %vm3023, %v4274, 0
      %v4331 = vsel %vm3023, %v4275, 0
      %v4334 = vsel %vm3023, %v4276, 0
      %v4337 = vsel %vm3023, %v4277, 0
      %v4340 = vsel %vm3023, %v4278, 0
      %v4343 = vsel %vm3023, %v4279, 0
      %v4346 = vsel %vm3023, %v4280, 0
      %v4349 = vsel %vm3023, %v4281, 0
      %v4352 = vsel %vm3023, %v4282, 0
      %v4355 = vsel %vm3023, %v4283, 0
      %v4358 = vsel %vm3023, %v4284, 0
      %v4361 = vsel %vm3023, %v4285, 0
      %v4364 = vsel %vm3023, %v4286, 0
      %v4367 = vsel %vm3023, %v4287, 0
      %v4370 = vsel %vm3023, %v4288, 0
      %v4373 = vsel %vm3023, %v4289, 0
      %v4376 = vsel %vm3023, %v4290, 0
      %v4379 = vsel %vm3023, %v4291, 0
      %v4382 = vsel %vm3023, %v4292, 0
      %v4385 = vsel %vm3023, %v4293, 0
      %v4388 = vsel %vm3023, %v4294, 0
      %v4391 = vsel %vm3023, %v4295, 0
      %4393 = vmatpush.msra.mxu0 0.0
      %4394 = vmatpush.msra.mxu0 0.0
      %4395 = vmatpush.msra.mxu0 0.0
      %4396 = vmatpush.msra.mxu0 0.0
      %4397 = vmatpush.msra.mxu0 0.0
      %4398 = vmatpush.msra.mxu0 0.0
      %4399 = vmatpush.msra.mxu0 0.0
      %4400 = vmatpush.msra.mxu0 0.0
      %4401 = vmatpush.msra.mxu0 0.0
      %4402 = vmatpush.msra.mxu0 0.0
      %4403 = vmatpush.msra.mxu0 0.0
      %4404 = vmatpush.msra.mxu0 0.0
      %4405 = vmatpush.msra.mxu0 0.0
      %4406 = vmatpush.msra.mxu0 0.0
      %4407 = vmatpush.msra.mxu0 0.0
      %4408 = vmatpush.msra.mxu0 %v4296
      %4409 = vmatmul.f32.gmra.mxu0 %v4298
      %v4410 = vpop.f32.mrf.mxu0
      %v4411 = vadd.f32 0.0, %v4410
      %4412 = vmatmul.f32.gmra.mxu0 %v4301
      %v4413 = vpop.f32.mrf.mxu0
      %v4414 = vadd.f32 0.0, %v4413
      %4415 = vmatmul.f32.gmra.mxu0 %v4304
      %v4416 = vpop.f32.mrf.mxu0
      %v4417 = vadd.f32 0.0, %v4416
      %4418 = vmatmul.f32.gmra.mxu0 %v4307
      %v4419 = vpop.f32.mrf.mxu0
      %v4420 = vadd.f32 0.0, %v4419
      %4421 = vmatmul.f32.gmra.mxu0 %v4310
      %v4422 = vpop.f32.mrf.mxu0
      %v4423 = vadd.f32 0.0, %v4422
      %4424 = vmatmul.f32.gmra.mxu0 %v4313
      %v4425 = vpop.f32.mrf.mxu0
      %v4426 = vadd.f32 0.0, %v4425
      %4427 = vmatmul.f32.gmra.mxu0 %v4316
      %v4428 = vpop.f32.mrf.mxu0
      %v4429 = vadd.f32 0.0, %v4428
      %4430 = vmatmul.f32.gmra.mxu0 %v4319
      %v4431 = vpop.f32.mrf.mxu0
      %v4432 = vadd.f32 0.0, %v4431
      %4433 = vmatmul.f32.gmra.mxu0 %v4322
      %v4434 = vpop.f32.mrf.mxu0
      %v4435 = vadd.f32 0.0, %v4434
      %4436 = vmatmul.f32.gmra.mxu0 %v4325
      %v4437 = vpop.f32.mrf.mxu0
      %v4438 = vadd.f32 0.0, %v4437
      %4439 = vmatmul.f32.gmra.mxu0 %v4328
      %v4440 = vpop.f32.mrf.mxu0
      %v4441 = vadd.f32 0.0, %v4440
      %4442 = vmatmul.f32.gmra.mxu0 %v4331
      %v4443 = vpop.f32.mrf.mxu0
      %v4444 = vadd.f32 0.0, %v4443
      %4445 = vmatmul.f32.gmra.mxu0 %v4334
      %v4446 = vpop.f32.mrf.mxu0
      %v4447 = vadd.f32 0.0, %v4446
      %4448 = vmatmul.f32.gmra.mxu0 %v4337
      %v4449 = vpop.f32.mrf.mxu0
      %v4450 = vadd.f32 0.0, %v4449
      %4451 = vmatmul.f32.gmra.mxu0 %v4340
      %v4452 = vpop.f32.mrf.mxu0
      %v4453 = vadd.f32 0.0, %v4452
      %4454 = vmatmul.f32.gmra.mxu0 %v4343
      %v4455 = vpop.f32.mrf.mxu0
      %v4456 = vadd.f32 0.0, %v4455
      %4457 = vmatmul.f32.gmra.mxu0 %v4346
      %v4458 = vpop.f32.mrf.mxu0
      %v4459 = vadd.f32 0.0, %v4458
      %4460 = vmatmul.f32.gmra.mxu0 %v4349
      %v4461 = vpop.f32.mrf.mxu0
      %v4462 = vadd.f32 0.0, %v4461
      %4463 = vmatmul.f32.gmra.mxu0 %v4352
      %v4464 = vpop.f32.mrf.mxu0
      %v4465 = vadd.f32 0.0, %v4464
      %4466 = vmatmul.f32.gmra.mxu0 %v4355
      %v4467 = vpop.f32.mrf.mxu0
      %v4468 = vadd.f32 0.0, %v4467
      %4469 = vmatmul.f32.gmra.mxu0 %v4358
      %v4470 = vpop.f32.mrf.mxu0
      %v4471 = vadd.f32 0.0, %v4470
      %4472 = vmatmul.f32.gmra.mxu0 %v4361
      %v4473 = vpop.f32.mrf.mxu0
      %v4474 = vadd.f32 0.0, %v4473
      %4475 = vmatmul.f32.gmra.mxu0 %v4364
      %v4476 = vpop.f32.mrf.mxu0
      %v4477 = vadd.f32 0.0, %v4476
      %4478 = vmatmul.f32.gmra.mxu0 %v4367
      %v4479 = vpop.f32.mrf.mxu0
      %v4480 = vadd.f32 0.0, %v4479
      %4481 = vmatmul.f32.gmra.mxu0 %v4370
      %v4482 = vpop.f32.mrf.mxu0
      %v4483 = vadd.f32 0.0, %v4482
      %4484 = vmatmul.f32.gmra.mxu0 %v4373
      %v4485 = vpop.f32.mrf.mxu0
      %v4486 = vadd.f32 0.0, %v4485
      %4487 = vmatmul.f32.gmra.mxu0 %v4376
      %v4488 = vpop.f32.mrf.mxu0
      %v4489 = vadd.f32 0.0, %v4488
      %4490 = vmatmul.f32.gmra.mxu0 %v4379
      %v4491 = vpop.f32.mrf.mxu0
      %v4492 = vadd.f32 0.0, %v4491
      %4493 = vmatmul.f32.gmra.mxu0 %v4382
      %v4494 = vpop.f32.mrf.mxu0
      %v4495 = vadd.f32 0.0, %v4494
      %4496 = vmatmul.f32.gmra.mxu0 %v4385
      %v4497 = vpop.f32.mrf.mxu0
      %v4498 = vadd.f32 0.0, %v4497
      %4499 = vmatmul.f32.gmra.mxu0 %v4388
      %v4500 = vpop.f32.mrf.mxu0
      %v4501 = vadd.f32 0.0, %v4500
      %4502 = vmatmul.f32.gmra.mxu0 %v4391
      %v4503 = vpop.f32.mrf.mxu0
      %v4504 = vadd.f32 0.0, %v4503
      %4505 = vdwg.mxu0
      %v4506 = vadd.f32 %v4232, %v4411
      %v4507 = vadd.f32 %v4233, %v4414
      %v4508 = vadd.f32 %v4234, %v4417
      %v4509 = vadd.f32 %v4235, %v4420
      %v4510 = vadd.f32 %v4236, %v4423
      %v4511 = vadd.f32 %v4237, %v4426
      %v4512 = vadd.f32 %v4238, %v4429
      %v4513 = vadd.f32 %v4239, %v4432
      %v4514 = vadd.f32 %v4240, %v4435
      %v4515 = vadd.f32 %v4241, %v4438
      %v4516 = vadd.f32 %v4242, %v4441
      %v4517 = vadd.f32 %v4243, %v4444
      %v4518 = vadd.f32 %v4244, %v4447
      %v4519 = vadd.f32 %v4245, %v4450
      %v4520 = vadd.f32 %v4246, %v4453
      %v4521 = vadd.f32 %v4247, %v4456
      %v4522 = vadd.f32 %v4248, %v4459
      %v4523 = vadd.f32 %v4249, %v4462
      %v4524 = vadd.f32 %v4250, %v4465
      %v4525 = vadd.f32 %v4251, %v4468
      %v4526 = vadd.f32 %v4252, %v4471
      %v4527 = vadd.f32 %v4253, %v4474
      %v4528 = vadd.f32 %v4254, %v4477
      %v4529 = vadd.f32 %v4255, %v4480
      %v4530 = vadd.f32 %v4256, %v4483
      %v4531 = vadd.f32 %v4257, %v4486
      %v4532 = vadd.f32 %v4258, %v4489
      %v4533 = vadd.f32 %v4259, %v4492
      %v4534 = vadd.f32 %v4260, %v4495
      %v4535 = vadd.f32 %v4261, %v4498
      %v4536 = vadd.f32 %v4262, %v4501
      %v4537 = vadd.f32 %v4263, %v4504
      %v4538 = vld [vmem:[#allocation3 + $0x20] sm:$0xff]
      %v4539 = vld [vmem:[#allocation3 + $0x28] sm:$0xff]
      %v4540 = vld [vmem:[#allocation3 + $0x30] sm:$0xff]
      %v4541 = vld [vmem:[#allocation3 + $0x38] sm:$0xff]
      %v4542 = vld [vmem:[#allocation3 + $0x40] sm:$0xff]
      %v4543 = vld [vmem:[#allocation3 + $0x48] sm:$0xff]
      %v4544 = vld [vmem:[#allocation3 + $0x50] sm:$0xff]
      %v4545 = vld [vmem:[#allocation3 + $0x58] sm:$0xff]
      %v4546 = vld [vmem:[#allocation3 + $0x60] sm:$0xff]
      %v4547 = vld [vmem:[#allocation3 + $0x68] sm:$0xff]
      %v4548 = vld [vmem:[#allocation3 + $0x70] sm:$0xff]
      %v4549 = vld [vmem:[#allocation3 + $0x78] sm:$0xff]
      %v4550 = vld [vmem:[#allocation3 + $0x80] sm:$0xff]
      %v4551 = vld [vmem:[#allocation3 + $0x88] sm:$0xff]
      %v4552 = vld [vmem:[#allocation3 + $0x90] sm:$0xff]
      %v4553 = vld [vmem:[#allocation3 + $0x98] sm:$0xff]
      %v4554 = vld [vmem:[#allocation3 + $0xa0] sm:$0xff]
      %v4555 = vld [vmem:[#allocation3 + $0xa8] sm:$0xff]
      %v4556 = vld [vmem:[#allocation3 + $0xb0] sm:$0xff]
      %v4557 = vld [vmem:[#allocation3 + $0xb8] sm:$0xff]
      %v4558 = vld [vmem:[#allocation3 + $0xc0] sm:$0xff]
      %v4559 = vld [vmem:[#allocation3 + $0xc8] sm:$0xff]
      %v4560 = vld [vmem:[#allocation3 + $0xd0] sm:$0xff]
      %v4561 = vld [vmem:[#allocation3 + $0xd8] sm:$0xff]
      %v4562 = vld [vmem:[#allocation3 + $0xe0] sm:$0xff]
      %v4563 = vld [vmem:[#allocation3 + $0xe8] sm:$0xff]
      %v4564 = vld [vmem:[#allocation3 + $0xf0] sm:$0xff]
      %v4565 = vld [vmem:[#allocation3 + $0xf8] sm:$0xff]
      %v4566 = vld [vmem:[#allocation3 + $0x100] sm:$0xff]
      %v4567 = vld [vmem:[#allocation3 + $0x108] sm:$0xff]
      %v4568 = vld [vmem:[#allocation3 + $0x110] sm:$0xff]
      %v4569 = vld [vmem:[#allocation3 + $0x118] sm:$0xff]
      %v4570 = vld [vmem:[%s2 + $0x30] sm:$0xff]
      %v4572 = vsel %vm3023, %v4538, 0
      %v4575 = vsel %vm3023, %v4539, 0
      %v4578 = vsel %vm3023, %v4540, 0
      %v4581 = vsel %vm3023, %v4541, 0
      %v4584 = vsel %vm3023, %v4542, 0
      %v4587 = vsel %vm3023, %v4543, 0
      %v4590 = vsel %vm3023, %v4544, 0
      %v4593 = vsel %vm3023, %v4545, 0
      %v4596 = vsel %vm3023, %v4546, 0
      %v4599 = vsel %vm3023, %v4547, 0
      %v4602 = vsel %vm3023, %v4548, 0
      %v4605 = vsel %vm3023, %v4549, 0
      %v4608 = vsel %vm3023, %v4550, 0
      %v4611 = vsel %vm3023, %v4551, 0
      %v4614 = vsel %vm3023, %v4552, 0
      %v4617 = vsel %vm3023, %v4553, 0
      %v4620 = vsel %vm3023, %v4554, 0
      %v4623 = vsel %vm3023, %v4555, 0
      %v4626 = vsel %vm3023, %v4556, 0
      %v4629 = vsel %vm3023, %v4557, 0
      %v4632 = vsel %vm3023, %v4558, 0
      %v4635 = vsel %vm3023, %v4559, 0
      %v4638 = vsel %vm3023, %v4560, 0
      %v4641 = vsel %vm3023, %v4561, 0
      %v4644 = vsel %vm3023, %v4562, 0
      %v4647 = vsel %vm3023, %v4563, 0
      %v4650 = vsel %vm3023, %v4564, 0
      %v4653 = vsel %vm3023, %v4565, 0
      %v4656 = vsel %vm3023, %v4566, 0
      %v4659 = vsel %vm3023, %v4567, 0
      %v4662 = vsel %vm3023, %v4568, 0
      %v4665 = vsel %vm3023, %v4569, 0
      %4667 = vmatpush.msra.mxu0 0.0
      %4668 = vmatpush.msra.mxu0 0.0
      %4669 = vmatpush.msra.mxu0 0.0
      %4670 = vmatpush.msra.mxu0 0.0
      %4671 = vmatpush.msra.mxu0 0.0
      %4672 = vmatpush.msra.mxu0 0.0
      %4673 = vmatpush.msra.mxu0 0.0
      %4674 = vmatpush.msra.mxu0 0.0
      %4675 = vmatpush.msra.mxu0 0.0
      %4676 = vmatpush.msra.mxu0 0.0
      %4677 = vmatpush.msra.mxu0 0.0
      %4678 = vmatpush.msra.mxu0 0.0
      %4679 = vmatpush.msra.mxu0 0.0
      %4680 = vmatpush.msra.mxu0 0.0
      %4681 = vmatpush.msra.mxu0 0.0
      %4682 = vmatpush.msra.mxu0 %v4570
      %4683 = vmatmul.f32.gmra.mxu0 %v4572
      %v4684 = vpop.f32.mrf.mxu0
      %v4685 = vadd.f32 0.0, %v4684
      %4686 = vmatmul.f32.gmra.mxu0 %v4575
      %v4687 = vpop.f32.mrf.mxu0
      %v4688 = vadd.f32 0.0, %v4687
      %4689 = vmatmul.f32.gmra.mxu0 %v4578
      %v4690 = vpop.f32.mrf.mxu0
      %v4691 = vadd.f32 0.0, %v4690
      %4692 = vmatmul.f32.gmra.mxu0 %v4581
      %v4693 = vpop.f32.mrf.mxu0
      %v4694 = vadd.f32 0.0, %v4693
      %4695 = vmatmul.f32.gmra.mxu0 %v4584
      %v4696 = vpop.f32.mrf.mxu0
      %v4697 = vadd.f32 0.0, %v4696
      %4698 = vmatmul.f32.gmra.mxu0 %v4587
      %v4699 = vpop.f32.mrf.mxu0
      %v4700 = vadd.f32 0.0, %v4699
      %4701 = vmatmul.f32.gmra.mxu0 %v4590
      %v4702 = vpop.f32.mrf.mxu0
      %v4703 = vadd.f32 0.0, %v4702
      %4704 = vmatmul.f32.gmra.mxu0 %v4593
      %v4705 = vpop.f32.mrf.mxu0
      %v4706 = vadd.f32 0.0, %v4705
      %4707 = vmatmul.f32.gmra.mxu0 %v4596
      %v4708 = vpop.f32.mrf.mxu0
      %v4709 = vadd.f32 0.0, %v4708
      %4710 = vmatmul.f32.gmra.mxu0 %v4599
      %v4711 = vpop.f32.mrf.mxu0
      %v4712 = vadd.f32 0.0, %v4711
      %4713 = vmatmul.f32.gmra.mxu0 %v4602
      %v4714 = vpop.f32.mrf.mxu0
      %v4715 = vadd.f32 0.0, %v4714
      %4716 = vmatmul.f32.gmra.mxu0 %v4605
      %v4717 = vpop.f32.mrf.mxu0
      %v4718 = vadd.f32 0.0, %v4717
      %4719 = vmatmul.f32.gmra.mxu0 %v4608
      %v4720 = vpop.f32.mrf.mxu0
      %v4721 = vadd.f32 0.0, %v4720
      %4722 = vmatmul.f32.gmra.mxu0 %v4611
      %v4723 = vpop.f32.mrf.mxu0
      %v4724 = vadd.f32 0.0, %v4723
      %4725 = vmatmul.f32.gmra.mxu0 %v4614
      %v4726 = vpop.f32.mrf.mxu0
      %v4727 = vadd.f32 0.0, %v4726
      %4728 = vmatmul.f32.gmra.mxu0 %v4617
      %v4729 = vpop.f32.mrf.mxu0
      %v4730 = vadd.f32 0.0, %v4729
      %4731 = vmatmul.f32.gmra.mxu0 %v4620
      %v4732 = vpop.f32.mrf.mxu0
      %v4733 = vadd.f32 0.0, %v4732
      %4734 = vmatmul.f32.gmra.mxu0 %v4623
      %v4735 = vpop.f32.mrf.mxu0
      %v4736 = vadd.f32 0.0, %v4735
      %4737 = vmatmul.f32.gmra.mxu0 %v4626
      %v4738 = vpop.f32.mrf.mxu0
      %v4739 = vadd.f32 0.0, %v4738
      %4740 = vmatmul.f32.gmra.mxu0 %v4629
      %v4741 = vpop.f32.mrf.mxu0
      %v4742 = vadd.f32 0.0, %v4741
      %4743 = vmatmul.f32.gmra.mxu0 %v4632
      %v4744 = vpop.f32.mrf.mxu0
      %v4745 = vadd.f32 0.0, %v4744
      %4746 = vmatmul.f32.gmra.mxu0 %v4635
      %v4747 = vpop.f32.mrf.mxu0
      %v4748 = vadd.f32 0.0, %v4747
      %4749 = vmatmul.f32.gmra.mxu0 %v4638
      %v4750 = vpop.f32.mrf.mxu0
      %v4751 = vadd.f32 0.0, %v4750
      %4752 = vmatmul.f32.gmra.mxu0 %v4641
      %v4753 = vpop.f32.mrf.mxu0
      %v4754 = vadd.f32 0.0, %v4753
      %4755 = vmatmul.f32.gmra.mxu0 %v4644
      %v4756 = vpop.f32.mrf.mxu0
      %v4757 = vadd.f32 0.0, %v4756
      %4758 = vmatmul.f32.gmra.mxu0 %v4647
      %v4759 = vpop.f32.mrf.mxu0
      %v4760 = vadd.f32 0.0, %v4759
      %4761 = vmatmul.f32.gmra.mxu0 %v4650
      %v4762 = vpop.f32.mrf.mxu0
      %v4763 = vadd.f32 0.0, %v4762
      %4764 = vmatmul.f32.gmra.mxu0 %v4653
      %v4765 = vpop.f32.mrf.mxu0
      %v4766 = vadd.f32 0.0, %v4765
      %4767 = vmatmul.f32.gmra.mxu0 %v4656
      %v4768 = vpop.f32.mrf.mxu0
      %v4769 = vadd.f32 0.0, %v4768
      %4770 = vmatmul.f32.gmra.mxu0 %v4659
      %v4771 = vpop.f32.mrf.mxu0
      %v4772 = vadd.f32 0.0, %v4771
      %4773 = vmatmul.f32.gmra.mxu0 %v4662
      %v4774 = vpop.f32.mrf.mxu0
      %v4775 = vadd.f32 0.0, %v4774
      %4776 = vmatmul.f32.gmra.mxu0 %v4665
      %v4777 = vpop.f32.mrf.mxu0
      %v4778 = vadd.f32 0.0, %v4777
      %4779 = vdwg.mxu0
      %v4780 = vadd.f32 %v4506, %v4685
      %v4781 = vadd.f32 %v4507, %v4688
      %v4782 = vadd.f32 %v4508, %v4691
      %v4783 = vadd.f32 %v4509, %v4694
      %v4784 = vadd.f32 %v4510, %v4697
      %v4785 = vadd.f32 %v4511, %v4700
      %v4786 = vadd.f32 %v4512, %v4703
      %v4787 = vadd.f32 %v4513, %v4706
      %v4788 = vadd.f32 %v4514, %v4709
      %v4789 = vadd.f32 %v4515, %v4712
      %v4790 = vadd.f32 %v4516, %v4715
      %v4791 = vadd.f32 %v4517, %v4718
      %v4792 = vadd.f32 %v4518, %v4721
      %v4793 = vadd.f32 %v4519, %v4724
      %v4794 = vadd.f32 %v4520, %v4727
      %v4795 = vadd.f32 %v4521, %v4730
      %v4796 = vadd.f32 %v4522, %v4733
      %v4797 = vadd.f32 %v4523, %v4736
      %v4798 = vadd.f32 %v4524, %v4739
      %v4799 = vadd.f32 %v4525, %v4742
      %v4800 = vadd.f32 %v4526, %v4745
      %v4801 = vadd.f32 %v4527, %v4748
      %v4802 = vadd.f32 %v4528, %v4751
      %v4803 = vadd.f32 %v4529, %v4754
      %v4804 = vadd.f32 %v4530, %v4757
      %v4805 = vadd.f32 %v4531, %v4760
      %v4806 = vadd.f32 %v4532, %v4763
      %v4807 = vadd.f32 %v4533, %v4766
      %v4808 = vadd.f32 %v4534, %v4769
      %v4809 = vadd.f32 %v4535, %v4772
      %v4810 = vadd.f32 %v4536, %v4775
      %v4811 = vadd.f32 %v4537, %v4778
      %v4812 = vld [vmem:[#allocation3 + $0x21] sm:$0xff]
      %v4813 = vld [vmem:[#allocation3 + $0x29] sm:$0xff]
      %v4814 = vld [vmem:[#allocation3 + $0x31] sm:$0xff]
      %v4815 = vld [vmem:[#allocation3 + $0x39] sm:$0xff]
      %v4816 = vld [vmem:[#allocation3 + $0x41] sm:$0xff]
      %v4817 = vld [vmem:[#allocation3 + $0x49] sm:$0xff]
      %v4818 = vld [vmem:[#allocation3 + $0x51] sm:$0xff]
      %v4819 = vld [vmem:[#allocation3 + $0x59] sm:$0xff]
      %v4820 = vld [vmem:[#allocation3 + $0x61] sm:$0xff]
      %v4821 = vld [vmem:[#allocation3 + $0x69] sm:$0xff]
      %v4822 = vld [vmem:[#allocation3 + $0x71] sm:$0xff]
      %v4823 = vld [vmem:[#allocation3 + $0x79] sm:$0xff]
      %v4824 = vld [vmem:[#allocation3 + $0x81] sm:$0xff]
      %v4825 = vld [vmem:[#allocation3 + $0x89] sm:$0xff]
      %v4826 = vld [vmem:[#allocation3 + $0x91] sm:$0xff]
      %v4827 = vld [vmem:[#allocation3 + $0x99] sm:$0xff]
      %v4828 = vld [vmem:[#allocation3 + $0xa1] sm:$0xff]
      %v4829 = vld [vmem:[#allocation3 + $0xa9] sm:$0xff]
      %v4830 = vld [vmem:[#allocation3 + $0xb1] sm:$0xff]
      %v4831 = vld [vmem:[#allocation3 + $0xb9] sm:$0xff]
      %v4832 = vld [vmem:[#allocation3 + $0xc1] sm:$0xff]
      %v4833 = vld [vmem:[#allocation3 + $0xc9] sm:$0xff]
      %v4834 = vld [vmem:[#allocation3 + $0xd1] sm:$0xff]
      %v4835 = vld [vmem:[#allocation3 + $0xd9] sm:$0xff]
      %v4836 = vld [vmem:[#allocation3 + $0xe1] sm:$0xff]
      %v4837 = vld [vmem:[#allocation3 + $0xe9] sm:$0xff]
      %v4838 = vld [vmem:[#allocation3 + $0xf1] sm:$0xff]
      %v4839 = vld [vmem:[#allocation3 + $0xf9] sm:$0xff]
      %v4840 = vld [vmem:[#allocation3 + $0x101] sm:$0xff]
      %v4841 = vld [vmem:[#allocation3 + $0x109] sm:$0xff]
      %v4842 = vld [vmem:[#allocation3 + $0x111] sm:$0xff]
      %v4843 = vld [vmem:[#allocation3 + $0x119] sm:$0xff]
      %v4844 = vld [vmem:[%s2 + $0x38] sm:$0xff]
      %v4846 = vsel %vm3023, %v4812, 0
      %v4849 = vsel %vm3023, %v4813, 0
      %v4852 = vsel %vm3023, %v4814, 0
      %v4855 = vsel %vm3023, %v4815, 0
      %v4858 = vsel %vm3023, %v4816, 0
      %v4861 = vsel %vm3023, %v4817, 0
      %v4864 = vsel %vm3023, %v4818, 0
      %v4867 = vsel %vm3023, %v4819, 0
      %v4870 = vsel %vm3023, %v4820, 0
      %v4873 = vsel %vm3023, %v4821, 0
      %v4876 = vsel %vm3023, %v4822, 0
      %v4879 = vsel %vm3023, %v4823, 0
      %v4882 = vsel %vm3023, %v4824, 0
      %v4885 = vsel %vm3023, %v4825, 0
      %v4888 = vsel %vm3023, %v4826, 0
      %v4891 = vsel %vm3023, %v4827, 0
      %v4894 = vsel %vm3023, %v4828, 0
      %v4897 = vsel %vm3023, %v4829, 0
      %v4900 = vsel %vm3023, %v4830, 0
      %v4903 = vsel %vm3023, %v4831, 0
      %v4906 = vsel %vm3023, %v4832, 0
      %v4909 = vsel %vm3023, %v4833, 0
      %v4912 = vsel %vm3023, %v4834, 0
      %v4915 = vsel %vm3023, %v4835, 0
      %v4918 = vsel %vm3023, %v4836, 0
      %v4921 = vsel %vm3023, %v4837, 0
      %v4924 = vsel %vm3023, %v4838, 0
      %v4927 = vsel %vm3023, %v4839, 0
      %v4930 = vsel %vm3023, %v4840, 0
      %v4933 = vsel %vm3023, %v4841, 0
      %v4936 = vsel %vm3023, %v4842, 0
      %v4939 = vsel %vm3023, %v4843, 0
      %4941 = vmatpush.msra.mxu0 0.0
      %4942 = vmatpush.msra.mxu0 0.0
      %4943 = vmatpush.msra.mxu0 0.0
      %4944 = vmatpush.msra.mxu0 0.0
      %4945 = vmatpush.msra.mxu0 0.0
      %4946 = vmatpush.msra.mxu0 0.0
      %4947 = vmatpush.msra.mxu0 0.0
      %4948 = vmatpush.msra.mxu0 0.0
      %4949 = vmatpush.msra.mxu0 0.0
      %4950 = vmatpush.msra.mxu0 0.0
      %4951 = vmatpush.msra.mxu0 0.0
      %4952 = vmatpush.msra.mxu0 0.0
      %4953 = vmatpush.msra.mxu0 0.0
      %4954 = vmatpush.msra.mxu0 0.0
      %4955 = vmatpush.msra.mxu0 0.0
      %4956 = vmatpush.msra.mxu0 %v4844
      %4957 = vmatmul.f32.gmra.mxu0 %v4846
      %v4958 = vpop.f32.mrf.mxu0
      %v4959 = vadd.f32 0.0, %v4958
      %4960 = vmatmul.f32.gmra.mxu0 %v4849
      %v4961 = vpop.f32.mrf.mxu0
      %v4962 = vadd.f32 0.0, %v4961
      %4963 = vmatmul.f32.gmra.mxu0 %v4852
      %v4964 = vpop.f32.mrf.mxu0
      %v4965 = vadd.f32 0.0, %v4964
      %4966 = vmatmul.f32.gmra.mxu0 %v4855
      %v4967 = vpop.f32.mrf.mxu0
      %v4968 = vadd.f32 0.0, %v4967
      %4969 = vmatmul.f32.gmra.mxu0 %v4858
      %v4970 = vpop.f32.mrf.mxu0
      %v4971 = vadd.f32 0.0, %v4970
      %4972 = vmatmul.f32.gmra.mxu0 %v4861
      %v4973 = vpop.f32.mrf.mxu0
      %v4974 = vadd.f32 0.0, %v4973
      %4975 = vmatmul.f32.gmra.mxu0 %v4864
      %v4976 = vpop.f32.mrf.mxu0
      %v4977 = vadd.f32 0.0, %v4976
      %4978 = vmatmul.f32.gmra.mxu0 %v4867
      %v4979 = vpop.f32.mrf.mxu0
      %v4980 = vadd.f32 0.0, %v4979
      %4981 = vmatmul.f32.gmra.mxu0 %v4870
      %v4982 = vpop.f32.mrf.mxu0
      %v4983 = vadd.f32 0.0, %v4982
      %4984 = vmatmul.f32.gmra.mxu0 %v4873
      %v4985 = vpop.f32.mrf.mxu0
      %v4986 = vadd.f32 0.0, %v4985
      %4987 = vmatmul.f32.gmra.mxu0 %v4876
      %v4988 = vpop.f32.mrf.mxu0
      %v4989 = vadd.f32 0.0, %v4988
      %4990 = vmatmul.f32.gmra.mxu0 %v4879
      %v4991 = vpop.f32.mrf.mxu0
      %v4992 = vadd.f32 0.0, %v4991
      %4993 = vmatmul.f32.gmra.mxu0 %v4882
      %v4994 = vpop.f32.mrf.mxu0
      %v4995 = vadd.f32 0.0, %v4994
      %4996 = vmatmul.f32.gmra.mxu0 %v4885
      %v4997 = vpop.f32.mrf.mxu0
      %v4998 = vadd.f32 0.0, %v4997
      %4999 = vmatmul.f32.gmra.mxu0 %v4888
      %v5000 = vpop.f32.mrf.mxu0
      %v5001 = vadd.f32 0.0, %v5000
      %5002 = vmatmul.f32.gmra.mxu0 %v4891
      %v5003 = vpop.f32.mrf.mxu0
      %v5004 = vadd.f32 0.0, %v5003
      %5005 = vmatmul.f32.gmra.mxu0 %v4894
      %v5006 = vpop.f32.mrf.mxu0
      %v5007 = vadd.f32 0.0, %v5006
      %5008 = vmatmul.f32.gmra.mxu0 %v4897
      %v5009 = vpop.f32.mrf.mxu0
      %v5010 = vadd.f32 0.0, %v5009
      %5011 = vmatmul.f32.gmra.mxu0 %v4900
      %v5012 = vpop.f32.mrf.mxu0
      %v5013 = vadd.f32 0.0, %v5012
      %5014 = vmatmul.f32.gmra.mxu0 %v4903
      %v5015 = vpop.f32.mrf.mxu0
      %v5016 = vadd.f32 0.0, %v5015
      %5017 = vmatmul.f32.gmra.mxu0 %v4906
      %v5018 = vpop.f32.mrf.mxu0
      %v5019 = vadd.f32 0.0, %v5018
      %5020 = vmatmul.f32.gmra.mxu0 %v4909
      %v5021 = vpop.f32.mrf.mxu0
      %v5022 = vadd.f32 0.0, %v5021
      %5023 = vmatmul.f32.gmra.mxu0 %v4912
      %v5024 = vpop.f32.mrf.mxu0
      %v5025 = vadd.f32 0.0, %v5024
      %5026 = vmatmul.f32.gmra.mxu0 %v4915
      %v5027 = vpop.f32.mrf.mxu0
      %v5028 = vadd.f32 0.0, %v5027
      %5029 = vmatmul.f32.gmra.mxu0 %v4918
      %v5030 = vpop.f32.mrf.mxu0
      %v5031 = vadd.f32 0.0, %v5030
      %5032 = vmatmul.f32.gmra.mxu0 %v4921
      %v5033 = vpop.f32.mrf.mxu0
      %v5034 = vadd.f32 0.0, %v5033
      %5035 = vmatmul.f32.gmra.mxu0 %v4924
      %v5036 = vpop.f32.mrf.mxu0
      %v5037 = vadd.f32 0.0, %v5036
      %5038 = vmatmul.f32.gmra.mxu0 %v4927
      %v5039 = vpop.f32.mrf.mxu0
      %v5040 = vadd.f32 0.0, %v5039
      %5041 = vmatmul.f32.gmra.mxu0 %v4930
      %v5042 = vpop.f32.mrf.mxu0
      %v5043 = vadd.f32 0.0, %v5042
      %5044 = vmatmul.f32.gmra.mxu0 %v4933
      %v5045 = vpop.f32.mrf.mxu0
      %v5046 = vadd.f32 0.0, %v5045
      %5047 = vmatmul.f32.gmra.mxu0 %v4936
      %v5048 = vpop.f32.mrf.mxu0
      %v5049 = vadd.f32 0.0, %v5048
      %5050 = vmatmul.f32.gmra.mxu0 %v4939
      %v5051 = vpop.f32.mrf.mxu0
      %v5052 = vadd.f32 0.0, %v5051
      %5053 = vdwg.mxu0
      %v5054 = vadd.f32 %v4780, %v4959
      %v5055 = vadd.f32 %v4781, %v4962
      %v5056 = vadd.f32 %v4782, %v4965
      %v5057 = vadd.f32 %v4783, %v4968
      %v5058 = vadd.f32 %v4784, %v4971
      %v5059 = vadd.f32 %v4785, %v4974
      %v5060 = vadd.f32 %v4786, %v4977
      %v5061 = vadd.f32 %v4787, %v4980
      %v5062 = vadd.f32 %v4788, %v4983
      %v5063 = vadd.f32 %v4789, %v4986
      %v5064 = vadd.f32 %v4790, %v4989
      %v5065 = vadd.f32 %v4791, %v4992
      %v5066 = vadd.f32 %v4792, %v4995
      %v5067 = vadd.f32 %v4793, %v4998
      %v5068 = vadd.f32 %v4794, %v5001
      %v5069 = vadd.f32 %v4795, %v5004
      %v5070 = vadd.f32 %v4796, %v5007
      %v5071 = vadd.f32 %v4797, %v5010
      %v5072 = vadd.f32 %v4798, %v5013
      %v5073 = vadd.f32 %v4799, %v5016
      %v5074 = vadd.f32 %v4800, %v5019
      %v5075 = vadd.f32 %v4801, %v5022
      %v5076 = vadd.f32 %v4802, %v5025
      %v5077 = vadd.f32 %v4803, %v5028
      %v5078 = vadd.f32 %v4804, %v5031
      %v5079 = vadd.f32 %v4805, %v5034
      %v5080 = vadd.f32 %v4806, %v5037
      %v5081 = vadd.f32 %v4807, %v5040
      %v5082 = vadd.f32 %v4808, %v5043
      %v5083 = vadd.f32 %v4809, %v5046
      %v5084 = vadd.f32 %v4810, %v5049
      %v5085 = vadd.f32 %v4811, %v5052
      %v5086 = vld [vmem:[#allocation3 + $0x22] sm:$0xff]
      %v5087 = vld [vmem:[#allocation3 + $0x2a] sm:$0xff]
      %v5088 = vld [vmem:[#allocation3 + $0x32] sm:$0xff]
      %v5089 = vld [vmem:[#allocation3 + $0x3a] sm:$0xff]
      %v5090 = vld [vmem:[#allocation3 + $0x42] sm:$0xff]
      %v5091 = vld [vmem:[#allocation3 + $0x4a] sm:$0xff]
      %v5092 = vld [vmem:[#allocation3 + $0x52] sm:$0xff]
      %v5093 = vld [vmem:[#allocation3 + $0x5a] sm:$0xff]
      %v5094 = vld [vmem:[#allocation3 + $0x62] sm:$0xff]
      %v5095 = vld [vmem:[#allocation3 + $0x6a] sm:$0xff]
      %v5096 = vld [vmem:[#allocation3 + $0x72] sm:$0xff]
      %v5097 = vld [vmem:[#allocation3 + $0x7a] sm:$0xff]
      %v5098 = vld [vmem:[#allocation3 + $0x82] sm:$0xff]
      %v5099 = vld [vmem:[#allocation3 + $0x8a] sm:$0xff]
      %v5100 = vld [vmem:[#allocation3 + $0x92] sm:$0xff]
      %v5101 = vld [vmem:[#allocation3 + $0x9a] sm:$0xff]
      %v5102 = vld [vmem:[#allocation3 + $0xa2] sm:$0xff]
      %v5103 = vld [vmem:[#allocation3 + $0xaa] sm:$0xff]
      %v5104 = vld [vmem:[#allocation3 + $0xb2] sm:$0xff]
      %v5105 = vld [vmem:[#allocation3 + $0xba] sm:$0xff]
      %v5106 = vld [vmem:[#allocation3 + $0xc2] sm:$0xff]
      %v5107 = vld [vmem:[#allocation3 + $0xca] sm:$0xff]
      %v5108 = vld [vmem:[#allocation3 + $0xd2] sm:$0xff]
      %v5109 = vld [vmem:[#allocation3 + $0xda] sm:$0xff]
      %v5110 = vld [vmem:[#allocation3 + $0xe2] sm:$0xff]
      %v5111 = vld [vmem:[#allocation3 + $0xea] sm:$0xff]
      %v5112 = vld [vmem:[#allocation3 + $0xf2] sm:$0xff]
      %v5113 = vld [vmem:[#allocation3 + $0xfa] sm:$0xff]
      %v5114 = vld [vmem:[#allocation3 + $0x102] sm:$0xff]
      %v5115 = vld [vmem:[#allocation3 + $0x10a] sm:$0xff]
      %v5116 = vld [vmem:[#allocation3 + $0x112] sm:$0xff]
      %v5117 = vld [vmem:[#allocation3 + $0x11a] sm:$0xff]
      %v5118 = vld [vmem:[%s2 + $0x40] sm:$0xff]
      %v5120 = vsel %vm3023, %v5086, 0
      %v5123 = vsel %vm3023, %v5087, 0
      %v5126 = vsel %vm3023, %v5088, 0
      %v5129 = vsel %vm3023, %v5089, 0
      %v5132 = vsel %vm3023, %v5090, 0
      %v5135 = vsel %vm3023, %v5091, 0
      %v5138 = vsel %vm3023, %v5092, 0
      %v5141 = vsel %vm3023, %v5093, 0
      %v5144 = vsel %vm3023, %v5094, 0
      %v5147 = vsel %vm3023, %v5095, 0
      %v5150 = vsel %vm3023, %v5096, 0
      %v5153 = vsel %vm3023, %v5097, 0
      %v5156 = vsel %vm3023, %v5098, 0
      %v5159 = vsel %vm3023, %v5099, 0
      %v5162 = vsel %vm3023, %v5100, 0
      %v5165 = vsel %vm3023, %v5101, 0
      %v5168 = vsel %vm3023, %v5102, 0
      %v5171 = vsel %vm3023, %v5103, 0
      %v5174 = vsel %vm3023, %v5104, 0
      %v5177 = vsel %vm3023, %v5105, 0
      %v5180 = vsel %vm3023, %v5106, 0
      %v5183 = vsel %vm3023, %v5107, 0
      %v5186 = vsel %vm3023, %v5108, 0
      %v5189 = vsel %vm3023, %v5109, 0
      %v5192 = vsel %vm3023, %v5110, 0
      %v5195 = vsel %vm3023, %v5111, 0
      %v5198 = vsel %vm3023, %v5112, 0
      %v5201 = vsel %vm3023, %v5113, 0
      %v5204 = vsel %vm3023, %v5114, 0
      %v5207 = vsel %vm3023, %v5115, 0
      %v5210 = vsel %vm3023, %v5116, 0
      %v5213 = vsel %vm3023, %v5117, 0
      %5215 = vmatpush.msra.mxu0 0.0
      %5216 = vmatpush.msra.mxu0 0.0
      %5217 = vmatpush.msra.mxu0 0.0
      %5218 = vmatpush.msra.mxu0 0.0
      %5219 = vmatpush.msra.mxu0 0.0
      %5220 = vmatpush.msra.mxu0 0.0
      %5221 = vmatpush.msra.mxu0 0.0
      %5222 = vmatpush.msra.mxu0 0.0
      %5223 = vmatpush.msra.mxu0 0.0
      %5224 = vmatpush.msra.mxu0 0.0
      %5225 = vmatpush.msra.mxu0 0.0
      %5226 = vmatpush.msra.mxu0 0.0
      %5227 = vmatpush.msra.mxu0 0.0
      %5228 = vmatpush.msra.mxu0 0.0
      %5229 = vmatpush.msra.mxu0 0.0
      %5230 = vmatpush.msra.mxu0 %v5118
      %5231 = vmatmul.f32.gmra.mxu0 %v5120
      %v5232 = vpop.f32.mrf.mxu0
      %v5233 = vadd.f32 0.0, %v5232
      %5234 = vmatmul.f32.gmra.mxu0 %v5123
      %v5235 = vpop.f32.mrf.mxu0
      %v5236 = vadd.f32 0.0, %v5235
      %5237 = vmatmul.f32.gmra.mxu0 %v5126
      %v5238 = vpop.f32.mrf.mxu0
      %v5239 = vadd.f32 0.0, %v5238
      %5240 = vmatmul.f32.gmra.mxu0 %v5129
      %v5241 = vpop.f32.mrf.mxu0
      %v5242 = vadd.f32 0.0, %v5241
      %5243 = vmatmul.f32.gmra.mxu0 %v5132
      %v5244 = vpop.f32.mrf.mxu0
      %v5245 = vadd.f32 0.0, %v5244
      %5246 = vmatmul.f32.gmra.mxu0 %v5135
      %v5247 = vpop.f32.mrf.mxu0
      %v5248 = vadd.f32 0.0, %v5247
      %5249 = vmatmul.f32.gmra.mxu0 %v5138
      %v5250 = vpop.f32.mrf.mxu0
      %v5251 = vadd.f32 0.0, %v5250
      %5252 = vmatmul.f32.gmra.mxu0 %v5141
      %v5253 = vpop.f32.mrf.mxu0
      %v5254 = vadd.f32 0.0, %v5253
      %5255 = vmatmul.f32.gmra.mxu0 %v5144
      %v5256 = vpop.f32.mrf.mxu0
      %v5257 = vadd.f32 0.0, %v5256
      %5258 = vmatmul.f32.gmra.mxu0 %v5147
      %v5259 = vpop.f32.mrf.mxu0
      %v5260 = vadd.f32 0.0, %v5259
      %5261 = vmatmul.f32.gmra.mxu0 %v5150
      %v5262 = vpop.f32.mrf.mxu0
      %v5263 = vadd.f32 0.0, %v5262
      %5264 = vmatmul.f32.gmra.mxu0 %v5153
      %v5265 = vpop.f32.mrf.mxu0
      %v5266 = vadd.f32 0.0, %v5265
      %5267 = vmatmul.f32.gmra.mxu0 %v5156
      %v5268 = vpop.f32.mrf.mxu0
      %v5269 = vadd.f32 0.0, %v5268
      %5270 = vmatmul.f32.gmra.mxu0 %v5159
      %v5271 = vpop.f32.mrf.mxu0
      %v5272 = vadd.f32 0.0, %v5271
      %5273 = vmatmul.f32.gmra.mxu0 %v5162
      %v5274 = vpop.f32.mrf.mxu0
      %v5275 = vadd.f32 0.0, %v5274
      %5276 = vmatmul.f32.gmra.mxu0 %v5165
      %v5277 = vpop.f32.mrf.mxu0
      %v5278 = vadd.f32 0.0, %v5277
      %5279 = vmatmul.f32.gmra.mxu0 %v5168
      %v5280 = vpop.f32.mrf.mxu0
      %v5281 = vadd.f32 0.0, %v5280
      %5282 = vmatmul.f32.gmra.mxu0 %v5171
      %v5283 = vpop.f32.mrf.mxu0
      %v5284 = vadd.f32 0.0, %v5283
      %5285 = vmatmul.f32.gmra.mxu0 %v5174
      %v5286 = vpop.f32.mrf.mxu0
      %v5287 = vadd.f32 0.0, %v5286
      %5288 = vmatmul.f32.gmra.mxu0 %v5177
      %v5289 = vpop.f32.mrf.mxu0
      %v5290 = vadd.f32 0.0, %v5289
      %5291 = vmatmul.f32.gmra.mxu0 %v5180
      %v5292 = vpop.f32.mrf.mxu0
      %v5293 = vadd.f32 0.0, %v5292
      %5294 = vmatmul.f32.gmra.mxu0 %v5183
      %v5295 = vpop.f32.mrf.mxu0
      %v5296 = vadd.f32 0.0, %v5295
      %5297 = vmatmul.f32.gmra.mxu0 %v5186
      %v5298 = vpop.f32.mrf.mxu0
      %v5299 = vadd.f32 0.0, %v5298
      %5300 = vmatmul.f32.gmra.mxu0 %v5189
      %v5301 = vpop.f32.mrf.mxu0
      %v5302 = vadd.f32 0.0, %v5301
      %5303 = vmatmul.f32.gmra.mxu0 %v5192
      %v5304 = vpop.f32.mrf.mxu0
      %v5305 = vadd.f32 0.0, %v5304
      %5306 = vmatmul.f32.gmra.mxu0 %v5195
      %v5307 = vpop.f32.mrf.mxu0
      %v5308 = vadd.f32 0.0, %v5307
      %5309 = vmatmul.f32.gmra.mxu0 %v5198
      %v5310 = vpop.f32.mrf.mxu0
      %v5311 = vadd.f32 0.0, %v5310
      %5312 = vmatmul.f32.gmra.mxu0 %v5201
      %v5313 = vpop.f32.mrf.mxu0
      %v5314 = vadd.f32 0.0, %v5313
      %5315 = vmatmul.f32.gmra.mxu0 %v5204
      %v5316 = vpop.f32.mrf.mxu0
      %v5317 = vadd.f32 0.0, %v5316
      %5318 = vmatmul.f32.gmra.mxu0 %v5207
      %v5319 = vpop.f32.mrf.mxu0
      %v5320 = vadd.f32 0.0, %v5319
      %5321 = vmatmul.f32.gmra.mxu0 %v5210
      %v5322 = vpop.f32.mrf.mxu0
      %v5323 = vadd.f32 0.0, %v5322
      %5324 = vmatmul.f32.gmra.mxu0 %v5213
      %v5325 = vpop.f32.mrf.mxu0
      %v5326 = vadd.f32 0.0, %v5325
      %5327 = vdwg.mxu0
      %v5328 = vadd.f32 %v5054, %v5233
      %v5329 = vadd.f32 %v5055, %v5236
      %v5330 = vadd.f32 %v5056, %v5239
      %v5331 = vadd.f32 %v5057, %v5242
      %v5332 = vadd.f32 %v5058, %v5245
      %v5333 = vadd.f32 %v5059, %v5248
      %v5334 = vadd.f32 %v5060, %v5251
      %v5335 = vadd.f32 %v5061, %v5254
      %v5336 = vadd.f32 %v5062, %v5257
      %v5337 = vadd.f32 %v5063, %v5260
      %v5338 = vadd.f32 %v5064, %v5263
      %v5339 = vadd.f32 %v5065, %v5266
      %v5340 = vadd.f32 %v5066, %v5269
      %v5341 = vadd.f32 %v5067, %v5272
      %v5342 = vadd.f32 %v5068, %v5275
      %v5343 = vadd.f32 %v5069, %v5278
      %v5344 = vadd.f32 %v5070, %v5281
      %v5345 = vadd.f32 %v5071, %v5284
      %v5346 = vadd.f32 %v5072, %v5287
      %v5347 = vadd.f32 %v5073, %v5290
      %v5348 = vadd.f32 %v5074, %v5293
      %v5349 = vadd.f32 %v5075, %v5296
      %v5350 = vadd.f32 %v5076, %v5299
      %v5351 = vadd.f32 %v5077, %v5302
      %v5352 = vadd.f32 %v5078, %v5305
      %v5353 = vadd.f32 %v5079, %v5308
      %v5354 = vadd.f32 %v5080, %v5311
      %v5355 = vadd.f32 %v5081, %v5314
      %v5356 = vadd.f32 %v5082, %v5317
      %v5357 = vadd.f32 %v5083, %v5320
      %v5358 = vadd.f32 %v5084, %v5323
      %v5359 = vadd.f32 %v5085, %v5326
      %v5360 = vld [vmem:[%s5] sm:$0x1]
      %v5362 = vperm.slane %v5360, 0
      %v5364 = vadd.f32 %v5328, %v5362
      %v5365 = vadd.f32 %v5329, %v5362
      %v5366 = vadd.f32 %v5330, %v5362
      %v5367 = vadd.f32 %v5331, %v5362
      %v5368 = vadd.f32 %v5332, %v5362
      %v5369 = vadd.f32 %v5333, %v5362
      %v5370 = vadd.f32 %v5334, %v5362
      %v5371 = vadd.f32 %v5335, %v5362
      %v5372 = vadd.f32 %v5336, %v5362
      %v5373 = vadd.f32 %v5337, %v5362
      %v5374 = vadd.f32 %v5338, %v5362
      %v5375 = vadd.f32 %v5339, %v5362
      %v5376 = vadd.f32 %v5340, %v5362
      %v5377 = vadd.f32 %v5341, %v5362
      %v5378 = vadd.f32 %v5342, %v5362
      %v5379 = vadd.f32 %v5343, %v5362
      %v5380 = vadd.f32 %v5344, %v5362
      %v5381 = vadd.f32 %v5345, %v5362
      %v5382 = vadd.f32 %v5346, %v5362
      %v5383 = vadd.f32 %v5347, %v5362
      %v5384 = vadd.f32 %v5348, %v5362
      %v5385 = vadd.f32 %v5349, %v5362
      %v5386 = vadd.f32 %v5350, %v5362
      %v5387 = vadd.f32 %v5351, %v5362
      %v5388 = vadd.f32 %v5352, %v5362
      %v5389 = vadd.f32 %v5353, %v5362
      %v5390 = vadd.f32 %v5354, %v5362
      %v5391 = vadd.f32 %v5355, %v5362
      %v5392 = vadd.f32 %v5356, %v5362
      %v5393 = vadd.f32 %v5357, %v5362
      %v5394 = vadd.f32 %v5358, %v5362
      %v5395 = vadd.f32 %v5359, %v5362
      %vm5396 = vcmp.ge.f32.partialorder %v5364, 0.0
      %vm5397 = vcmp.ge.f32.partialorder %v5365, 0.0
      %vm5398 = vcmp.ge.f32.partialorder %v5366, 0.0
      %vm5399 = vcmp.ge.f32.partialorder %v5367, 0.0
      %vm5400 = vcmp.ge.f32.partialorder %v5368, 0.0
      %vm5401 = vcmp.ge.f32.partialorder %v5369, 0.0
      %vm5402 = vcmp.ge.f32.partialorder %v5370, 0.0
      %vm5403 = vcmp.ge.f32.partialorder %v5371, 0.0
      %vm5404 = vcmp.ge.f32.partialorder %v5372, 0.0
      %vm5405 = vcmp.ge.f32.partialorder %v5373, 0.0
      %vm5406 = vcmp.ge.f32.partialorder %v5374, 0.0
      %vm5407 = vcmp.ge.f32.partialorder %v5375, 0.0
      %vm5408 = vcmp.ge.f32.partialorder %v5376, 0.0
      %vm5409 = vcmp.ge.f32.partialorder %v5377, 0.0
      %vm5410 = vcmp.ge.f32.partialorder %v5378, 0.0
      %vm5411 = vcmp.ge.f32.partialorder %v5379, 0.0
      %vm5412 = vcmp.ge.f32.partialorder %v5380, 0.0
      %vm5413 = vcmp.ge.f32.partialorder %v5381, 0.0
      %vm5414 = vcmp.ge.f32.partialorder %v5382, 0.0
      %vm5415 = vcmp.ge.f32.partialorder %v5383, 0.0
      %vm5416 = vcmp.ge.f32.partialorder %v5384, 0.0
      %vm5417 = vcmp.ge.f32.partialorder %v5385, 0.0
      %vm5418 = vcmp.ge.f32.partialorder %v5386, 0.0
      %vm5419 = vcmp.ge.f32.partialorder %v5387, 0.0
      %vm5420 = vcmp.ge.f32.partialorder %v5388, 0.0
      %vm5421 = vcmp.ge.f32.partialorder %v5389, 0.0
      %vm5422 = vcmp.ge.f32.partialorder %v5390, 0.0
      %vm5423 = vcmp.ge.f32.partialorder %v5391, 0.0
      %vm5424 = vcmp.ge.f32.partialorder %v5392, 0.0
      %vm5425 = vcmp.ge.f32.partialorder %v5393, 0.0
      %vm5426 = vcmp.ge.f32.partialorder %v5394, 0.0
      %vm5427 = vcmp.ge.f32.partialorder %v5395, 0.0
      %v5428 = vmul.f32 %v5364, 0.01
      %v5429 = vmul.f32 %v5365, 0.01
      %v5430 = vmul.f32 %v5366, 0.01
      %v5431 = vmul.f32 %v5367, 0.01
      %v5432 = vmul.f32 %v5368, 0.01
      %v5433 = vmul.f32 %v5369, 0.01
      %v5434 = vmul.f32 %v5370, 0.01
      %v5435 = vmul.f32 %v5371, 0.01
      %v5436 = vmul.f32 %v5372, 0.01
      %v5437 = vmul.f32 %v5373, 0.01
      %v5438 = vmul.f32 %v5374, 0.01
      %v5439 = vmul.f32 %v5375, 0.01
      %v5440 = vmul.f32 %v5376, 0.01
      %v5441 = vmul.f32 %v5377, 0.01
      %v5442 = vmul.f32 %v5378, 0.01
      %v5443 = vmul.f32 %v5379, 0.01
      %v5444 = vmul.f32 %v5380, 0.01
      %v5445 = vmul.f32 %v5381, 0.01
      %v5446 = vmul.f32 %v5382, 0.01
      %v5447 = vmul.f32 %v5383, 0.01
      %v5448 = vmul.f32 %v5384, 0.01
      %v5449 = vmul.f32 %v5385, 0.01
      %v5450 = vmul.f32 %v5386, 0.01
      %v5451 = vmul.f32 %v5387, 0.01
      %v5452 = vmul.f32 %v5388, 0.01
      %v5453 = vmul.f32 %v5389, 0.01
      %v5454 = vmul.f32 %v5390, 0.01
      %v5455 = vmul.f32 %v5391, 0.01
      %v5456 = vmul.f32 %v5392, 0.01
      %v5457 = vmul.f32 %v5393, 0.01
      %v5458 = vmul.f32 %v5394, 0.01
      %v5459 = vmul.f32 %v5395, 0.01
      %v5460 = vsel %vm5396, %v5364, %v5428
      %v5461 = vsel %vm5397, %v5365, %v5429
      %v5462 = vsel %vm5398, %v5366, %v5430
      %v5463 = vsel %vm5399, %v5367, %v5431
      %v5464 = vsel %vm5400, %v5368, %v5432
      %v5465 = vsel %vm5401, %v5369, %v5433
      %v5466 = vsel %vm5402, %v5370, %v5434
      %v5467 = vsel %vm5403, %v5371, %v5435
      %v5468 = vsel %vm5404, %v5372, %v5436
      %v5469 = vsel %vm5405, %v5373, %v5437
      %v5470 = vsel %vm5406, %v5374, %v5438
      %v5471 = vsel %vm5407, %v5375, %v5439
      %v5472 = vsel %vm5408, %v5376, %v5440
      %v5473 = vsel %vm5409, %v5377, %v5441
      %v5474 = vsel %vm5410, %v5378, %v5442
      %v5475 = vsel %vm5411, %v5379, %v5443
      %v5476 = vsel %vm5412, %v5380, %v5444
      %v5477 = vsel %vm5413, %v5381, %v5445
      %v5478 = vsel %vm5414, %v5382, %v5446
      %v5479 = vsel %vm5415, %v5383, %v5447
      %v5480 = vsel %vm5416, %v5384, %v5448
      %v5481 = vsel %vm5417, %v5385, %v5449
      %v5482 = vsel %vm5418, %v5386, %v5450
      %v5483 = vsel %vm5419, %v5387, %v5451
      %v5484 = vsel %vm5420, %v5388, %v5452
      %v5485 = vsel %vm5421, %v5389, %v5453
      %v5486 = vsel %vm5422, %v5390, %v5454
      %v5487 = vsel %vm5423, %v5391, %v5455
      %v5488 = vsel %vm5424, %v5392, %v5456
      %v5489 = vsel %vm5425, %v5393, %v5457
      %v5490 = vsel %vm5426, %v5394, %v5458
      %v5491 = vsel %vm5427, %v5395, %v5459
      %5492 = vst [vmem:[#allocation4] sm:$0xff] %v5460
      %5493 = vst [vmem:[#allocation4 + $0x8] sm:$0xff] %v5461
      %5494 = vst [vmem:[#allocation4 + $0x10] sm:$0xff] %v5462
      %5495 = vst [vmem:[#allocation4 + $0x18] sm:$0xff] %v5463
      %5496 = vst [vmem:[#allocation4 + $0x20] sm:$0xff] %v5464
      %5497 = vst [vmem:[#allocation4 + $0x28] sm:$0xff] %v5465
      %5498 = vst [vmem:[#allocation4 + $0x30] sm:$0xff] %v5466
      %5499 = vst [vmem:[#allocation4 + $0x38] sm:$0xff] %v5467
      %5500 = vst [vmem:[#allocation4 + $0x40] sm:$0xff] %v5468
      %5501 = vst [vmem:[#allocation4 + $0x48] sm:$0xff] %v5469
      %5502 = vst [vmem:[#allocation4 + $0x50] sm:$0xff] %v5470
      %5503 = vst [vmem:[#allocation4 + $0x58] sm:$0xff] %v5471
      %5504 = vst [vmem:[#allocation4 + $0x60] sm:$0xff] %v5472
      %5505 = vst [vmem:[#allocation4 + $0x68] sm:$0xff] %v5473
      %5506 = vst [vmem:[#allocation4 + $0x70] sm:$0xff] %v5474
      %5507 = vst [vmem:[#allocation4 + $0x78] sm:$0xff] %v5475
      %5508 = vst [vmem:[#allocation4 + $0x80] sm:$0xff] %v5476
      %5509 = vst [vmem:[#allocation4 + $0x88] sm:$0xff] %v5477
      %5510 = vst [vmem:[#allocation4 + $0x90] sm:$0xff] %v5478
      %5511 = vst [vmem:[#allocation4 + $0x98] sm:$0xff] %v5479
      %5512 = vst [vmem:[#allocation4 + $0xa0] sm:$0xff] %v5480
      %5513 = vst [vmem:[#allocation4 + $0xa8] sm:$0xff] %v5481
      %5514 = vst [vmem:[#allocation4 + $0xb0] sm:$0xff] %v5482
      %5515 = vst [vmem:[#allocation4 + $0xb8] sm:$0xff] %v5483
      %5516 = vst [vmem:[#allocation4 + $0xc0] sm:$0xff] %v5484
      %5517 = vst [vmem:[#allocation4 + $0xc8] sm:$0xff] %v5485
      %5518 = vst [vmem:[#allocation4 + $0xd0] sm:$0xff] %v5486
      %5519 = vst [vmem:[#allocation4 + $0xd8] sm:$0xff] %v5487
      %5520 = vst [vmem:[#allocation4 + $0xe0] sm:$0xff] %v5488
      %5521 = vst [vmem:[#allocation4 + $0xe8] sm:$0xff] %v5489
      %5522 = vst [vmem:[#allocation4 + $0xf0] sm:$0xff] %v5490
      %5523 = vst [vmem:[#allocation4 + $0xf8] sm:$0xff] %v5491
      %v5524 = vld [vmem:[#allocation4] sm:$0xff]
      %v5525 = vld [vmem:[#allocation4 + $0x8] sm:$0xff]
      %v5526 = vld [vmem:[#allocation4 + $0x10] sm:$0xff]
      %v5527 = vld [vmem:[#allocation4 + $0x18] sm:$0xff]
      %v5528 = vld [vmem:[#allocation4 + $0x20] sm:$0xff]
      %v5529 = vld [vmem:[#allocation4 + $0x28] sm:$0xff]
      %v5530 = vld [vmem:[#allocation4 + $0x30] sm:$0xff]
      %v5531 = vld [vmem:[#allocation4 + $0x38] sm:$0xff]
      %v5532 = vld [vmem:[#allocation4 + $0x40] sm:$0xff]
      %v5533 = vld [vmem:[#allocation4 + $0x48] sm:$0xff]
      %v5534 = vld [vmem:[#allocation4 + $0x50] sm:$0xff]
      %v5535 = vld [vmem:[#allocation4 + $0x58] sm:$0xff]
      %v5536 = vld [vmem:[#allocation4 + $0x60] sm:$0xff]
      %v5537 = vld [vmem:[#allocation4 + $0x68] sm:$0xff]
      %v5538 = vld [vmem:[#allocation4 + $0x70] sm:$0xff]
      %v5539 = vld [vmem:[#allocation4 + $0x78] sm:$0xff]
      %v5540 = vld [vmem:[%s3] sm:$0xff]
      %v5541 = vld [vmem:[%s3 + $0x8] sm:$0xff]
      %v5542 = vld [vmem:[#allocation4 + $0x2] sm:$0xff]
      %v5543 = vld [vmem:[#allocation4 + $0xa] sm:$0xff]
      %v5544 = vld [vmem:[#allocation4 + $0x12] sm:$0xff]
      %v5545 = vld [vmem:[#allocation4 + $0x1a] sm:$0xff]
      %v5546 = vld [vmem:[#allocation4 + $0x22] sm:$0xff]
      %v5547 = vld [vmem:[#allocation4 + $0x2a] sm:$0xff]
      %v5548 = vld [vmem:[#allocation4 + $0x32] sm:$0xff]
      %v5549 = vld [vmem:[#allocation4 + $0x3a] sm:$0xff]
      %v5550 = vld [vmem:[#allocation4 + $0x42] sm:$0xff]
      %v5551 = vld [vmem:[#allocation4 + $0x4a] sm:$0xff]
      %v5552 = vld [vmem:[#allocation4 + $0x52] sm:$0xff]
      %v5553 = vld [vmem:[#allocation4 + $0x5a] sm:$0xff]
      %v5554 = vld [vmem:[#allocation4 + $0x62] sm:$0xff]
      %v5555 = vld [vmem:[#allocation4 + $0x6a] sm:$0xff]
      %v5556 = vld [vmem:[#allocation4 + $0x72] sm:$0xff]
      %v5557 = vld [vmem:[#allocation4 + $0x7a] sm:$0xff]
      %v5558 = vld [vmem:[%s3 + $0x10] sm:$0xff]
      %v5559 = vld [vmem:[%s3 + $0x18] sm:$0xff]
      %vm5560 = vcmask 130048
      %v5562 = vsel %vm5560, %v5542, 0
      %v5565 = vsel %vm5560, %v5543, 0
      %v5568 = vsel %vm5560, %v5544, 0
      %v5571 = vsel %vm5560, %v5545, 0
      %v5574 = vsel %vm5560, %v5546, 0
      %v5577 = vsel %vm5560, %v5547, 0
      %v5580 = vsel %vm5560, %v5548, 0
      %v5583 = vsel %vm5560, %v5549, 0
      %v5586 = vsel %vm5560, %v5550, 0
      %v5589 = vsel %vm5560, %v5551, 0
      %v5592 = vsel %vm5560, %v5552, 0
      %v5595 = vsel %vm5560, %v5553, 0
      %v5598 = vsel %vm5560, %v5554, 0
      %v5601 = vsel %vm5560, %v5555, 0
      %v5604 = vsel %vm5560, %v5556, 0
      %v5607 = vsel %vm5560, %v5557, 0
      %5609 = vmatpush.msra.mxu0 0.0
      %5610 = vmatpush.msra.mxu0 0.0
      %5611 = vmatpush.msra.mxu0 0.0
      %5612 = vmatpush.msra.mxu0 0.0
      %5613 = vmatpush.msra.mxu0 0.0
      %5614 = vmatpush.msra.mxu0 0.0
      %5615 = vmatpush.msra.mxu0 0.0
      %5616 = vmatpush.msra.mxu0 0.0
      %5617 = vmatpush.msra.mxu0 0.0
      %5618 = vmatpush.msra.mxu0 0.0
      %5619 = vmatpush.msra.mxu0 0.0
      %5620 = vmatpush.msra.mxu0 0.0
      %5621 = vmatpush.msra.mxu0 0.0
      %5622 = vmatpush.msra.mxu0 0.0
      %5623 = vmatpush.msra.mxu0 %v5559
      %5624 = vmatpush.msra.mxu0 %v5558
      %5625 = vmatmul.f32.gmra.mxu0 %v5562
      %v5626 = vpop.f32.mrf.mxu0
      %v5627 = vadd.f32 0.0, %v5626
      %5628 = vmatmul.f32.gmra.mxu0 %v5565
      %v5629 = vpop.f32.mrf.mxu0
      %5630 = vmatmul.f32.gmra.mxu0 %v5568
      %v5631 = vpop.f32.mrf.mxu0
      %5632 = vmatmul.f32.gmra.mxu0 %v5571
      %v5633 = vpop.f32.mrf.mxu0
      %5634 = vmatmul.f32.gmra.mxu0 %v5574
      %v5635 = vpop.f32.mrf.mxu0
      %v5636 = vadd.f32 0.0, %v5635
      %5637 = vmatmul.f32.gmra.mxu0 %v5577
      %v5638 = vpop.f32.mrf.mxu0
      %5639 = vmatmul.f32.gmra.mxu0 %v5580
      %v5640 = vpop.f32.mrf.mxu0
      %5641 = vmatmul.f32.gmra.mxu0 %v5583
      %v5642 = vpop.f32.mrf.mxu0
      %5643 = vmatmul.f32.gmra.mxu0 %v5586
      %v5644 = vpop.f32.mrf.mxu0
      %v5645 = vadd.f32 0.0, %v5644
      %5646 = vmatmul.f32.gmra.mxu0 %v5589
      %v5647 = vpop.f32.mrf.mxu0
      %5648 = vmatmul.f32.gmra.mxu0 %v5592
      %v5649 = vpop.f32.mrf.mxu0
      %5650 = vmatmul.f32.gmra.mxu0 %v5595
      %v5651 = vpop.f32.mrf.mxu0
      %5652 = vmatmul.f32.gmra.mxu0 %v5598
      %v5653 = vpop.f32.mrf.mxu0
      %v5654 = vadd.f32 0.0, %v5653
      %5655 = vmatmul.f32.gmra.mxu0 %v5601
      %v5656 = vpop.f32.mrf.mxu0
      %5657 = vmatmul.f32.gmra.mxu0 %v5604
      %v5658 = vpop.f32.mrf.mxu0
      %5659 = vmatmul.f32.gmra.mxu0 %v5607
      %v5660 = vpop.f32.mrf.mxu0
      %5661 = vdwg.mxu0
      %v5663 = vsel %vm5560, %v5524, 0
      %v5666 = vsel %vm5560, %v5525, 0
      %v5669 = vsel %vm5560, %v5526, 0
      %v5672 = vsel %vm5560, %v5527, 0
      %v5675 = vsel %vm5560, %v5528, 0
      %v5678 = vsel %vm5560, %v5529, 0
      %v5681 = vsel %vm5560, %v5530, 0
      %v5684 = vsel %vm5560, %v5531, 0
      %v5687 = vsel %vm5560, %v5532, 0
      %v5690 = vsel %vm5560, %v5533, 0
      %v5693 = vsel %vm5560, %v5534, 0
      %v5696 = vsel %vm5560, %v5535, 0
      %v5699 = vsel %vm5560, %v5536, 0
      %v5702 = vsel %vm5560, %v5537, 0
      %v5705 = vsel %vm5560, %v5538, 0
      %v5708 = vsel %vm5560, %v5539, 0
      %5710 = vmatpush.msra.mxu0 0.0
      %5711 = vmatpush.msra.mxu0 0.0
      %5712 = vmatpush.msra.mxu0 0.0
      %5713 = vmatpush.msra.mxu0 0.0
      %5714 = vmatpush.msra.mxu0 0.0
      %5715 = vmatpush.msra.mxu0 0.0
      %5716 = vmatpush.msra.mxu0 0.0
      %5717 = vmatpush.msra.mxu0 0.0
      %5718 = vmatpush.msra.mxu0 0.0
      %5719 = vmatpush.msra.mxu0 0.0
      %5720 = vmatpush.msra.mxu0 0.0
      %5721 = vmatpush.msra.mxu0 0.0
      %5722 = vmatpush.msra.mxu0 0.0
      %5723 = vmatpush.msra.mxu0 0.0
      %5724 = vmatpush.msra.mxu0 %v5541
      %5725 = vmatpush.msra.mxu0 %v5540
      %5726 = vmatmul.f32.gmra.mxu0 %v5663
      %v5727 = vpop.f32.mrf.mxu0
      %v5728 = vadd.f32 %v5627, %v5727
      %5729 = vmatmul.f32.gmra.mxu0 %v5666
      %v5730 = vpop.f32.mrf.mxu0
      %5731 = vmatmul.f32.gmra.mxu0 %v5669
      %v5732 = vpop.f32.mrf.mxu0
      %5733 = vmatmul.f32.gmra.mxu0 %v5672
      %v5734 = vpop.f32.mrf.mxu0
      %5735 = vmatmul.f32.gmra.mxu0 %v5675
      %v5736 = vpop.f32.mrf.mxu0
      %v5737 = vadd.f32 %v5636, %v5736
      %5738 = vmatmul.f32.gmra.mxu0 %v5678
      %v5739 = vpop.f32.mrf.mxu0
      %5740 = vmatmul.f32.gmra.mxu0 %v5681
      %v5741 = vpop.f32.mrf.mxu0
      %5742 = vmatmul.f32.gmra.mxu0 %v5684
      %v5743 = vpop.f32.mrf.mxu0
      %5744 = vmatmul.f32.gmra.mxu0 %v5687
      %v5745 = vpop.f32.mrf.mxu0
      %v5746 = vadd.f32 %v5645, %v5745
      %5747 = vmatmul.f32.gmra.mxu0 %v5690
      %v5748 = vpop.f32.mrf.mxu0
      %5749 = vmatmul.f32.gmra.mxu0 %v5693
      %v5750 = vpop.f32.mrf.mxu0
      %5751 = vmatmul.f32.gmra.mxu0 %v5696
      %v5752 = vpop.f32.mrf.mxu0
      %5753 = vmatmul.f32.gmra.mxu0 %v5699
      %v5754 = vpop.f32.mrf.mxu0
      %v5755 = vadd.f32 %v5654, %v5754
      %5756 = vmatmul.f32.gmra.mxu0 %v5702
      %v5757 = vpop.f32.mrf.mxu0
      %5758 = vmatmul.f32.gmra.mxu0 %v5705
      %v5759 = vpop.f32.mrf.mxu0
      %5760 = vmatmul.f32.gmra.mxu0 %v5708
      %v5761 = vpop.f32.mrf.mxu0
      %5762 = vdwg.mxu0
      %v5763 = vld [vmem:[#allocation4 + $0x4] sm:$0xff]
      %v5764 = vld [vmem:[#allocation4 + $0xc] sm:$0xff]
      %v5765 = vld [vmem:[#allocation4 + $0x14] sm:$0xff]
      %v5766 = vld [vmem:[#allocation4 + $0x1c] sm:$0xff]
      %v5767 = vld [vmem:[#allocation4 + $0x24] sm:$0xff]
      %v5768 = vld [vmem:[#allocation4 + $0x2c] sm:$0xff]
      %v5769 = vld [vmem:[#allocation4 + $0x34] sm:$0xff]
      %v5770 = vld [vmem:[#allocation4 + $0x3c] sm:$0xff]
      %v5771 = vld [vmem:[#allocation4 + $0x44] sm:$0xff]
      %v5772 = vld [vmem:[#allocation4 + $0x4c] sm:$0xff]
      %v5773 = vld [vmem:[#allocation4 + $0x54] sm:$0xff]
      %v5774 = vld [vmem:[#allocation4 + $0x5c] sm:$0xff]
      %v5775 = vld [vmem:[#allocation4 + $0x64] sm:$0xff]
      %v5776 = vld [vmem:[#allocation4 + $0x6c] sm:$0xff]
      %v5777 = vld [vmem:[#allocation4 + $0x74] sm:$0xff]
      %v5778 = vld [vmem:[#allocation4 + $0x7c] sm:$0xff]
      %v5779 = vld [vmem:[%s3 + $0x20] sm:$0xff]
      %v5780 = vld [vmem:[%s3 + $0x28] sm:$0xff]
      %v5782 = vsel %vm5560, %v5763, 0
      %v5785 = vsel %vm5560, %v5764, 0
      %v5788 = vsel %vm5560, %v5765, 0
      %v5791 = vsel %vm5560, %v5766, 0
      %v5794 = vsel %vm5560, %v5767, 0
      %v5797 = vsel %vm5560, %v5768, 0
      %v5800 = vsel %vm5560, %v5769, 0
      %v5803 = vsel %vm5560, %v5770, 0
      %v5806 = vsel %vm5560, %v5771, 0
      %v5809 = vsel %vm5560, %v5772, 0
      %v5812 = vsel %vm5560, %v5773, 0
      %v5815 = vsel %vm5560, %v5774, 0
      %v5818 = vsel %vm5560, %v5775, 0
      %v5821 = vsel %vm5560, %v5776, 0
      %v5824 = vsel %vm5560, %v5777, 0
      %v5827 = vsel %vm5560, %v5778, 0
      %5829 = vmatpush.msra.mxu0 0.0
      %5830 = vmatpush.msra.mxu0 0.0
      %5831 = vmatpush.msra.mxu0 0.0
      %5832 = vmatpush.msra.mxu0 0.0
      %5833 = vmatpush.msra.mxu0 0.0
      %5834 = vmatpush.msra.mxu0 0.0
      %5835 = vmatpush.msra.mxu0 0.0
      %5836 = vmatpush.msra.mxu0 0.0
      %5837 = vmatpush.msra.mxu0 0.0
      %5838 = vmatpush.msra.mxu0 0.0
      %5839 = vmatpush.msra.mxu0 0.0
      %5840 = vmatpush.msra.mxu0 0.0
      %5841 = vmatpush.msra.mxu0 0.0
      %5842 = vmatpush.msra.mxu0 0.0
      %5843 = vmatpush.msra.mxu0 %v5780
      %5844 = vmatpush.msra.mxu0 %v5779
      %5845 = vmatmul.f32.gmra.mxu0 %v5782
      %v5846 = vpop.f32.mrf.mxu0
      %v5847 = vadd.f32 0.0, %v5846
      %5848 = vmatmul.f32.gmra.mxu0 %v5785
      %v5849 = vpop.f32.mrf.mxu0
      %5850 = vmatmul.f32.gmra.mxu0 %v5788
      %v5851 = vpop.f32.mrf.mxu0
      %5852 = vmatmul.f32.gmra.mxu0 %v5791
      %v5853 = vpop.f32.mrf.mxu0
      %5854 = vmatmul.f32.gmra.mxu0 %v5794
      %v5855 = vpop.f32.mrf.mxu0
      %v5856 = vadd.f32 0.0, %v5855
      %5857 = vmatmul.f32.gmra.mxu0 %v5797
      %v5858 = vpop.f32.mrf.mxu0
      %5859 = vmatmul.f32.gmra.mxu0 %v5800
      %v5860 = vpop.f32.mrf.mxu0
      %5861 = vmatmul.f32.gmra.mxu0 %v5803
      %v5862 = vpop.f32.mrf.mxu0
      %5863 = vmatmul.f32.gmra.mxu0 %v5806
      %v5864 = vpop.f32.mrf.mxu0
      %v5865 = vadd.f32 0.0, %v5864
      %5866 = vmatmul.f32.gmra.mxu0 %v5809
      %v5867 = vpop.f32.mrf.mxu0
      %5868 = vmatmul.f32.gmra.mxu0 %v5812
      %v5869 = vpop.f32.mrf.mxu0
      %5870 = vmatmul.f32.gmra.mxu0 %v5815
      %v5871 = vpop.f32.mrf.mxu0
      %5872 = vmatmul.f32.gmra.mxu0 %v5818
      %v5873 = vpop.f32.mrf.mxu0
      %v5874 = vadd.f32 0.0, %v5873
      %5875 = vmatmul.f32.gmra.mxu0 %v5821
      %v5876 = vpop.f32.mrf.mxu0
      %5877 = vmatmul.f32.gmra.mxu0 %v5824
      %v5878 = vpop.f32.mrf.mxu0
      %5879 = vmatmul.f32.gmra.mxu0 %v5827
      %v5880 = vpop.f32.mrf.mxu0
      %5881 = vdwg.mxu0
      %v5882 = vadd.f32 %v5728, %v5847
      %v5883 = vadd.f32 %v5737, %v5856
      %v5884 = vadd.f32 %v5746, %v5865
      %v5885 = vadd.f32 %v5755, %v5874
      %v5886 = vld [vmem:[#allocation4 + $0x20] sm:$0xff]
      %v5887 = vld [vmem:[#allocation4 + $0x28] sm:$0xff]
      %v5888 = vld [vmem:[#allocation4 + $0x30] sm:$0xff]
      %v5889 = vld [vmem:[#allocation4 + $0x38] sm:$0xff]
      %v5890 = vld [vmem:[#allocation4 + $0x40] sm:$0xff]
      %v5891 = vld [vmem:[#allocation4 + $0x48] sm:$0xff]
      %v5892 = vld [vmem:[#allocation4 + $0x50] sm:$0xff]
      %v5893 = vld [vmem:[#allocation4 + $0x58] sm:$0xff]
      %v5894 = vld [vmem:[#allocation4 + $0x60] sm:$0xff]
      %v5895 = vld [vmem:[#allocation4 + $0x68] sm:$0xff]
      %v5896 = vld [vmem:[#allocation4 + $0x70] sm:$0xff]
      %v5897 = vld [vmem:[#allocation4 + $0x78] sm:$0xff]
      %v5898 = vld [vmem:[#allocation4 + $0x80] sm:$0xff]
      %v5899 = vld [vmem:[#allocation4 + $0x88] sm:$0xff]
      %v5900 = vld [vmem:[#allocation4 + $0x90] sm:$0xff]
      %v5901 = vld [vmem:[#allocation4 + $0x98] sm:$0xff]
      %v5902 = vld [vmem:[%s3 + $0x30] sm:$0xff]
      %v5903 = vld [vmem:[%s3 + $0x38] sm:$0xff]
      %v5905 = vsel %vm5560, %v5886, 0
      %v5908 = vsel %vm5560, %v5887, 0
      %v5911 = vsel %vm5560, %v5888, 0
      %v5914 = vsel %vm5560, %v5889, 0
      %v5917 = vsel %vm5560, %v5890, 0
      %v5920 = vsel %vm5560, %v5891, 0
      %v5923 = vsel %vm5560, %v5892, 0
      %v5926 = vsel %vm5560, %v5893, 0
      %v5929 = vsel %vm5560, %v5894, 0
      %v5932 = vsel %vm5560, %v5895, 0
      %v5935 = vsel %vm5560, %v5896, 0
      %v5938 = vsel %vm5560, %v5897, 0
      %v5941 = vsel %vm5560, %v5898, 0
      %v5944 = vsel %vm5560, %v5899, 0
      %v5947 = vsel %vm5560, %v5900, 0
      %v5950 = vsel %vm5560, %v5901, 0
      %5952 = vmatpush.msra.mxu0 0.0
      %5953 = vmatpush.msra.mxu0 0.0
      %5954 = vmatpush.msra.mxu0 0.0
      %5955 = vmatpush.msra.mxu0 0.0
      %5956 = vmatpush.msra.mxu0 0.0
      %5957 = vmatpush.msra.mxu0 0.0
      %5958 = vmatpush.msra.mxu0 0.0
      %5959 = vmatpush.msra.mxu0 0.0
      %5960 = vmatpush.msra.mxu0 0.0
      %5961 = vmatpush.msra.mxu0 0.0
      %5962 = vmatpush.msra.mxu0 0.0
      %5963 = vmatpush.msra.mxu0 0.0
      %5964 = vmatpush.msra.mxu0 0.0
      %5965 = vmatpush.msra.mxu0 0.0
      %5966 = vmatpush.msra.mxu0 %v5903
      %5967 = vmatpush.msra.mxu0 %v5902
      %5968 = vmatmul.f32.gmra.mxu0 %v5905
      %v5969 = vpop.f32.mrf.mxu0
      %v5970 = vadd.f32 0.0, %v5969
      %5971 = vmatmul.f32.gmra.mxu0 %v5908
      %v5972 = vpop.f32.mrf.mxu0
      %5973 = vmatmul.f32.gmra.mxu0 %v5911
      %v5974 = vpop.f32.mrf.mxu0
      %5975 = vmatmul.f32.gmra.mxu0 %v5914
      %v5976 = vpop.f32.mrf.mxu0
      %5977 = vmatmul.f32.gmra.mxu0 %v5917
      %v5978 = vpop.f32.mrf.mxu0
      %v5979 = vadd.f32 0.0, %v5978
      %5980 = vmatmul.f32.gmra.mxu0 %v5920
      %v5981 = vpop.f32.mrf.mxu0
      %5982 = vmatmul.f32.gmra.mxu0 %v5923
      %v5983 = vpop.f32.mrf.mxu0
      %5984 = vmatmul.f32.gmra.mxu0 %v5926
      %v5985 = vpop.f32.mrf.mxu0
      %5986 = vmatmul.f32.gmra.mxu0 %v5929
      %v5987 = vpop.f32.mrf.mxu0
      %v5988 = vadd.f32 0.0, %v5987
      %5989 = vmatmul.f32.gmra.mxu0 %v5932
      %v5990 = vpop.f32.mrf.mxu0
      %5991 = vmatmul.f32.gmra.mxu0 %v5935
      %v5992 = vpop.f32.mrf.mxu0
      %5993 = vmatmul.f32.gmra.mxu0 %v5938
      %v5994 = vpop.f32.mrf.mxu0
      %5995 = vmatmul.f32.gmra.mxu0 %v5941
      %v5996 = vpop.f32.mrf.mxu0
      %v5997 = vadd.f32 0.0, %v5996
      %5998 = vmatmul.f32.gmra.mxu0 %v5944
      %v5999 = vpop.f32.mrf.mxu0
      %6000 = vmatmul.f32.gmra.mxu0 %v5947
      %v6001 = vpop.f32.mrf.mxu0
      %6002 = vmatmul.f32.gmra.mxu0 %v5950
      %v6003 = vpop.f32.mrf.mxu0
      %6004 = vdwg.mxu0
      %v6005 = vadd.f32 %v5882, %v5970
      %v6006 = vadd.f32 %v5883, %v5979
      %v6007 = vadd.f32 %v5884, %v5988
      %v6008 = vadd.f32 %v5885, %v5997
      %v6009 = vld [vmem:[#allocation4 + $0x22] sm:$0xff]
      %v6010 = vld [vmem:[#allocation4 + $0x2a] sm:$0xff]
      %v6011 = vld [vmem:[#allocation4 + $0x32] sm:$0xff]
      %v6012 = vld [vmem:[#allocation4 + $0x3a] sm:$0xff]
      %v6013 = vld [vmem:[#allocation4 + $0x42] sm:$0xff]
      %v6014 = vld [vmem:[#allocation4 + $0x4a] sm:$0xff]
      %v6015 = vld [vmem:[#allocation4 + $0x52] sm:$0xff]
      %v6016 = vld [vmem:[#allocation4 + $0x5a] sm:$0xff]
      %v6017 = vld [vmem:[#allocation4 + $0x62] sm:$0xff]
      %v6018 = vld [vmem:[#allocation4 + $0x6a] sm:$0xff]
      %v6019 = vld [vmem:[#allocation4 + $0x72] sm:$0xff]
      %v6020 = vld [vmem:[#allocation4 + $0x7a] sm:$0xff]
      %v6021 = vld [vmem:[#allocation4 + $0x82] sm:$0xff]
      %v6022 = vld [vmem:[#allocation4 + $0x8a] sm:$0xff]
      %v6023 = vld [vmem:[#allocation4 + $0x92] sm:$0xff]
      %v6024 = vld [vmem:[#allocation4 + $0x9a] sm:$0xff]
      %v6025 = vld [vmem:[%s3 + $0x40] sm:$0xff]
      %v6026 = vld [vmem:[%s3 + $0x48] sm:$0xff]
      %v6028 = vsel %vm5560, %v6009, 0
      %v6031 = vsel %vm5560, %v6010, 0
      %v6034 = vsel %vm5560, %v6011, 0
      %v6037 = vsel %vm5560, %v6012, 0
      %v6040 = vsel %vm5560, %v6013, 0
      %v6043 = vsel %vm5560, %v6014, 0
      %v6046 = vsel %vm5560, %v6015, 0
      %v6049 = vsel %vm5560, %v6016, 0
      %v6052 = vsel %vm5560, %v6017, 0
      %v6055 = vsel %vm5560, %v6018, 0
      %v6058 = vsel %vm5560, %v6019, 0
      %v6061 = vsel %vm5560, %v6020, 0
      %v6064 = vsel %vm5560, %v6021, 0
      %v6067 = vsel %vm5560, %v6022, 0
      %v6070 = vsel %vm5560, %v6023, 0
      %v6073 = vsel %vm5560, %v6024, 0
      %6075 = vmatpush.msra.mxu0 0.0
      %6076 = vmatpush.msra.mxu0 0.0
      %6077 = vmatpush.msra.mxu0 0.0
      %6078 = vmatpush.msra.mxu0 0.0
      %6079 = vmatpush.msra.mxu0 0.0
      %6080 = vmatpush.msra.mxu0 0.0
      %6081 = vmatpush.msra.mxu0 0.0
      %6082 = vmatpush.msra.mxu0 0.0
      %6083 = vmatpush.msra.mxu0 0.0
      %6084 = vmatpush.msra.mxu0 0.0
      %6085 = vmatpush.msra.mxu0 0.0
      %6086 = vmatpush.msra.mxu0 0.0
      %6087 = vmatpush.msra.mxu0 0.0
      %6088 = vmatpush.msra.mxu0 0.0
      %6089 = vmatpush.msra.mxu0 %v6026
      %6090 = vmatpush.msra.mxu0 %v6025
      %6091 = vmatmul.f32.gmra.mxu0 %v6028
      %v6092 = vpop.f32.mrf.mxu0
      %v6093 = vadd.f32 0.0, %v6092
      %6094 = vmatmul.f32.gmra.mxu0 %v6031
      %v6095 = vpop.f32.mrf.mxu0
      %6096 = vmatmul.f32.gmra.mxu0 %v6034
      %v6097 = vpop.f32.mrf.mxu0
      %6098 = vmatmul.f32.gmra.mxu0 %v6037
      %v6099 = vpop.f32.mrf.mxu0
      %6100 = vmatmul.f32.gmra.mxu0 %v6040
      %v6101 = vpop.f32.mrf.mxu0
      %v6102 = vadd.f32 0.0, %v6101
      %6103 = vmatmul.f32.gmra.mxu0 %v6043
      %v6104 = vpop.f32.mrf.mxu0
      %6105 = vmatmul.f32.gmra.mxu0 %v6046
      %v6106 = vpop.f32.mrf.mxu0
      %6107 = vmatmul.f32.gmra.mxu0 %v6049
      %v6108 = vpop.f32.mrf.mxu0
      %6109 = vmatmul.f32.gmra.mxu0 %v6052
      %v6110 = vpop.f32.mrf.mxu0
      %v6111 = vadd.f32 0.0, %v6110
      %6112 = vmatmul.f32.gmra.mxu0 %v6055
      %v6113 = vpop.f32.mrf.mxu0
      %6114 = vmatmul.f32.gmra.mxu0 %v6058
      %v6115 = vpop.f32.mrf.mxu0
      %6116 = vmatmul.f32.gmra.mxu0 %v6061
      %v6117 = vpop.f32.mrf.mxu0
      %6118 = vmatmul.f32.gmra.mxu0 %v6064
      %v6119 = vpop.f32.mrf.mxu0
      %v6120 = vadd.f32 0.0, %v6119
      %6121 = vmatmul.f32.gmra.mxu0 %v6067
      %v6122 = vpop.f32.mrf.mxu0
      %6123 = vmatmul.f32.gmra.mxu0 %v6070
      %v6124 = vpop.f32.mrf.mxu0
      %6125 = vmatmul.f32.gmra.mxu0 %v6073
      %v6126 = vpop.f32.mrf.mxu0
      %6127 = vdwg.mxu0
      %v6128 = vadd.f32 %v6005, %v6093
      %v6129 = vadd.f32 %v6006, %v6102
      %v6130 = vadd.f32 %v6007, %v6111
      %v6131 = vadd.f32 %v6008, %v6120
      %v6132 = vld [vmem:[#allocation4 + $0x24] sm:$0xff]
      %v6133 = vld [vmem:[#allocation4 + $0x2c] sm:$0xff]
      %v6134 = vld [vmem:[#allocation4 + $0x34] sm:$0xff]
      %v6135 = vld [vmem:[#allocation4 + $0x3c] sm:$0xff]
      %v6136 = vld [vmem:[#allocation4 + $0x44] sm:$0xff]
      %v6137 = vld [vmem:[#allocation4 + $0x4c] sm:$0xff]
      %v6138 = vld [vmem:[#allocation4 + $0x54] sm:$0xff]
      %v6139 = vld [vmem:[#allocation4 + $0x5c] sm:$0xff]
      %v6140 = vld [vmem:[#allocation4 + $0x64] sm:$0xff]
      %v6141 = vld [vmem:[#allocation4 + $0x6c] sm:$0xff]
      %v6142 = vld [vmem:[#allocation4 + $0x74] sm:$0xff]
      %v6143 = vld [vmem:[#allocation4 + $0x7c] sm:$0xff]
      %v6144 = vld [vmem:[#allocation4 + $0x84] sm:$0xff]
      %v6145 = vld [vmem:[#allocation4 + $0x8c] sm:$0xff]
      %v6146 = vld [vmem:[#allocation4 + $0x94] sm:$0xff]
      %v6147 = vld [vmem:[#allocation4 + $0x9c] sm:$0xff]
      %v6148 = vld [vmem:[%s3 + $0x50] sm:$0xff]
      %v6149 = vld [vmem:[%s3 + $0x58] sm:$0xff]
      %v6151 = vsel %vm5560, %v6132, 0
      %v6154 = vsel %vm5560, %v6133, 0
      %v6157 = vsel %vm5560, %v6134, 0
      %v6160 = vsel %vm5560, %v6135, 0
      %v6163 = vsel %vm5560, %v6136, 0
      %v6166 = vsel %vm5560, %v6137, 0
      %v6169 = vsel %vm5560, %v6138, 0
      %v6172 = vsel %vm5560, %v6139, 0
      %v6175 = vsel %vm5560, %v6140, 0
      %v6178 = vsel %vm5560, %v6141, 0
      %v6181 = vsel %vm5560, %v6142, 0
      %v6184 = vsel %vm5560, %v6143, 0
      %v6187 = vsel %vm5560, %v6144, 0
      %v6190 = vsel %vm5560, %v6145, 0
      %v6193 = vsel %vm5560, %v6146, 0
      %v6196 = vsel %vm5560, %v6147, 0
      %6198 = vmatpush.msra.mxu0 0.0
      %6199 = vmatpush.msra.mxu0 0.0
      %6200 = vmatpush.msra.mxu0 0.0
      %6201 = vmatpush.msra.mxu0 0.0
      %6202 = vmatpush.msra.mxu0 0.0
      %6203 = vmatpush.msra.mxu0 0.0
      %6204 = vmatpush.msra.mxu0 0.0
      %6205 = vmatpush.msra.mxu0 0.0
      %6206 = vmatpush.msra.mxu0 0.0
      %6207 = vmatpush.msra.mxu0 0.0
      %6208 = vmatpush.msra.mxu0 0.0
      %6209 = vmatpush.msra.mxu0 0.0
      %6210 = vmatpush.msra.mxu0 0.0
      %6211 = vmatpush.msra.mxu0 0.0
      %6212 = vmatpush.msra.mxu0 %v6149
      %6213 = vmatpush.msra.mxu0 %v6148
      %6214 = vmatmul.f32.gmra.mxu0 %v6151
      %v6215 = vpop.f32.mrf.mxu0
      %v6216 = vadd.f32 0.0, %v6215
      %6217 = vmatmul.f32.gmra.mxu0 %v6154
      %v6218 = vpop.f32.mrf.mxu0
      %6219 = vmatmul.f32.gmra.mxu0 %v6157
      %v6220 = vpop.f32.mrf.mxu0
      %6221 = vmatmul.f32.gmra.mxu0 %v6160
      %v6222 = vpop.f32.mrf.mxu0
      %6223 = vmatmul.f32.gmra.mxu0 %v6163
      %v6224 = vpop.f32.mrf.mxu0
      %v6225 = vadd.f32 0.0, %v6224
      %6226 = vmatmul.f32.gmra.mxu0 %v6166
      %v6227 = vpop.f32.mrf.mxu0
      %6228 = vmatmul.f32.gmra.mxu0 %v6169
      %v6229 = vpop.f32.mrf.mxu0
      %6230 = vmatmul.f32.gmra.mxu0 %v6172
      %v6231 = vpop.f32.mrf.mxu0
      %6232 = vmatmul.f32.gmra.mxu0 %v6175
      %v6233 = vpop.f32.mrf.mxu0
      %v6234 = vadd.f32 0.0, %v6233
      %6235 = vmatmul.f32.gmra.mxu0 %v6178
      %v6236 = vpop.f32.mrf.mxu0
      %6237 = vmatmul.f32.gmra.mxu0 %v6181
      %v6238 = vpop.f32.mrf.mxu0
      %6239 = vmatmul.f32.gmra.mxu0 %v6184
      %v6240 = vpop.f32.mrf.mxu0
      %6241 = vmatmul.f32.gmra.mxu0 %v6187
      %v6242 = vpop.f32.mrf.mxu0
      %v6243 = vadd.f32 0.0, %v6242
      %6244 = vmatmul.f32.gmra.mxu0 %v6190
      %v6245 = vpop.f32.mrf.mxu0
      %6246 = vmatmul.f32.gmra.mxu0 %v6193
      %v6247 = vpop.f32.mrf.mxu0
      %6248 = vmatmul.f32.gmra.mxu0 %v6196
      %v6249 = vpop.f32.mrf.mxu0
      %6250 = vdwg.mxu0
      %v6251 = vadd.f32 %v6128, %v6216
      %v6252 = vadd.f32 %v6129, %v6225
      %v6253 = vadd.f32 %v6130, %v6234
      %v6254 = vadd.f32 %v6131, %v6243
      %v6255 = vld [vmem:[#allocation4 + $0x40] sm:$0xff]
      %v6256 = vld [vmem:[#allocation4 + $0x48] sm:$0xff]
      %v6257 = vld [vmem:[#allocation4 + $0x50] sm:$0xff]
      %v6258 = vld [vmem:[#allocation4 + $0x58] sm:$0xff]
      %v6259 = vld [vmem:[#allocation4 + $0x60] sm:$0xff]
      %v6260 = vld [vmem:[#allocation4 + $0x68] sm:$0xff]
      %v6261 = vld [vmem:[#allocation4 + $0x70] sm:$0xff]
      %v6262 = vld [vmem:[#allocation4 + $0x78] sm:$0xff]
      %v6263 = vld [vmem:[#allocation4 + $0x80] sm:$0xff]
      %v6264 = vld [vmem:[#allocation4 + $0x88] sm:$0xff]
      %v6265 = vld [vmem:[#allocation4 + $0x90] sm:$0xff]
      %v6266 = vld [vmem:[#allocation4 + $0x98] sm:$0xff]
      %v6267 = vld [vmem:[#allocation4 + $0xa0] sm:$0xff]
      %v6268 = vld [vmem:[#allocation4 + $0xa8] sm:$0xff]
      %v6269 = vld [vmem:[#allocation4 + $0xb0] sm:$0xff]
      %v6270 = vld [vmem:[#allocation4 + $0xb8] sm:$0xff]
      %v6271 = vld [vmem:[%s3 + $0x60] sm:$0xff]
      %v6272 = vld [vmem:[%s3 + $0x68] sm:$0xff]
      %v6274 = vsel %vm5560, %v6255, 0
      %v6277 = vsel %vm5560, %v6256, 0
      %v6280 = vsel %vm5560, %v6257, 0
      %v6283 = vsel %vm5560, %v6258, 0
      %v6286 = vsel %vm5560, %v6259, 0
      %v6289 = vsel %vm5560, %v6260, 0
      %v6292 = vsel %vm5560, %v6261, 0
      %v6295 = vsel %vm5560, %v6262, 0
      %v6298 = vsel %vm5560, %v6263, 0
      %v6301 = vsel %vm5560, %v6264, 0
      %v6304 = vsel %vm5560, %v6265, 0
      %v6307 = vsel %vm5560, %v6266, 0
      %v6310 = vsel %vm5560, %v6267, 0
      %v6313 = vsel %vm5560, %v6268, 0
      %v6316 = vsel %vm5560, %v6269, 0
      %v6319 = vsel %vm5560, %v6270, 0
      %6321 = vmatpush.msra.mxu0 0.0
      %6322 = vmatpush.msra.mxu0 0.0
      %6323 = vmatpush.msra.mxu0 0.0
      %6324 = vmatpush.msra.mxu0 0.0
      %6325 = vmatpush.msra.mxu0 0.0
      %6326 = vmatpush.msra.mxu0 0.0
      %6327 = vmatpush.msra.mxu0 0.0
      %6328 = vmatpush.msra.mxu0 0.0
      %6329 = vmatpush.msra.mxu0 0.0
      %6330 = vmatpush.msra.mxu0 0.0
      %6331 = vmatpush.msra.mxu0 0.0
      %6332 = vmatpush.msra.mxu0 0.0
      %6333 = vmatpush.msra.mxu0 0.0
      %6334 = vmatpush.msra.mxu0 0.0
      %6335 = vmatpush.msra.mxu0 %v6272
      %6336 = vmatpush.msra.mxu0 %v6271
      %6337 = vmatmul.f32.gmra.mxu0 %v6274
      %v6338 = vpop.f32.mrf.mxu0
      %v6339 = vadd.f32 0.0, %v6338
      %6340 = vmatmul.f32.gmra.mxu0 %v6277
      %v6341 = vpop.f32.mrf.mxu0
      %6342 = vmatmul.f32.gmra.mxu0 %v6280
      %v6343 = vpop.f32.mrf.mxu0
      %6344 = vmatmul.f32.gmra.mxu0 %v6283
      %v6345 = vpop.f32.mrf.mxu0
      %6346 = vmatmul.f32.gmra.mxu0 %v6286
      %v6347 = vpop.f32.mrf.mxu0
      %v6348 = vadd.f32 0.0, %v6347
      %6349 = vmatmul.f32.gmra.mxu0 %v6289
      %v6350 = vpop.f32.mrf.mxu0
      %6351 = vmatmul.f32.gmra.mxu0 %v6292
      %v6352 = vpop.f32.mrf.mxu0
      %6353 = vmatmul.f32.gmra.mxu0 %v6295
      %v6354 = vpop.f32.mrf.mxu0
      %6355 = vmatmul.f32.gmra.mxu0 %v6298
      %v6356 = vpop.f32.mrf.mxu0
      %v6357 = vadd.f32 0.0, %v6356
      %6358 = vmatmul.f32.gmra.mxu0 %v6301
      %v6359 = vpop.f32.mrf.mxu0
      %6360 = vmatmul.f32.gmra.mxu0 %v6304
      %v6361 = vpop.f32.mrf.mxu0
      %6362 = vmatmul.f32.gmra.mxu0 %v6307
      %v6363 = vpop.f32.mrf.mxu0
      %6364 = vmatmul.f32.gmra.mxu0 %v6310
      %v6365 = vpop.f32.mrf.mxu0
      %v6366 = vadd.f32 0.0, %v6365
      %6367 = vmatmul.f32.gmra.mxu0 %v6313
      %v6368 = vpop.f32.mrf.mxu0
      %6369 = vmatmul.f32.gmra.mxu0 %v6316
      %v6370 = vpop.f32.mrf.mxu0
      %6371 = vmatmul.f32.gmra.mxu0 %v6319
      %v6372 = vpop.f32.mrf.mxu0
      %6373 = vdwg.mxu0
      %v6374 = vadd.f32 %v6251, %v6339
      %v6375 = vadd.f32 %v6252, %v6348
      %v6376 = vadd.f32 %v6253, %v6357
      %v6377 = vadd.f32 %v6254, %v6366
      %v6378 = vld [vmem:[#allocation4 + $0x42] sm:$0xff]
      %v6379 = vld [vmem:[#allocation4 + $0x4a] sm:$0xff]
      %v6380 = vld [vmem:[#allocation4 + $0x52] sm:$0xff]
      %v6381 = vld [vmem:[#allocation4 + $0x5a] sm:$0xff]
      %v6382 = vld [vmem:[#allocation4 + $0x62] sm:$0xff]
      %v6383 = vld [vmem:[#allocation4 + $0x6a] sm:$0xff]
      %v6384 = vld [vmem:[#allocation4 + $0x72] sm:$0xff]
      %v6385 = vld [vmem:[#allocation4 + $0x7a] sm:$0xff]
      %v6386 = vld [vmem:[#allocation4 + $0x82] sm:$0xff]
      %v6387 = vld [vmem:[#allocation4 + $0x8a] sm:$0xff]
      %v6388 = vld [vmem:[#allocation4 + $0x92] sm:$0xff]
      %v6389 = vld [vmem:[#allocation4 + $0x9a] sm:$0xff]
      %v6390 = vld [vmem:[#allocation4 + $0xa2] sm:$0xff]
      %v6391 = vld [vmem:[#allocation4 + $0xaa] sm:$0xff]
      %v6392 = vld [vmem:[#allocation4 + $0xb2] sm:$0xff]
      %v6393 = vld [vmem:[#allocation4 + $0xba] sm:$0xff]
      %v6394 = vld [vmem:[%s3 + $0x70] sm:$0xff]
      %v6395 = vld [vmem:[%s3 + $0x78] sm:$0xff]
      %v6397 = vsel %vm5560, %v6378, 0
      %v6400 = vsel %vm5560, %v6379, 0
      %v6403 = vsel %vm5560, %v6380, 0
      %v6406 = vsel %vm5560, %v6381, 0
      %v6409 = vsel %vm5560, %v6382, 0
      %v6412 = vsel %vm5560, %v6383, 0
      %v6415 = vsel %vm5560, %v6384, 0
      %v6418 = vsel %vm5560, %v6385, 0
      %v6421 = vsel %vm5560, %v6386, 0
      %v6424 = vsel %vm5560, %v6387, 0
      %v6427 = vsel %vm5560, %v6388, 0
      %v6430 = vsel %vm5560, %v6389, 0
      %v6433 = vsel %vm5560, %v6390, 0
      %v6436 = vsel %vm5560, %v6391, 0
      %v6439 = vsel %vm5560, %v6392, 0
      %v6442 = vsel %vm5560, %v6393, 0
      %6444 = vmatpush.msra.mxu0 0.0
      %6445 = vmatpush.msra.mxu0 0.0
      %6446 = vmatpush.msra.mxu0 0.0
      %6447 = vmatpush.msra.mxu0 0.0
      %6448 = vmatpush.msra.mxu0 0.0
      %6449 = vmatpush.msra.mxu0 0.0
      %6450 = vmatpush.msra.mxu0 0.0
      %6451 = vmatpush.msra.mxu0 0.0
      %6452 = vmatpush.msra.mxu0 0.0
      %6453 = vmatpush.msra.mxu0 0.0
      %6454 = vmatpush.msra.mxu0 0.0
      %6455 = vmatpush.msra.mxu0 0.0
      %6456 = vmatpush.msra.mxu0 0.0
      %6457 = vmatpush.msra.mxu0 0.0
      %6458 = vmatpush.msra.mxu0 %v6395
      %6459 = vmatpush.msra.mxu0 %v6394
      %6460 = vmatmul.f32.gmra.mxu0 %v6397
      %v6461 = vpop.f32.mrf.mxu0
      %v6462 = vadd.f32 0.0, %v6461
      %6463 = vmatmul.f32.gmra.mxu0 %v6400
      %v6464 = vpop.f32.mrf.mxu0
      %6465 = vmatmul.f32.gmra.mxu0 %v6403
      %v6466 = vpop.f32.mrf.mxu0
      %6467 = vmatmul.f32.gmra.mxu0 %v6406
      %v6468 = vpop.f32.mrf.mxu0
      %6469 = vmatmul.f32.gmra.mxu0 %v6409
      %v6470 = vpop.f32.mrf.mxu0
      %v6471 = vadd.f32 0.0, %v6470
      %6472 = vmatmul.f32.gmra.mxu0 %v6412
      %v6473 = vpop.f32.mrf.mxu0
      %6474 = vmatmul.f32.gmra.mxu0 %v6415
      %v6475 = vpop.f32.mrf.mxu0
      %6476 = vmatmul.f32.gmra.mxu0 %v6418
      %v6477 = vpop.f32.mrf.mxu0
      %6478 = vmatmul.f32.gmra.mxu0 %v6421
      %v6479 = vpop.f32.mrf.mxu0
      %v6480 = vadd.f32 0.0, %v6479
      %6481 = vmatmul.f32.gmra.mxu0 %v6424
      %v6482 = vpop.f32.mrf.mxu0
      %6483 = vmatmul.f32.gmra.mxu0 %v6427
      %v6484 = vpop.f32.mrf.mxu0
      %6485 = vmatmul.f32.gmra.mxu0 %v6430
      %v6486 = vpop.f32.mrf.mxu0
      %6487 = vmatmul.f32.gmra.mxu0 %v6433
      %v6488 = vpop.f32.mrf.mxu0
      %v6489 = vadd.f32 0.0, %v6488
      %6490 = vmatmul.f32.gmra.mxu0 %v6436
      %v6491 = vpop.f32.mrf.mxu0
      %6492 = vmatmul.f32.gmra.mxu0 %v6439
      %v6493 = vpop.f32.mrf.mxu0
      %6494 = vmatmul.f32.gmra.mxu0 %v6442
      %v6495 = vpop.f32.mrf.mxu0
      %6496 = vdwg.mxu0
      %v6497 = vadd.f32 %v6374, %v6462
      %v6498 = vadd.f32 %v6375, %v6471
      %v6499 = vadd.f32 %v6376, %v6480
      %v6500 = vadd.f32 %v6377, %v6489
      %v6501 = vld [vmem:[#allocation4 + $0x44] sm:$0xff]
      %v6502 = vld [vmem:[#allocation4 + $0x4c] sm:$0xff]
      %v6503 = vld [vmem:[#allocation4 + $0x54] sm:$0xff]
      %v6504 = vld [vmem:[#allocation4 + $0x5c] sm:$0xff]
      %v6505 = vld [vmem:[#allocation4 + $0x64] sm:$0xff]
      %v6506 = vld [vmem:[#allocation4 + $0x6c] sm:$0xff]
      %v6507 = vld [vmem:[#allocation4 + $0x74] sm:$0xff]
      %v6508 = vld [vmem:[#allocation4 + $0x7c] sm:$0xff]
      %v6509 = vld [vmem:[#allocation4 + $0x84] sm:$0xff]
      %v6510 = vld [vmem:[#allocation4 + $0x8c] sm:$0xff]
      %v6511 = vld [vmem:[#allocation4 + $0x94] sm:$0xff]
      %v6512 = vld [vmem:[#allocation4 + $0x9c] sm:$0xff]
      %v6513 = vld [vmem:[#allocation4 + $0xa4] sm:$0xff]
      %v6514 = vld [vmem:[#allocation4 + $0xac] sm:$0xff]
      %v6515 = vld [vmem:[#allocation4 + $0xb4] sm:$0xff]
      %v6516 = vld [vmem:[#allocation4 + $0xbc] sm:$0xff]
      %v6517 = vld [vmem:[%s3 + $0x80] sm:$0xff]
      %v6518 = vld [vmem:[%s3 + $0x88] sm:$0xff]
      %v6520 = vsel %vm5560, %v6501, 0
      %v6523 = vsel %vm5560, %v6502, 0
      %v6526 = vsel %vm5560, %v6503, 0
      %v6529 = vsel %vm5560, %v6504, 0
      %v6532 = vsel %vm5560, %v6505, 0
      %v6535 = vsel %vm5560, %v6506, 0
      %v6538 = vsel %vm5560, %v6507, 0
      %v6541 = vsel %vm5560, %v6508, 0
      %v6544 = vsel %vm5560, %v6509, 0
      %v6547 = vsel %vm5560, %v6510, 0
      %v6550 = vsel %vm5560, %v6511, 0
      %v6553 = vsel %vm5560, %v6512, 0
      %v6556 = vsel %vm5560, %v6513, 0
      %v6559 = vsel %vm5560, %v6514, 0
      %v6562 = vsel %vm5560, %v6515, 0
      %v6565 = vsel %vm5560, %v6516, 0
      %6567 = vmatpush.msra.mxu0 0.0
      %6568 = vmatpush.msra.mxu0 0.0
      %6569 = vmatpush.msra.mxu0 0.0
      %6570 = vmatpush.msra.mxu0 0.0
      %6571 = vmatpush.msra.mxu0 0.0
      %6572 = vmatpush.msra.mxu0 0.0
      %6573 = vmatpush.msra.mxu0 0.0
      %6574 = vmatpush.msra.mxu0 0.0
      %6575 = vmatpush.msra.mxu0 0.0
      %6576 = vmatpush.msra.mxu0 0.0
      %6577 = vmatpush.msra.mxu0 0.0
      %6578 = vmatpush.msra.mxu0 0.0
      %6579 = vmatpush.msra.mxu0 0.0
      %6580 = vmatpush.msra.mxu0 0.0
      %6581 = vmatpush.msra.mxu0 %v6518
      %6582 = vmatpush.msra.mxu0 %v6517
      %6583 = vmatmul.f32.gmra.mxu0 %v6520
      %v6584 = vpop.f32.mrf.mxu0
      %v6585 = vadd.f32 0.0, %v6584
      %6586 = vmatmul.f32.gmra.mxu0 %v6523
      %v6587 = vpop.f32.mrf.mxu0
      %6588 = vmatmul.f32.gmra.mxu0 %v6526
      %v6589 = vpop.f32.mrf.mxu0
      %6590 = vmatmul.f32.gmra.mxu0 %v6529
      %v6591 = vpop.f32.mrf.mxu0
      %6592 = vmatmul.f32.gmra.mxu0 %v6532
      %v6593 = vpop.f32.mrf.mxu0
      %v6594 = vadd.f32 0.0, %v6593
      %6595 = vmatmul.f32.gmra.mxu0 %v6535
      %v6596 = vpop.f32.mrf.mxu0
      %6597 = vmatmul.f32.gmra.mxu0 %v6538
      %v6598 = vpop.f32.mrf.mxu0
      %6599 = vmatmul.f32.gmra.mxu0 %v6541
      %v6600 = vpop.f32.mrf.mxu0
      %6601 = vmatmul.f32.gmra.mxu0 %v6544
      %v6602 = vpop.f32.mrf.mxu0
      %v6603 = vadd.f32 0.0, %v6602
      %6604 = vmatmul.f32.gmra.mxu0 %v6547
      %v6605 = vpop.f32.mrf.mxu0
      %6606 = vmatmul.f32.gmra.mxu0 %v6550
      %v6607 = vpop.f32.mrf.mxu0
      %6608 = vmatmul.f32.gmra.mxu0 %v6553
      %v6609 = vpop.f32.mrf.mxu0
      %6610 = vmatmul.f32.gmra.mxu0 %v6556
      %v6611 = vpop.f32.mrf.mxu0
      %v6612 = vadd.f32 0.0, %v6611
      %6613 = vmatmul.f32.gmra.mxu0 %v6559
      %v6614 = vpop.f32.mrf.mxu0
      %6615 = vmatmul.f32.gmra.mxu0 %v6562
      %v6616 = vpop.f32.mrf.mxu0
      %6617 = vmatmul.f32.gmra.mxu0 %v6565
      %v6618 = vpop.f32.mrf.mxu0
      %6619 = vdwg.mxu0
      %v6620 = vadd.f32 %v6497, %v6585
      %v6621 = vadd.f32 %v6498, %v6594
      %v6622 = vadd.f32 %v6499, %v6603
      %v6623 = vadd.f32 %v6500, %v6612
      %v6624 = vld [vmem:[%s6] sm:$0x1]
      %v6626 = vperm.slane %v6624, 0
      %v6628 = vadd.f32 %v6620, %v6626
      %v6629 = vadd.f32 %v6621, %v6626
      %v6630 = vadd.f32 %v6622, %v6626
      %v6631 = vadd.f32 %v6623, %v6626
      %vm6632 = vcmp.ge.f32.partialorder %v6628, 0.0
      %vm6633 = vcmp.ge.f32.partialorder %v6629, 0.0
      %vm6634 = vcmp.ge.f32.partialorder %v6630, 0.0
      %vm6635 = vcmp.ge.f32.partialorder %v6631, 0.0
      %v6636 = vmul.f32 %v6628, 0.01
      %v6637 = vmul.f32 %v6629, 0.01
      %v6638 = vmul.f32 %v6630, 0.01
      %v6639 = vmul.f32 %v6631, 0.01
      %v6640 = vsel %vm6632, %v6628, %v6636
      %v6641 = vsel %vm6633, %v6629, %v6637
      %v6642 = vsel %vm6634, %v6630, %v6638
      %v6643 = vsel %vm6635, %v6631, %v6639
      %vm6644 = vcmask 253952
      %6645 = vst.msk [vmem:[%s280] sm:$0x1] %vm6644, %v6640
      %vm6646 = vcmask 256002
      %6647 = vst.msk [vmem:[%s280 - $0x1] sm:$0x4] %vm6646, %v6640
      %vm6648 = vcmask 258052
      %6649 = vst.msk [vmem:[%s280 - $0x2] sm:$0x10] %vm6648, %v6640
      %vm6650 = vcmask 260102
      %6651 = vst.msk [vmem:[%s280 - $0x3] sm:$0x40] %vm6650, %v6640
      %6652 = vst.msk [vmem:[%s280 + $0x4] sm:$0x1] %vm6644, %v6641
      %6653 = vst.msk [vmem:[%s280 + $0x3] sm:$0x4] %vm6646, %v6641
      %6654 = vst.msk [vmem:[%s280 + $0x2] sm:$0x10] %vm6648, %v6641
      %6655 = vst.msk [vmem:[%s280 + $0x1] sm:$0x40] %vm6650, %v6641
      %6656 = vst.msk [vmem:[%s280 + $0x8] sm:$0x1] %vm6644, %v6642
      %6657 = vst.msk [vmem:[%s280 + $0x7] sm:$0x4] %vm6646, %v6642
      %6658 = vst.msk [vmem:[%s280 + $0x6] sm:$0x10] %vm6648, %v6642
      %6659 = vst.msk [vmem:[%s280 + $0x5] sm:$0x40] %vm6650, %v6642
      %6660 = vst.msk [vmem:[%s280 + $0xc] sm:$0x1] %vm6644, %v6643
      %6661 = vst.msk [vmem:[%s280 + $0xb] sm:$0x4] %vm6646, %v6643
      %6662 = vst.msk [vmem:[%s280 + $0xa] sm:$0x10] %vm6648, %v6643
      %6663 = vst.msk [vmem:[%s280 + $0x9] sm:$0x40] %vm6650, %v6643
      %s6664 = smul.u32 2, %s18
      %p6665 = scmp.lt.s32.totalorder %s6664, 3
      %s6666 = scalar_select %p6665, %s6664, 3
      %s6667 = smul.addr %s6666, 8
      %s6668 = scalar_lea.vmem %s7, %s6667
      // Predicated region
      $region49: #{representation_forward.1} parent=47 // pred_check
        %p6669 = pneg %p188
      $region50: #{representation_forward.1} parent=47 // pred_check_branch
        %6671 = sbr.rel (%p6669) target = $region52
      $region51: #{representation_forward.1} parent=47 // pred_region
        %s6672 = smul.u32 2, %s18
      $region52: #{representation_forward.1} parent=47 // pred_fallthru
        _
    $region48: #{representation_forward.1} parent=5 // pred_fallthru
      _
    %p6673 = scmp.le.s32.totalorder 2, %s13
    // Predicated region
    $region53: #{representation_forward.1} parent=5 // pred_check
      %p6674 = pneg %p6673
    $region54: #{representation_forward.1} parent=5 // pred_check_branch
      %6676 = sbr.rel (%p6674) target = $region56
    $region55: #{representation_forward.1} parent=5 // pred_region
      %s6677 = ssub.s32 %s13, 2
      // Predicated region
      $region57: #{representation_forward.1} parent=55 // pred_check
        %p6678 = pneg %p194
      $region58: #{representation_forward.1} parent=55 // pred_check_branch
        %6680 = sbr.rel (%p6678) target = $region60
      $region59: #{representation_forward.1} parent=55 // pred_region
        %s6681 = smul.u32 2, %s19
        %p6682 = scmp.lt.s32.totalorder %s6681, 3
        %s6683 = scalar_select %p6682, %s6681, 3
        %s6684 = smul.addr %s6683, 8
        %s6685 = scalar_lea.vmem %s7, %s6684
      $region60: #{representation_forward.1} parent=55 // pred_fallthru
        _
    $region56: #{representation_forward.1} parent=5 // pred_fallthru
      _
  $region6: #{representation_forward.1} parent=0 // loop_footer
    %s17 = sadd.s32 1, %s13
  $region7: #{representation_forward.1} parent=0 // loop_footer_branch
    %12 = sbr.rel target = $region3
  $region8: #{representation_forward.1} parent=0 // loop_exit
    _

</llo_original>
